<compile_context>
chip_gen: v5e
topology: v5e:2x2
jax: 0.10.0
libtpu: 0.0.40
codegen_flags: <defaults>
</compile_context>

<pallas_src>
import numpy as np

import jax
import jax.numpy as jnp
from jax import lax
from jax.experimental import pallas as pl
from jax.experimental.pallas import tpu as pltpu

KSIZE = 11
PAD = 5
NUM_TAPS = KSIZE * KSIZE        # 121
KPAD = 128                      # contraction dim padded to one full lane tile
BLOCK_L_CAP = 4096              # max columns per in-kernel matmul block


def _round_up(x, m):
    return (x + m - 1) // m * m


# --------------------------------------------------------------------------
# Analytic filter banks (host-side, deterministic)
# --------------------------------------------------------------------------
def _grid(size):
    r = (size - 1) / 2.0
    y, x = np.meshgrid(np.arange(-r, r + 1), np.arange(-r, r + 1), indexing="ij")
    return y, x


def _gaussian_bank(n, size):
    y, x = _grid(size)
    filts = []
    for s in np.linspace(1.0, 4.0, n):
        g = np.exp(-(x ** 2 + y ** 2) / (2 * s ** 2))
        filts.append(g / g.sum())
    return np.stack(filts)


def _log_bank(n, size):
    y, x = _grid(size)
    filts = []
    for s in np.linspace(1.0, 4.0, n):
        g = np.exp(-(x ** 2 + y ** 2) / (2 * s ** 2))
        f = (x ** 2 + y ** 2 - 2 * s ** 2) / (s ** 4) * g
        filts.append(f - f.mean())
    return np.stack(filts)


def _gauss_deriv_bank(n, size, order):
    y, x = _grid(size)
    n_theta = 6
    n_sigma = n // n_theta
    filts = []
    for s in np.linspace(1.0, 3.0, n_sigma):
        g = np.exp(-(x ** 2 + y ** 2) / (2 * s ** 2))
        for t in range(n_theta):
            th = np.pi * t / n_theta
            u = np.cos(th) * x + np.sin(th) * y
            if order == 1:
                f = -u / (s ** 2) * g
            else:
                f = (u ** 2 - s ** 2) / (s ** 4) * g
            filts.append(f - f.mean())
    return np.stack(filts)


def init_params():
    banks = [
        _gauss_deriv_bank(18, KSIZE, order=1),   # conv1_1 = GS_X
        _gauss_deriv_bank(18, KSIZE, order=2),   # conv1_2 = GS_X2
        _log_bank(8, KSIZE),                     # conv1_3 = LOG
        _gaussian_bank(4, KSIZE),                # conv1_4 = GS
    ]
    filt = np.concatenate(banks, axis=0).astype(np.float32)       # (48, 11, 11)
    cout = filt.shape[0]
    # (Cout, kh, kw) -> (Cout, 121), tap index i*11+j; zero-pad K 121 -> 128.
    w = filt.reshape(cout, NUM_TAPS)
    w = np.concatenate([w, np.zeros((cout, KPAD - NUM_TAPS), np.float32)], axis=1)
    return {
        "w_t_bf16": jnp.asarray(w, dtype=jnp.bfloat16),            # (48, 128) matmul LHS
        "w_oihw": jnp.asarray(filt[:, None]),                      # (48, 1, 11, 11) for the check
    }


# --------------------------------------------------------------------------
# Pallas kernel: in-kernel im2col (one tap per sublane row) + one MXU matmul
# --------------------------------------------------------------------------
def _make_kernel(block_l, num_lblocks, shifts):
    def kernel(xflat_ref, w_ref, o_ref, p_ref):
        # xflat_ref: (1, 1, Lflat) bf16   flat zero-padded image of one sample
        # w_ref:     (Cout, 128)   bf16   all four filter banks, K padded to 128
        # o_ref:     (1, Cout, L)  f32    channel-major, lane-dense output
        # p_ref:     (128, block_l) bf16  patch scratch (tap = sublane row)

        # Zero the 7 K-padding tap rows once per grid step (never rewritten).
        p_ref[NUM_TAPS:, :] = jnp.zeros((KPAD - NUM_TAPS, block_l), jnp.bfloat16)

        for lb in range(num_lblocks):                      # static unroll
            col0 = lb * block_l
            # Build the patch tile: row t = flat image shifted by shifts[t].
            # Full-width (lane-dense) row copies; shifts are static.
            for t, sh in enumerate(shifts):
                start = col0 + sh
                p_ref[t:t + 1, :] = xflat_ref[0, 0:1, start:start + block_l]
            # (48,128) @ (128,block_l) on the MXU, f32 accumulate.
            o_ref[0, :, col0:col0 + block_l] = jnp.dot(
                w_ref[...], p_ref[...], preferred_element_type=jnp.float32)

    return kernel


def filterbank_conv(x_nchw, w_t_bf16):
    """x: (N, 1, H, W) float32 -> (N, 48, H, W) float32."""
    N, C, H, W = x_nchw.shape
    assert C == 1, C
    Cout = w_t_bf16.shape[0]
    Hp, Wp = H + 2 * PAD, W + 2 * PAD
    max_shift = (KSIZE - 1) * Wp + (KSIZE - 1)             # largest tap offset

    # Output columns b = y*Wp + x (junk columns x>=W are sliced off afterwards).
    L = _round_up(H * Wp, 128)
    block_l = min(L, BLOCK_L_CAP)
    L = _round_up(L, block_l)
    num_lblocks = L // block_l
    Lflat = _round_up(max_shift + L, 128)                  # all shifted reads in-bounds

    # Spatial zero-pad + bf16 cast + per-sample flatten (2 B/pixel HBM traffic,
    # no im2col materialization).
    xp = jnp.pad(x_nchw[:, 0].astype(jnp.bfloat16),
                 ((0, 0), (PAD, PAD), (PAD, PAD)))          # (N, Hp, Wp)
    xflat = xp.reshape(N, 1, Hp * Wp)
    xflat = jnp.pad(xflat, ((0, 0), (0, 0), (0, Lflat - Hp * Wp)))

    shifts = tuple(i * Wp + j for i in range(KSIZE) for j in range(KSIZE))
    kernel = _make_kernel(block_l, num_lblocks, shifts)

    out_flat = pl.pallas_call(
        kernel,
        out_shape=jax.ShapeDtypeStruct((N, Cout, L), jnp.float32),
        grid=(N,),
        in_specs=[
            pl.BlockSpec((1, 1, Lflat), lambda n: (n, 0, 0)),   # one flat sample
            pl.BlockSpec((Cout, KPAD), lambda n: (0, 0)),       # weights fully resident
        ],
        out_specs=pl.BlockSpec((1, Cout, L), lambda n: (n, 0, 0)),
        scratch_shapes=[pltpu.VMEM((KPAD, block_l), jnp.bfloat16)],
        compiler_params=pltpu.CompilerParams(
            dimension_semantics=("parallel",)),                 # batch across TCs on v7x
    )(xflat, w_t_bf16)

    # Drop padded/junk columns: b = y*Wp + x, keep x < W. Outer-dim reshape +
    # minor slice only — no NHWC->NCHW transpose needed (output is already
    # channel-major).
    out = out_flat[:, :, :H * Wp].reshape(N, Cout, H, Wp)[:, :, :, :W]
    return out


# --------------------------------------------------------------------------
# Forward pass (mirrors lm.forward: four convs + channel concat, fused)
# --------------------------------------------------------------------------
def lm_forward(params, x_nchw):
    return filterbank_conv(x_nchw.astype(jnp.float32), params["w_t_bf16"])


if __name__ == "__main__":
    key = jax.random.PRNGKey(0)
    params = init_params()

    # Small shapes consistent with the module: batch=2, 1 input channel, 16x16.
    x = jax.random.normal(key, (2, 1, 16, 16), jnp.float32)

    out = jax.jit(lm_forward)(params, x)
    out = jax.block_until_ready(out)

    assert out.shape == (2, 48, 16, 16), out.shape
    assert bool(jnp.all(jnp.isfinite(out)))

    # Reference: XLA conv on the same bf16 operands, f32 accumulate.
    ref = lax.conv_general_dilated(
        x.astype(jnp.bfloat16),
        params["w_oihw"].astype(jnp.bfloat16),
        window_strides=(1, 1),
        padding=((PAD, PAD), (PAD, PAD)),
        dimension_numbers=("NCHW", "OIHW", "NCHW"),
        preferred_element_type=jnp.float32)
    max_err = float(jnp.max(jnp.abs(out - ref)))
    assert max_err < 1e-2, max_err

    print("KERNEL_OK")
</pallas_src>

<mosaic_0001>
module attributes {stable_mosaic.version = 11 : i64} {
  func.func @kernel(%arg0: i32, %arg1: memref<1x1x896xbf16, #tpu.memory_space<vmem>>, %arg2: memref<48x128xbf16, #tpu.memory_space<vmem>>, %arg3: memref<1x48x512xf32, #tpu.memory_space<vmem>>, %arg4: memref<128x512xbf16, #tpu.memory_space<vmem>>) attributes {dimension_semantics = [#tpu.dimension_semantics<parallel>], iteration_bounds = array<i64: 2>, scalar_prefetch = 0 : i64, scratch_operands = 1 : i64, tpu.core_type = #tpu.core_type<tc>, window_params = [{transform_indices = @transform_0, window_bounds = array<i64: 1, 1, 896>}, {pipeline_mode = #tpu.pipeline_mode<synchronous>, transform_indices = @transform_1, window_bounds = array<i64: 48, 128>}, {transform_indices = @transform_2, window_bounds = array<i64: 1, 48, 512>}]} {
    %cst = arith.constant 0.000000e+00 : bf16
    %0 = vector.broadcast %cst : bf16 to vector<7x512xbf16>
    %c121 = arith.constant 121 : index
    %c0 = arith.constant 0 : index
    %1 = vector.load %arg4[%c121, %c0] : memref<128x512xbf16, #tpu.memory_space<vmem>>, vector<7x512xbf16>
    tpu.vector_store %arg4[%c121, %c0], %0 {strides = array<i32>} : memref<128x512xbf16, #tpu.memory_space<vmem>>, vector<7x512xbf16>,
    %c0_0 = arith.constant 0 : index
    %c0_1 = arith.constant 0 : index
    %c0_2 = arith.constant 0 : index
    %2 = vector.load %arg1[%c0_0, %c0_1, %c0_2] : memref<1x1x896xbf16, #tpu.memory_space<vmem>>, vector<1x1x512xbf16>
    %3 = vector.shape_cast %2 : vector<1x1x512xbf16> to vector<1x512xbf16>
    %c0_3 = arith.constant 0 : index
    %c0_4 = arith.constant 0 : index
    %4 = vector.load %arg4[%c0_3, %c0_4] : memref<128x512xbf16, #tpu.memory_space<vmem>>, vector<1x512xbf16>
    tpu.vector_store %arg4[%c0_3, %c0_4], %3 {strides = array<i32>} : memref<128x512xbf16, #tpu.memory_space<vmem>>, vector<1x512xbf16>,
    %c0_5 = arith.constant 0 : index
    %c0_6 = arith.constant 0 : index
    %c1 = arith.constant 1 : index
    %5 = vector.load %arg1[%c0_5, %c0_6, %c1] : memref<1x1x896xbf16, #tpu.memory_space<vmem>>, vector<1x1x512xbf16>
    %6 = vector.shape_cast %5 : vector<1x1x512xbf16> to vector<1x512xbf16>
    %c1_7 = arith.constant 1 : index
    %c0_8 = arith.constant 0 : index
    %7 = vector.load %arg4[%c1_7, %c0_8] : memref<128x512xbf16, #tpu.memory_space<vmem>>, vector<1x512xbf16>
    tpu.vector_store %arg4[%c1_7, %c0_8], %6 {strides = array<i32>} : memref<128x512xbf16, #tpu.memory_space<vmem>>, vector<1x512xbf16>,
    %c0_9 = arith.constant 0 : index
    %c0_10 = arith.constant 0 : index
    %c2 = arith.constant 2 : index
    %8 = vector.load %arg1[%c0_9, %c0_10, %c2] : memref<1x1x896xbf16, #tpu.memory_space<vmem>>, vector<1x1x512xbf16>
    %9 = vector.shape_cast %8 : vector<1x1x512xbf16> to vector<1x512xbf16>
    %c2_11 = arith.constant 2 : index
    %c0_12 = arith.constant 0 : index
    %10 = vector.load %arg4[%c2_11, %c0_12] : memref<128x512xbf16, #tpu.memory_space<vmem>>, vector<1x512xbf16>
    tpu.vector_store %arg4[%c2_11, %c0_12], %9 {strides = array<i32>} : memref<128x512xbf16, #tpu.memory_space<vmem>>, vector<1x512xbf16>,
    %c0_13 = arith.constant 0 : index
    %c0_14 = arith.constant 0 : index
    %c3 = arith.constant 3 : index
    %11 = vector.load %arg1[%c0_13, %c0_14, %c3] : memref<1x1x896xbf16, #tpu.memory_space<vmem>>, vector<1x1x512xbf16>
    %12 = vector.shape_cast %11 : vector<1x1x512xbf16> to vector<1x512xbf16>
    %c3_15 = arith.constant 3 : index
    %c0_16 = arith.constant 0 : index
    %13 = vector.load %arg4[%c3_15, %c0_16] : memref<128x512xbf16, #tpu.memory_space<vmem>>, vector<1x512xbf16>
    tpu.vector_store %arg4[%c3_15, %c0_16], %12 {strides = array<i32>} : memref<128x512xbf16, #tpu.memory_space<vmem>>, vector<1x512xbf16>,
    %c0_17 = arith.constant 0 : index
    %c0_18 = arith.constant 0 : index
    %c4 = arith.constant 4 : index
    %14 = vector.load %arg1[%c0_17, %c0_18, %c4] : memref<1x1x896xbf16, #tpu.memory_space<vmem>>, vector<1x1x512xbf16>
    %15 = vector.shape_cast %14 : vector<1x1x512xbf16> to vector<1x512xbf16>
    %c4_19 = arith.constant 4 : index
    %c0_20 = arith.constant 0 : index
    %16 = vector.load %arg4[%c4_19, %c0_20] : memref<128x512xbf16, #tpu.memory_space<vmem>>, vector<1x512xbf16>
    tpu.vector_store %arg4[%c4_19, %c0_20], %15 {strides = array<i32>} : memref<128x512xbf16, #tpu.memory_space<vmem>>, vector<1x512xbf16>,
    %c0_21 = arith.constant 0 : index
    %c0_22 = arith.constant 0 : index
    %c5 = arith.constant 5 : index
    %17 = vector.load %arg1[%c0_21, %c0_22, %c5] : memref<1x1x896xbf16, #tpu.memory_space<vmem>>, vector<1x1x512xbf16>
    %18 = vector.shape_cast %17 : vector<1x1x512xbf16> to vector<1x512xbf16>
    %c5_23 = arith.constant 5 : index
    %c0_24 = arith.constant 0 : index
    %19 = vector.load %arg4[%c5_23, %c0_24] : memref<128x512xbf16, #tpu.memory_space<vmem>>, vector<1x512xbf16>
    tpu.vector_store %arg4[%c5_23, %c0_24], %18 {strides = array<i32>} : memref<128x512xbf16, #tpu.memory_space<vmem>>, vector<1x512xbf16>,
    %c0_25 = arith.constant 0 : index
    %c0_26 = arith.constant 0 : index
    %c6 = arith.constant 6 : index
    %20 = vector.load %arg1[%c0_25, %c0_26, %c6] : memref<1x1x896xbf16, #tpu.memory_space<vmem>>, vector<1x1x512xbf16>
    %21 = vector.shape_cast %20 : vector<1x1x512xbf16> to vector<1x512xbf16>
    %c6_27 = arith.constant 6 : index
    %c0_28 = arith.constant 0 : index
    %22 = vector.load %arg4[%c6_27, %c0_28] : memref<128x512xbf16, #tpu.memory_space<vmem>>, vector<1x512xbf16>
    tpu.vector_store %arg4[%c6_27, %c0_28], %21 {strides = array<i32>} : memref<128x512xbf16, #tpu.memory_space<vmem>>, vector<1x512xbf16>,
    %c0_29 = arith.constant 0 : index
    %c0_30 = arith.constant 0 : index
    %c7 = arith.constant 7 : index
    %23 = vector.load %arg1[%c0_29, %c0_30, %c7] : memref<1x1x896xbf16, #tpu.memory_space<vmem>>, vector<1x1x512xbf16>
    %24 = vector.shape_cast %23 : vector<1x1x512xbf16> to vector<1x512xbf16>
    %c7_31 = arith.constant 7 : index
    %c0_32 = arith.constant 0 : index
    %25 = vector.load %arg4[%c7_31, %c0_32] : memref<128x512xbf16, #tpu.memory_space<vmem>>, vector<1x512xbf16>
    tpu.vector_store %arg4[%c7_31, %c0_32], %24 {strides = array<i32>} : memref<128x512xbf16, #tpu.memory_space<vmem>>, vector<1x512xbf16>,
    %c0_33 = arith.constant 0 : index
    %c0_34 = arith.constant 0 : index
    %c8 = arith.constant 8 : index
    %26 = vector.load %arg1[%c0_33, %c0_34, %c8] : memref<1x1x896xbf16, #tpu.memory_space<vmem>>, vector<1x1x512xbf16>
    %27 = vector.shape_cast %26 : vector<1x1x512xbf16> to vector<1x512xbf16>
    %c8_35 = arith.constant 8 : index
    %c0_36 = arith.constant 0 : index
    %28 = vector.load %arg4[%c8_35, %c0_36] : memref<128x512xbf16, #tpu.memory_space<vmem>>, vector<1x512xbf16>
    tpu.vector_store %arg4[%c8_35, %c0_36], %27 {strides = array<i32>} : memref<128x512xbf16, #tpu.memory_space<vmem>>, vector<1x512xbf16>,
    %c0_37 = arith.constant 0 : index
    %c0_38 = arith.constant 0 : index
    %c9 = arith.constant 9 : index
    %29 = vector.load %arg1[%c0_37, %c0_38, %c9] : memref<1x1x896xbf16, #tpu.memory_space<vmem>>, vector<1x1x512xbf16>
    %30 = vector.shape_cast %29 : vector<1x1x512xbf16> to vector<1x512xbf16>
    %c9_39 = arith.constant 9 : index
    %c0_40 = arith.constant 0 : index
    %31 = vector.load %arg4[%c9_39, %c0_40] : memref<128x512xbf16, #tpu.memory_space<vmem>>, vector<1x512xbf16>
    tpu.vector_store %arg4[%c9_39, %c0_40], %30 {strides = array<i32>} : memref<128x512xbf16, #tpu.memory_space<vmem>>, vector<1x512xbf16>,
    %c0_41 = arith.constant 0 : index
    %c0_42 = arith.constant 0 : index
    %c10 = arith.constant 10 : index
    %32 = vector.load %arg1[%c0_41, %c0_42, %c10] : memref<1x1x896xbf16, #tpu.memory_space<vmem>>, vector<1x1x512xbf16>
    %33 = vector.shape_cast %32 : vector<1x1x512xbf16> to vector<1x512xbf16>
    %c10_43 = arith.constant 10 : index
    %c0_44 = arith.constant 0 : index
    %34 = vector.load %arg4[%c10_43, %c0_44] : memref<128x512xbf16, #tpu.memory_space<vmem>>, vector<1x512xbf16>
    tpu.vector_store %arg4[%c10_43, %c0_44], %33 {strides = array<i32>} : memref<128x512xbf16, #tpu.memory_space<vmem>>, vector<1x512xbf16>,
    %c0_45 = arith.constant 0 : index
    %c0_46 = arith.constant 0 : index
    %c26 = arith.constant 26 : index
    %35 = vector.load %arg1[%c0_45, %c0_46, %c26] : memref<1x1x896xbf16, #tpu.memory_space<vmem>>, vector<1x1x512xbf16>
    %36 = vector.shape_cast %35 : vector<1x1x512xbf16> to vector<1x512xbf16>
    %c11 = arith.constant 11 : index
    %c0_47 = arith.constant 0 : index
    %37 = vector.load %arg4[%c11, %c0_47] : memref<128x512xbf16, #tpu.memory_space<vmem>>, vector<1x512xbf16>
    tpu.vector_store %arg4[%c11, %c0_47], %36 {strides = array<i32>} : memref<128x512xbf16, #tpu.memory_space<vmem>>, vector<1x512xbf16>,
    %c0_48 = arith.constant 0 : index
    %c0_49 = arith.constant 0 : index
    %c27 = arith.constant 27 : index
    %38 = vector.load %arg1[%c0_48, %c0_49, %c27] : memref<1x1x896xbf16, #tpu.memory_space<vmem>>, vector<1x1x512xbf16>
    %39 = vector.shape_cast %38 : vector<1x1x512xbf16> to vector<1x512xbf16>
    %c12 = arith.constant 12 : index
    %c0_50 = arith.constant 0 : index
    %40 = vector.load %arg4[%c12, %c0_50] : memref<128x512xbf16, #tpu.memory_space<vmem>>, vector<1x512xbf16>
    tpu.vector_store %arg4[%c12, %c0_50], %39 {strides = array<i32>} : memref<128x512xbf16, #tpu.memory_space<vmem>>, vector<1x512xbf16>,
    %c0_51 = arith.constant 0 : index
    %c0_52 = arith.constant 0 : index
    %c28 = arith.constant 28 : index
    %41 = vector.load %arg1[%c0_51, %c0_52, %c28] : memref<1x1x896xbf16, #tpu.memory_space<vmem>>, vector<1x1x512xbf16>
    %42 = vector.shape_cast %41 : vector<1x1x512xbf16> to vector<1x512xbf16>
    %c13 = arith.constant 13 : index
    %c0_53 = arith.constant 0 : index
    %43 = vector.load %arg4[%c13, %c0_53] : memref<128x512xbf16, #tpu.memory_space<vmem>>, vector<1x512xbf16>
    tpu.vector_store %arg4[%c13, %c0_53], %42 {strides = array<i32>} : memref<128x512xbf16, #tpu.memory_space<vmem>>, vector<1x512xbf16>,
    %c0_54 = arith.constant 0 : index
    %c0_55 = arith.constant 0 : index
    %c29 = arith.constant 29 : index
    %44 = vector.load %arg1[%c0_54, %c0_55, %c29] : memref<1x1x896xbf16, #tpu.memory_space<vmem>>, vector<1x1x512xbf16>
    %45 = vector.shape_cast %44 : vector<1x1x512xbf16> to vector<1x512xbf16>
    %c14 = arith.constant 14 : index
    %c0_56 = arith.constant 0 : index
    %46 = vector.load %arg4[%c14, %c0_56] : memref<128x512xbf16, #tpu.memory_space<vmem>>, vector<1x512xbf16>
    tpu.vector_store %arg4[%c14, %c0_56], %45 {strides = array<i32>} : memref<128x512xbf16, #tpu.memory_space<vmem>>, vector<1x512xbf16>,
    %c0_57 = arith.constant 0 : index
    %c0_58 = arith.constant 0 : index
    %c30 = arith.constant 30 : index
    %47 = vector.load %arg1[%c0_57, %c0_58, %c30] : memref<1x1x896xbf16, #tpu.memory_space<vmem>>, vector<1x1x512xbf16>
    %48 = vector.shape_cast %47 : vector<1x1x512xbf16> to vector<1x512xbf16>
    %c15 = arith.constant 15 : index
    %c0_59 = arith.constant 0 : index
    %49 = vector.load %arg4[%c15, %c0_59] : memref<128x512xbf16, #tpu.memory_space<vmem>>, vector<1x512xbf16>
    tpu.vector_store %arg4[%c15, %c0_59], %48 {strides = array<i32>} : memref<128x512xbf16, #tpu.memory_space<vmem>>, vector<1x512xbf16>,
    %c0_60 = arith.constant 0 : index
    %c0_61 = arith.constant 0 : index
    %c31 = arith.constant 31 : index
    %50 = vector.load %arg1[%c0_60, %c0_61, %c31] : memref<1x1x896xbf16, #tpu.memory_space<vmem>>, vector<1x1x512xbf16>
    %51 = vector.shape_cast %50 : vector<1x1x512xbf16> to vector<1x512xbf16>
    %c16 = arith.constant 16 : index
    %c0_62 = arith.constant 0 : index
    %52 = vector.load %arg4[%c16, %c0_62] : memref<128x512xbf16, #tpu.memory_space<vmem>>, vector<1x512xbf16>
    tpu.vector_store %arg4[%c16, %c0_62], %51 {strides = array<i32>} : memref<128x512xbf16, #tpu.memory_space<vmem>>, vector<1x512xbf16>,
    %c0_63 = arith.constant 0 : index
    %c0_64 = arith.constant 0 : index
    %c32 = arith.constant 32 : index
    %53 = vector.load %arg1[%c0_63, %c0_64, %c32] : memref<1x1x896xbf16, #tpu.memory_space<vmem>>, vector<1x1x512xbf16>
    %54 = vector.shape_cast %53 : vector<1x1x512xbf16> to vector<1x512xbf16>
    %c17 = arith.constant 17 : index
    %c0_65 = arith.constant 0 : index
    %55 = vector.load %arg4[%c17, %c0_65] : memref<128x512xbf16, #tpu.memory_space<vmem>>, vector<1x512xbf16>
    tpu.vector_store %arg4[%c17, %c0_65], %54 {strides = array<i32>} : memref<128x512xbf16, #tpu.memory_space<vmem>>, vector<1x512xbf16>,
    %c0_66 = arith.constant 0 : index
    %c0_67 = arith.constant 0 : index
    %c33 = arith.constant 33 : index
    %56 = vector.load %arg1[%c0_66, %c0_67, %c33] : memref<1x1x896xbf16, #tpu.memory_space<vmem>>, vector<1x1x512xbf16>
    %57 = vector.shape_cast %56 : vector<1x1x512xbf16> to vector<1x512xbf16>
    %c18 = arith.constant 18 : index
    %c0_68 = arith.constant 0 : index
    %58 = vector.load %arg4[%c18, %c0_68] : memref<128x512xbf16, #tpu.memory_space<vmem>>, vector<1x512xbf16>
    tpu.vector_store %arg4[%c18, %c0_68], %57 {strides = array<i32>} : memref<128x512xbf16, #tpu.memory_space<vmem>>, vector<1x512xbf16>,
    %c0_69 = arith.constant 0 : index
    %c0_70 = arith.constant 0 : index
    %c34 = arith.constant 34 : index
    %59 = vector.load %arg1[%c0_69, %c0_70, %c34] : memref<1x1x896xbf16, #tpu.memory_space<vmem>>, vector<1x1x512xbf16>
    %60 = vector.shape_cast %59 : vector<1x1x512xbf16> to vector<1x512xbf16>
    %c19 = arith.constant 19 : index
    %c0_71 = arith.constant 0 : index
    %61 = vector.load %arg4[%c19, %c0_71] : memref<128x512xbf16, #tpu.memory_space<vmem>>, vector<1x512xbf16>
    tpu.vector_store %arg4[%c19, %c0_71], %60 {strides = array<i32>} : memref<128x512xbf16, #tpu.memory_space<vmem>>, vector<1x512xbf16>,
    %c0_72 = arith.constant 0 : index
    %c0_73 = arith.constant 0 : index
    %c35 = arith.constant 35 : index
    %62 = vector.load %arg1[%c0_72, %c0_73, %c35] : memref<1x1x896xbf16, #tpu.memory_space<vmem>>, vector<1x1x512xbf16>
    %63 = vector.shape_cast %62 : vector<1x1x512xbf16> to vector<1x512xbf16>
    %c20 = arith.constant 20 : index
    %c0_74 = arith.constant 0 : index
    %64 = vector.load %arg4[%c20, %c0_74] : memref<128x512xbf16, #tpu.memory_space<vmem>>, vector<1x512xbf16>
    tpu.vector_store %arg4[%c20, %c0_74], %63 {strides = array<i32>} : memref<128x512xbf16, #tpu.memory_space<vmem>>, vector<1x512xbf16>,
    %c0_75 = arith.constant 0 : index
    %c0_76 = arith.constant 0 : index
    %c36 = arith.constant 36 : index
    %65 = vector.load %arg1[%c0_75, %c0_76, %c36] : memref<1x1x896xbf16, #tpu.memory_space<vmem>>, vector<1x1x512xbf16>
    %66 = vector.shape_cast %65 : vector<1x1x512xbf16> to vector<1x512xbf16>
    %c21 = arith.constant 21 : index
    %c0_77 = arith.constant 0 : index
    %67 = vector.load %arg4[%c21, %c0_77] : memref<128x512xbf16, #tpu.memory_space<vmem>>, vector<1x512xbf16>
    tpu.vector_store %arg4[%c21, %c0_77], %66 {strides = array<i32>} : memref<128x512xbf16, #tpu.memory_space<vmem>>, vector<1x512xbf16>,
    %c0_78 = arith.constant 0 : index
    %c0_79 = arith.constant 0 : index
    %c52 = arith.constant 52 : index
    %68 = vector.load %arg1[%c0_78, %c0_79, %c52] : memref<1x1x896xbf16, #tpu.memory_space<vmem>>, vector<1x1x512xbf16>
    %69 = vector.shape_cast %68 : vector<1x1x512xbf16> to vector<1x512xbf16>
    %c22 = arith.constant 22 : index
    %c0_80 = arith.constant 0 : index
    %70 = vector.load %arg4[%c22, %c0_80] : memref<128x512xbf16, #tpu.memory_space<vmem>>, vector<1x512xbf16>
    tpu.vector_store %arg4[%c22, %c0_80], %69 {strides = array<i32>} : memref<128x512xbf16, #tpu.memory_space<vmem>>, vector<1x512xbf16>,
    %c0_81 = arith.constant 0 : index
    %c0_82 = arith.constant 0 : index
    %c53 = arith.constant 53 : index
    %71 = vector.load %arg1[%c0_81, %c0_82, %c53] : memref<1x1x896xbf16, #tpu.memory_space<vmem>>, vector<1x1x512xbf16>
    %72 = vector.shape_cast %71 : vector<1x1x512xbf16> to vector<1x512xbf16>
    %c23 = arith.constant 23 : index
    %c0_83 = arith.constant 0 : index
    %73 = vector.load %arg4[%c23, %c0_83] : memref<128x512xbf16, #tpu.memory_space<vmem>>, vector<1x512xbf16>
    tpu.vector_store %arg4[%c23, %c0_83], %72 {strides = array<i32>} : memref<128x512xbf16, #tpu.memory_space<vmem>>, vector<1x512xbf16>,
    %c0_84 = arith.constant 0 : index
    %c0_85 = arith.constant 0 : index
    %c54 = arith.constant 54 : index
    %74 = vector.load %arg1[%c0_84, %c0_85, %c54] : memref<1x1x896xbf16, #tpu.memory_space<vmem>>, vector<1x1x512xbf16>
    %75 = vector.shape_cast %74 : vector<1x1x512xbf16> to vector<1x512xbf16>
    %c24 = arith.constant 24 : index
    %c0_86 = arith.constant 0 : index
    %76 = vector.load %arg4[%c24, %c0_86] : memref<128x512xbf16, #tpu.memory_space<vmem>>, vector<1x512xbf16>
    tpu.vector_store %arg4[%c24, %c0_86], %75 {strides = array<i32>} : memref<128x512xbf16, #tpu.memory_space<vmem>>, vector<1x512xbf16>,
    %c0_87 = arith.constant 0 : index
    %c0_88 = arith.constant 0 : index
    %c55 = arith.constant 55 : index
    %77 = vector.load %arg1[%c0_87, %c0_88, %c55] : memref<1x1x896xbf16, #tpu.memory_space<vmem>>, vector<1x1x512xbf16>
    %78 = vector.shape_cast %77 : vector<1x1x512xbf16> to vector<1x512xbf16>
    %c25 = arith.constant 25 : index
    %c0_89 = arith.constant 0 : index
    %79 = vector.load %arg4[%c25, %c0_89] : memref<128x512xbf16, #tpu.memory_space<vmem>>, vector<1x512xbf16>
    tpu.vector_store %arg4[%c25, %c0_89], %78 {strides = array<i32>} : memref<128x512xbf16, #tpu.memory_space<vmem>>, vector<1x512xbf16>,
    %c0_90 = arith.constant 0 : index
    %c0_91 = arith.constant 0 : index
    %c56 = arith.constant 56 : index
    %80 = vector.load %arg1[%c0_90, %c0_91, %c56] : memref<1x1x896xbf16, #tpu.memory_space<vmem>>, vector<1x1x512xbf16>
    %81 = vector.shape_cast %80 : vector<1x1x512xbf16> to vector<1x512xbf16>
    %c26_92 = arith.constant 26 : index
    %c0_93 = arith.constant 0 : index
    %82 = vector.load %arg4[%c26_92, %c0_93] : memref<128x512xbf16, #tpu.memory_space<vmem>>, vector<1x512xbf16>
    tpu.vector_store %arg4[%c26_92, %c0_93], %81 {strides = array<i32>} : memref<128x512xbf16, #tpu.memory_space<vmem>>, vector<1x512xbf16>,
    %c0_94 = arith.constant 0 : index
    %c0_95 = arith.constant 0 : index
    %c57 = arith.constant 57 : index
    %83 = vector.load %arg1[%c0_94, %c0_95, %c57] : memref<1x1x896xbf16, #tpu.memory_space<vmem>>, vector<1x1x512xbf16>
    %84 = vector.shape_cast %83 : vector<1x1x512xbf16> to vector<1x512xbf16>
    %c27_96 = arith.constant 27 : index
    %c0_97 = arith.constant 0 : index
    %85 = vector.load %arg4[%c27_96, %c0_97] : memref<128x512xbf16, #tpu.memory_space<vmem>>, vector<1x512xbf16>
    tpu.vector_store %arg4[%c27_96, %c0_97], %84 {strides = array<i32>} : memref<128x512xbf16, #tpu.memory_space<vmem>>, vector<1x512xbf16>,
    %c0_98 = arith.constant 0 : index
    %c0_99 = arith.constant 0 : index
    %c58 = arith.constant 58 : index
    %86 = vector.load %arg1[%c0_98, %c0_99, %c58] : memref<1x1x896xbf16, #tpu.memory_space<vmem>>, vector<1x1x512xbf16>
    %87 = vector.shape_cast %86 : vector<1x1x512xbf16> to vector<1x512xbf16>
    %c28_100 = arith.constant 28 : index
    %c0_101 = arith.constant 0 : index
    %88 = vector.load %arg4[%c28_100, %c0_101] : memref<128x512xbf16, #tpu.memory_space<vmem>>, vector<1x512xbf16>
    tpu.vector_store %arg4[%c28_100, %c0_101], %87 {strides = array<i32>} : memref<128x512xbf16, #tpu.memory_space<vmem>>, vector<1x512xbf16>,
    %c0_102 = arith.constant 0 : index
    %c0_103 = arith.constant 0 : index
    %c59 = arith.constant 59 : index
    %89 = vector.load %arg1[%c0_102, %c0_103, %c59] : memref<1x1x896xbf16, #tpu.memory_space<vmem>>, vector<1x1x512xbf16>
    %90 = vector.shape_cast %89 : vector<1x1x512xbf16> to vector<1x512xbf16>
    %c29_104 = arith.constant 29 : index
    %c0_105 = arith.constant 0 : index
    %91 = vector.load %arg4[%c29_104, %c0_105] : memref<128x512xbf16, #tpu.memory_space<vmem>>, vector<1x512xbf16>
    tpu.vector_store %arg4[%c29_104, %c0_105], %90 {strides = array<i32>} : memref<128x512xbf16, #tpu.memory_space<vmem>>, vector<1x512xbf16>,
    %c0_106 = arith.constant 0 : index
    %c0_107 = arith.constant 0 : index
    %c60 = arith.constant 60 : index
    %92 = vector.load %arg1[%c0_106, %c0_107, %c60] : memref<1x1x896xbf16, #tpu.memory_space<vmem>>, vector<1x1x512xbf16>
    %93 = vector.shape_cast %92 : vector<1x1x512xbf16> to vector<1x512xbf16>
    %c30_108 = arith.constant 30 : index
    %c0_109 = arith.constant 0 : index
    %94 = vector.load %arg4[%c30_108, %c0_109] : memref<128x512xbf16, #tpu.memory_space<vmem>>, vector<1x512xbf16>
    tpu.vector_store %arg4[%c30_108, %c0_109], %93 {strides = array<i32>} : memref<128x512xbf16, #tpu.memory_space<vmem>>, vector<1x512xbf16>,
    %c0_110 = arith.constant 0 : index
    %c0_111 = arith.constant 0 : index
    %c61 = arith.constant 61 : index
    %95 = vector.load %arg1[%c0_110, %c0_111, %c61] : memref<1x1x896xbf16, #tpu.memory_space<vmem>>, vector<1x1x512xbf16>
    %96 = vector.shape_cast %95 : vector<1x1x512xbf16> to vector<1x512xbf16>
    %c31_112 = arith.constant 31 : index
    %c0_113 = arith.constant 0 : index
    %97 = vector.load %arg4[%c31_112, %c0_113] : memref<128x512xbf16, #tpu.memory_space<vmem>>, vector<1x512xbf16>
    tpu.vector_store %arg4[%c31_112, %c0_113], %96 {strides = array<i32>} : memref<128x512xbf16, #tpu.memory_space<vmem>>, vector<1x512xbf16>,
    %c0_114 = arith.constant 0 : index
    %c0_115 = arith.constant 0 : index
    %c62 = arith.constant 62 : index
    %98 = vector.load %arg1[%c0_114, %c0_115, %c62] : memref<1x1x896xbf16, #tpu.memory_space<vmem>>, vector<1x1x512xbf16>
    %99 = vector.shape_cast %98 : vector<1x1x512xbf16> to vector<1x512xbf16>
    %c32_116 = arith.constant 32 : index
    %c0_117 = arith.constant 0 : index
    %100 = vector.load %arg4[%c32_116, %c0_117] : memref<128x512xbf16, #tpu.memory_space<vmem>>, vector<1x512xbf16>
    tpu.vector_store %arg4[%c32_116, %c0_117], %99 {strides = array<i32>} : memref<128x512xbf16, #tpu.memory_space<vmem>>, vector<1x512xbf16>,
    %c0_118 = arith.constant 0 : index
    %c0_119 = arith.constant 0 : index
    %c78 = arith.constant 78 : index
    %101 = vector.load %arg1[%c0_118, %c0_119, %c78] : memref<1x1x896xbf16, #tpu.memory_space<vmem>>, vector<1x1x512xbf16>
    %102 = vector.shape_cast %101 : vector<1x1x512xbf16> to vector<1x512xbf16>
    %c33_120 = arith.constant 33 : index
    %c0_121 = arith.constant 0 : index
    %103 = vector.load %arg4[%c33_120, %c0_121] : memref<128x512xbf16, #tpu.memory_space<vmem>>, vector<1x512xbf16>
    tpu.vector_store %arg4[%c33_120, %c0_121], %102 {strides = array<i32>} : memref<128x512xbf16, #tpu.memory_space<vmem>>, vector<1x512xbf16>,
    %c0_122 = arith.constant 0 : index
    %c0_123 = arith.constant 0 : index
    %c79 = arith.constant 79 : index
    %104 = vector.load %arg1[%c0_122, %c0_123, %c79] : memref<1x1x896xbf16, #tpu.memory_space<vmem>>, vector<1x1x512xbf16>
    %105 = vector.shape_cast %104 : vector<1x1x512xbf16> to vector<1x512xbf16>
    %c34_124 = arith.constant 34 : index
    %c0_125 = arith.constant 0 : index
    %106 = vector.load %arg4[%c34_124, %c0_125] : memref<128x512xbf16, #tpu.memory_space<vmem>>, vector<1x512xbf16>
    tpu.vector_store %arg4[%c34_124, %c0_125], %105 {strides = array<i32>} : memref<128x512xbf16, #tpu.memory_space<vmem>>, vector<1x512xbf16>,
    %c0_126 = arith.constant 0 : index
    %c0_127 = arith.constant 0 : index
    %c80 = arith.constant 80 : index
    %107 = vector.load %arg1[%c0_126, %c0_127, %c80] : memref<1x1x896xbf16, #tpu.memory_space<vmem>>, vector<1x1x512xbf16>
    %108 = vector.shape_cast %107 : vector<1x1x512xbf16> to vector<1x512xbf16>
    %c35_128 = arith.constant 35 : index
    %c0_129 = arith.constant 0 : index
    %109 = vector.load %arg4[%c35_128, %c0_129] : memref<128x512xbf16, #tpu.memory_space<vmem>>, vector<1x512xbf16>
    tpu.vector_store %arg4[%c35_128, %c0_129], %108 {strides = array<i32>} : memref<128x512xbf16, #tpu.memory_space<vmem>>, vector<1x512xbf16>,
    %c0_130 = arith.constant 0 : index
    %c0_131 = arith.constant 0 : index
    %c81 = arith.constant 81 : index
    %110 = vector.load %arg1[%c0_130, %c0_131, %c81] : memref<1x1x896xbf16, #tpu.memory_space<vmem>>, vector<1x1x512xbf16>
    %111 = vector.shape_cast %110 : vector<1x1x512xbf16> to vector<1x512xbf16>
    %c36_132 = arith.constant 36 : index
    %c0_133 = arith.constant 0 : index
    %112 = vector.load %arg4[%c36_132, %c0_133] : memref<128x512xbf16, #tpu.memory_space<vmem>>, vector<1x512xbf16>
    tpu.vector_store %arg4[%c36_132, %c0_133], %111 {strides = array<i32>} : memref<128x512xbf16, #tpu.memory_space<vmem>>, vector<1x512xbf16>,
    %c0_134 = arith.constant 0 : index
    %c0_135 = arith.constant 0 : index
    %c82 = arith.constant 82 : index
    %113 = vector.load %arg1[%c0_134, %c0_135, %c82] : memref<1x1x896xbf16, #tpu.memory_space<vmem>>, vector<1x1x512xbf16>
    %114 = vector.shape_cast %113 : vector<1x1x512xbf16> to vector<1x512xbf16>
    %c37 = arith.constant 37 : index
    %c0_136 = arith.constant 0 : index
    %115 = vector.load %arg4[%c37, %c0_136] : memref<128x512xbf16, #tpu.memory_space<vmem>>, vector<1x512xbf16>
    tpu.vector_store %arg4[%c37, %c0_136], %114 {strides = array<i32>} : memref<128x512xbf16, #tpu.memory_space<vmem>>, vector<1x512xbf16>,
    %c0_137 = arith.constant 0 : index
    %c0_138 = arith.constant 0 : index
    %c83 = arith.constant 83 : index
    %116 = vector.load %arg1[%c0_137, %c0_138, %c83] : memref<1x1x896xbf16, #tpu.memory_space<vmem>>, vector<1x1x512xbf16>
    %117 = vector.shape_cast %116 : vector<1x1x512xbf16> to vector<1x512xbf16>
    %c38 = arith.constant 38 : index
    %c0_139 = arith.constant 0 : index
    %118 = vector.load %arg4[%c38, %c0_139] : memref<128x512xbf16, #tpu.memory_space<vmem>>, vector<1x512xbf16>
    tpu.vector_store %arg4[%c38, %c0_139], %117 {strides = array<i32>} : memref<128x512xbf16, #tpu.memory_space<vmem>>, vector<1x512xbf16>,
    %c0_140 = arith.constant 0 : index
    %c0_141 = arith.constant 0 : index
    %c84 = arith.constant 84 : index
    %119 = vector.load %arg1[%c0_140, %c0_141, %c84] : memref<1x1x896xbf16, #tpu.memory_space<vmem>>, vector<1x1x512xbf16>
    %120 = vector.shape_cast %119 : vector<1x1x512xbf16> to vector<1x512xbf16>
    %c39 = arith.constant 39 : index
    %c0_142 = arith.constant 0 : index
    %121 = vector.load %arg4[%c39, %c0_142] : memref<128x512xbf16, #tpu.memory_space<vmem>>, vector<1x512xbf16>
    tpu.vector_store %arg4[%c39, %c0_142], %120 {strides = array<i32>} : memref<128x512xbf16, #tpu.memory_space<vmem>>, vector<1x512xbf16>,
    %c0_143 = arith.constant 0 : index
    %c0_144 = arith.constant 0 : index
    %c85 = arith.constant 85 : index
    %122 = vector.load %arg1[%c0_143, %c0_144, %c85] : memref<1x1x896xbf16, #tpu.memory_space<vmem>>, vector<1x1x512xbf16>
    %123 = vector.shape_cast %122 : vector<1x1x512xbf16> to vector<1x512xbf16>
    %c40 = arith.constant 40 : index
    %c0_145 = arith.constant 0 : index
    %124 = vector.load %arg4[%c40, %c0_145] : memref<128x512xbf16, #tpu.memory_space<vmem>>, vector<1x512xbf16>
    tpu.vector_store %arg4[%c40, %c0_145], %123 {strides = array<i32>} : memref<128x512xbf16, #tpu.memory_space<vmem>>, vector<1x512xbf16>,
    %c0_146 = arith.constant 0 : index
    %c0_147 = arith.constant 0 : index
    %c86 = arith.constant 86 : index
    %125 = vector.load %arg1[%c0_146, %c0_147, %c86] : memref<1x1x896xbf16, #tpu.memory_space<vmem>>, vector<1x1x512xbf16>
    %126 = vector.shape_cast %125 : vector<1x1x512xbf16> to vector<1x512xbf16>
    %c41 = arith.constant 41 : index
    %c0_148 = arith.constant 0 : index
    %127 = vector.load %arg4[%c41, %c0_148] : memref<128x512xbf16, #tpu.memory_space<vmem>>, vector<1x512xbf16>
    tpu.vector_store %arg4[%c41, %c0_148], %126 {strides = array<i32>} : memref<128x512xbf16, #tpu.memory_space<vmem>>, vector<1x512xbf16>,
    %c0_149 = arith.constant 0 : index
    %c0_150 = arith.constant 0 : index
    %c87 = arith.constant 87 : index
    %128 = vector.load %arg1[%c0_149, %c0_150, %c87] : memref<1x1x896xbf16, #tpu.memory_space<vmem>>, vector<1x1x512xbf16>
    %129 = vector.shape_cast %128 : vector<1x1x512xbf16> to vector<1x512xbf16>
    %c42 = arith.constant 42 : index
    %c0_151 = arith.constant 0 : index
    %130 = vector.load %arg4[%c42, %c0_151] : memref<128x512xbf16, #tpu.memory_space<vmem>>, vector<1x512xbf16>
    tpu.vector_store %arg4[%c42, %c0_151], %129 {strides = array<i32>} : memref<128x512xbf16, #tpu.memory_space<vmem>>, vector<1x512xbf16>,
    %c0_152 = arith.constant 0 : index
    %c0_153 = arith.constant 0 : index
    %c88 = arith.constant 88 : index
    %131 = vector.load %arg1[%c0_152, %c0_153, %c88] : memref<1x1x896xbf16, #tpu.memory_space<vmem>>, vector<1x1x512xbf16>
    %132 = vector.shape_cast %131 : vector<1x1x512xbf16> to vector<1x512xbf16>
    %c43 = arith.constant 43 : index
    %c0_154 = arith.constant 0 : index
    %133 = vector.load %arg4[%c43, %c0_154] : memref<128x512xbf16, #tpu.memory_space<vmem>>, vector<1x512xbf16>
    tpu.vector_store %arg4[%c43, %c0_154], %132 {strides = array<i32>} : memref<128x512xbf16, #tpu.memory_space<vmem>>, vector<1x512xbf16>,
    %c0_155 = arith.constant 0 : index
    %c0_156 = arith.constant 0 : index
    %c104 = arith.constant 104 : index
    %134 = vector.load %arg1[%c0_155, %c0_156, %c104] : memref<1x1x896xbf16, #tpu.memory_space<vmem>>, vector<1x1x512xbf16>
    %135 = vector.shape_cast %134 : vector<1x1x512xbf16> to vector<1x512xbf16>
    %c44 = arith.constant 44 : index
    %c0_157 = arith.constant 0 : index
    %136 = vector.load %arg4[%c44, %c0_157] : memref<128x512xbf16, #tpu.memory_space<vmem>>, vector<1x512xbf16>
    tpu.vector_store %arg4[%c44, %c0_157], %135 {strides = array<i32>} : memref<128x512xbf16, #tpu.memory_space<vmem>>, vector<1x512xbf16>,
    %c0_158 = arith.constant 0 : index
    %c0_159 = arith.constant 0 : index
    %c105 = arith.constant 105 : index
    %137 = vector.load %arg1[%c0_158, %c0_159, %c105] : memref<1x1x896xbf16, #tpu.memory_space<vmem>>, vector<1x1x512xbf16>
    %138 = vector.shape_cast %137 : vector<1x1x512xbf16> to vector<1x512xbf16>
    %c45 = arith.constant 45 : index
    %c0_160 = arith.constant 0 : index
    %139 = vector.load %arg4[%c45, %c0_160] : memref<128x512xbf16, #tpu.memory_space<vmem>>, vector<1x512xbf16>
    tpu.vector_store %arg4[%c45, %c0_160], %138 {strides = array<i32>} : memref<128x512xbf16, #tpu.memory_space<vmem>>, vector<1x512xbf16>,
    %c0_161 = arith.constant 0 : index
    %c0_162 = arith.constant 0 : index
    %c106 = arith.constant 106 : index
    %140 = vector.load %arg1[%c0_161, %c0_162, %c106] : memref<1x1x896xbf16, #tpu.memory_space<vmem>>, vector<1x1x512xbf16>
    %141 = vector.shape_cast %140 : vector<1x1x512xbf16> to vector<1x512xbf16>
    %c46 = arith.constant 46 : index
    %c0_163 = arith.constant 0 : index
    %142 = vector.load %arg4[%c46, %c0_163] : memref<128x512xbf16, #tpu.memory_space<vmem>>, vector<1x512xbf16>
    tpu.vector_store %arg4[%c46, %c0_163], %141 {strides = array<i32>} : memref<128x512xbf16, #tpu.memory_space<vmem>>, vector<1x512xbf16>,
    %c0_164 = arith.constant 0 : index
    %c0_165 = arith.constant 0 : index
    %c107 = arith.constant 107 : index
    %143 = vector.load %arg1[%c0_164, %c0_165, %c107] : memref<1x1x896xbf16, #tpu.memory_space<vmem>>, vector<1x1x512xbf16>
    %144 = vector.shape_cast %143 : vector<1x1x512xbf16> to vector<1x512xbf16>
    %c47 = arith.constant 47 : index
    %c0_166 = arith.constant 0 : index
    %145 = vector.load %arg4[%c47, %c0_166] : memref<128x512xbf16, #tpu.memory_space<vmem>>, vector<1x512xbf16>
    tpu.vector_store %arg4[%c47, %c0_166], %144 {strides = array<i32>} : memref<128x512xbf16, #tpu.memory_space<vmem>>, vector<1x512xbf16>,
    %c0_167 = arith.constant 0 : index
    %c0_168 = arith.constant 0 : index
    %c108 = arith.constant 108 : index
    %146 = vector.load %arg1[%c0_167, %c0_168, %c108] : memref<1x1x896xbf16, #tpu.memory_space<vmem>>, vector<1x1x512xbf16>
    %147 = vector.shape_cast %146 : vector<1x1x512xbf16> to vector<1x512xbf16>
    %c48 = arith.constant 48 : index
    %c0_169 = arith.constant 0 : index
    %148 = vector.load %arg4[%c48, %c0_169] : memref<128x512xbf16, #tpu.memory_space<vmem>>, vector<1x512xbf16>
    tpu.vector_store %arg4[%c48, %c0_169], %147 {strides = array<i32>} : memref<128x512xbf16, #tpu.memory_space<vmem>>, vector<1x512xbf16>,
    %c0_170 = arith.constant 0 : index
    %c0_171 = arith.constant 0 : index
    %c109 = arith.constant 109 : index
    %149 = vector.load %arg1[%c0_170, %c0_171, %c109] : memref<1x1x896xbf16, #tpu.memory_space<vmem>>, vector<1x1x512xbf16>
    %150 = vector.shape_cast %149 : vector<1x1x512xbf16> to vector<1x512xbf16>
    %c49 = arith.constant 49 : index
    %c0_172 = arith.constant 0 : index
    %151 = vector.load %arg4[%c49, %c0_172] : memref<128x512xbf16, #tpu.memory_space<vmem>>, vector<1x512xbf16>
    tpu.vector_store %arg4[%c49, %c0_172], %150 {strides = array<i32>} : memref<128x512xbf16, #tpu.memory_space<vmem>>, vector<1x512xbf16>,
    %c0_173 = arith.constant 0 : index
    %c0_174 = arith.constant 0 : index
    %c110 = arith.constant 110 : index
    %152 = vector.load %arg1[%c0_173, %c0_174, %c110] : memref<1x1x896xbf16, #tpu.memory_space<vmem>>, vector<1x1x512xbf16>
    %153 = vector.shape_cast %152 : vector<1x1x512xbf16> to vector<1x512xbf16>
    %c50 = arith.constant 50 : index
    %c0_175 = arith.constant 0 : index
    %154 = vector.load %arg4[%c50, %c0_175] : memref<128x512xbf16, #tpu.memory_space<vmem>>, vector<1x512xbf16>
    tpu.vector_store %arg4[%c50, %c0_175], %153 {strides = array<i32>} : memref<128x512xbf16, #tpu.memory_space<vmem>>, vector<1x512xbf16>,
    %c0_176 = arith.constant 0 : index
    %c0_177 = arith.constant 0 : index
    %c111 = arith.constant 111 : index
    %155 = vector.load %arg1[%c0_176, %c0_177, %c111] : memref<1x1x896xbf16, #tpu.memory_space<vmem>>, vector<1x1x512xbf16>
    %156 = vector.shape_cast %155 : vector<1x1x512xbf16> to vector<1x512xbf16>
    %c51 = arith.constant 51 : index
    %c0_178 = arith.constant 0 : index
    %157 = vector.load %arg4[%c51, %c0_178] : memref<128x512xbf16, #tpu.memory_space<vmem>>, vector<1x512xbf16>
    tpu.vector_store %arg4[%c51, %c0_178], %156 {strides = array<i32>} : memref<128x512xbf16, #tpu.memory_space<vmem>>, vector<1x512xbf16>,
    %c0_179 = arith.constant 0 : index
    %c0_180 = arith.constant 0 : index
    %c112 = arith.constant 112 : index
    %158 = vector.load %arg1[%c0_179, %c0_180, %c112] : memref<1x1x896xbf16, #tpu.memory_space<vmem>>, vector<1x1x512xbf16>
    %159 = vector.shape_cast %158 : vector<1x1x512xbf16> to vector<1x512xbf16>
    %c52_181 = arith.constant 52 : index
    %c0_182 = arith.constant 0 : index
    %160 = vector.load %arg4[%c52_181, %c0_182] : memref<128x512xbf16, #tpu.memory_space<vmem>>, vector<1x512xbf16>
    tpu.vector_store %arg4[%c52_181, %c0_182], %159 {strides = array<i32>} : memref<128x512xbf16, #tpu.memory_space<vmem>>, vector<1x512xbf16>,
    %c0_183 = arith.constant 0 : index
    %c0_184 = arith.constant 0 : index
    %c113 = arith.constant 113 : index
    %161 = vector.load %arg1[%c0_183, %c0_184, %c113] : memref<1x1x896xbf16, #tpu.memory_space<vmem>>, vector<1x1x512xbf16>
    %162 = vector.shape_cast %161 : vector<1x1x512xbf16> to vector<1x512xbf16>
    %c53_185 = arith.constant 53 : index
    %c0_186 = arith.constant 0 : index
    %163 = vector.load %arg4[%c53_185, %c0_186] : memref<128x512xbf16, #tpu.memory_space<vmem>>, vector<1x512xbf16>
    tpu.vector_store %arg4[%c53_185, %c0_186], %162 {strides = array<i32>} : memref<128x512xbf16, #tpu.memory_space<vmem>>, vector<1x512xbf16>,
    %c0_187 = arith.constant 0 : index
    %c0_188 = arith.constant 0 : index
    %c114 = arith.constant 114 : index
    %164 = vector.load %arg1[%c0_187, %c0_188, %c114] : memref<1x1x896xbf16, #tpu.memory_space<vmem>>, vector<1x1x512xbf16>
    %165 = vector.shape_cast %164 : vector<1x1x512xbf16> to vector<1x512xbf16>
    %c54_189 = arith.constant 54 : index
    %c0_190 = arith.constant 0 : index
    %166 = vector.load %arg4[%c54_189, %c0_190] : memref<128x512xbf16, #tpu.memory_space<vmem>>, vector<1x512xbf16>
    tpu.vector_store %arg4[%c54_189, %c0_190], %165 {strides = array<i32>} : memref<128x512xbf16, #tpu.memory_space<vmem>>, vector<1x512xbf16>,
    %c0_191 = arith.constant 0 : index
    %c0_192 = arith.constant 0 : index
    %c130 = arith.constant 130 : index
    %167 = vector.load %arg1[%c0_191, %c0_192, %c130] : memref<1x1x896xbf16, #tpu.memory_space<vmem>>, vector<1x1x512xbf16>
    %168 = vector.shape_cast %167 : vector<1x1x512xbf16> to vector<1x512xbf16>
    %c55_193 = arith.constant 55 : index
    %c0_194 = arith.constant 0 : index
    %169 = vector.load %arg4[%c55_193, %c0_194] : memref<128x512xbf16, #tpu.memory_space<vmem>>, vector<1x512xbf16>
    tpu.vector_store %arg4[%c55_193, %c0_194], %168 {strides = array<i32>} : memref<128x512xbf16, #tpu.memory_space<vmem>>, vector<1x512xbf16>,
    %c0_195 = arith.constant 0 : index
    %c0_196 = arith.constant 0 : index
    %c131 = arith.constant 131 : index
    %170 = vector.load %arg1[%c0_195, %c0_196, %c131] : memref<1x1x896xbf16, #tpu.memory_space<vmem>>, vector<1x1x512xbf16>
    %171 = vector.shape_cast %170 : vector<1x1x512xbf16> to vector<1x512xbf16>
    %c56_197 = arith.constant 56 : index
    %c0_198 = arith.constant 0 : index
    %172 = vector.load %arg4[%c56_197, %c0_198] : memref<128x512xbf16, #tpu.memory_space<vmem>>, vector<1x512xbf16>
    tpu.vector_store %arg4[%c56_197, %c0_198], %171 {strides = array<i32>} : memref<128x512xbf16, #tpu.memory_space<vmem>>, vector<1x512xbf16>,
    %c0_199 = arith.constant 0 : index
    %c0_200 = arith.constant 0 : index
    %c132 = arith.constant 132 : index
    %173 = vector.load %arg1[%c0_199, %c0_200, %c132] : memref<1x1x896xbf16, #tpu.memory_space<vmem>>, vector<1x1x512xbf16>
    %174 = vector.shape_cast %173 : vector<1x1x512xbf16> to vector<1x512xbf16>
    %c57_201 = arith.constant 57 : index
    %c0_202 = arith.constant 0 : index
    %175 = vector.load %arg4[%c57_201, %c0_202] : memref<128x512xbf16, #tpu.memory_space<vmem>>, vector<1x512xbf16>
    tpu.vector_store %arg4[%c57_201, %c0_202], %174 {strides = array<i32>} : memref<128x512xbf16, #tpu.memory_space<vmem>>, vector<1x512xbf16>,
    %c0_203 = arith.constant 0 : index
    %c0_204 = arith.constant 0 : index
    %c133 = arith.constant 133 : index
    %176 = vector.load %arg1[%c0_203, %c0_204, %c133] : memref<1x1x896xbf16, #tpu.memory_space<vmem>>, vector<1x1x512xbf16>
    %177 = vector.shape_cast %176 : vector<1x1x512xbf16> to vector<1x512xbf16>
    %c58_205 = arith.constant 58 : index
    %c0_206 = arith.constant 0 : index
    %178 = vector.load %arg4[%c58_205, %c0_206] : memref<128x512xbf16, #tpu.memory_space<vmem>>, vector<1x512xbf16>
    tpu.vector_store %arg4[%c58_205, %c0_206], %177 {strides = array<i32>} : memref<128x512xbf16, #tpu.memory_space<vmem>>, vector<1x512xbf16>,
    %c0_207 = arith.constant 0 : index
    %c0_208 = arith.constant 0 : index
    %c134 = arith.constant 134 : index
    %179 = vector.load %arg1[%c0_207, %c0_208, %c134] : memref<1x1x896xbf16, #tpu.memory_space<vmem>>, vector<1x1x512xbf16>
    %180 = vector.shape_cast %179 : vector<1x1x512xbf16> to vector<1x512xbf16>
    %c59_209 = arith.constant 59 : index
    %c0_210 = arith.constant 0 : index
    %181 = vector.load %arg4[%c59_209, %c0_210] : memref<128x512xbf16, #tpu.memory_space<vmem>>, vector<1x512xbf16>
    tpu.vector_store %arg4[%c59_209, %c0_210], %180 {strides = array<i32>} : memref<128x512xbf16, #tpu.memory_space<vmem>>, vector<1x512xbf16>,
    %c0_211 = arith.constant 0 : index
    %c0_212 = arith.constant 0 : index
    %c135 = arith.constant 135 : index
    %182 = vector.load %arg1[%c0_211, %c0_212, %c135] : memref<1x1x896xbf16, #tpu.memory_space<vmem>>, vector<1x1x512xbf16>
    %183 = vector.shape_cast %182 : vector<1x1x512xbf16> to vector<1x512xbf16>
    %c60_213 = arith.constant 60 : index
    %c0_214 = arith.constant 0 : index
    %184 = vector.load %arg4[%c60_213, %c0_214] : memref<128x512xbf16, #tpu.memory_space<vmem>>, vector<1x512xbf16>
    tpu.vector_store %arg4[%c60_213, %c0_214], %183 {strides = array<i32>} : memref<128x512xbf16, #tpu.memory_space<vmem>>, vector<1x512xbf16>,
    %c0_215 = arith.constant 0 : index
    %c0_216 = arith.constant 0 : index
    %c136 = arith.constant 136 : index
    %185 = vector.load %arg1[%c0_215, %c0_216, %c136] : memref<1x1x896xbf16, #tpu.memory_space<vmem>>, vector<1x1x512xbf16>
    %186 = vector.shape_cast %185 : vector<1x1x512xbf16> to vector<1x512xbf16>
    %c61_217 = arith.constant 61 : index
    %c0_218 = arith.constant 0 : index
    %187 = vector.load %arg4[%c61_217, %c0_218] : memref<128x512xbf16, #tpu.memory_space<vmem>>, vector<1x512xbf16>
    tpu.vector_store %arg4[%c61_217, %c0_218], %186 {strides = array<i32>} : memref<128x512xbf16, #tpu.memory_space<vmem>>, vector<1x512xbf16>,
    %c0_219 = arith.constant 0 : index
    %c0_220 = arith.constant 0 : index
    %c137 = arith.constant 137 : index
    %188 = vector.load %arg1[%c0_219, %c0_220, %c137] : memref<1x1x896xbf16, #tpu.memory_space<vmem>>, vector<1x1x512xbf16>
    %189 = vector.shape_cast %188 : vector<1x1x512xbf16> to vector<1x512xbf16>
    %c62_221 = arith.constant 62 : index
    %c0_222 = arith.constant 0 : index
    %190 = vector.load %arg4[%c62_221, %c0_222] : memref<128x512xbf16, #tpu.memory_space<vmem>>, vector<1x512xbf16>
    tpu.vector_store %arg4[%c62_221, %c0_222], %189 {strides = array<i32>} : memref<128x512xbf16, #tpu.memory_space<vmem>>, vector<1x512xbf16>,
    %c0_223 = arith.constant 0 : index
    %c0_224 = arith.constant 0 : index
    %c138 = arith.constant 138 : index
    %191 = vector.load %arg1[%c0_223, %c0_224, %c138] : memref<1x1x896xbf16, #tpu.memory_space<vmem>>, vector<1x1x512xbf16>
    %192 = vector.shape_cast %191 : vector<1x1x512xbf16> to vector<1x512xbf16>
    %c63 = arith.constant 63 : index
    %c0_225 = arith.constant 0 : index
    %193 = vector.load %arg4[%c63, %c0_225] : memref<128x512xbf16, #tpu.memory_space<vmem>>, vector<1x512xbf16>
    tpu.vector_store %arg4[%c63, %c0_225], %192 {strides = array<i32>} : memref<128x512xbf16, #tpu.memory_space<vmem>>, vector<1x512xbf16>,
    %c0_226 = arith.constant 0 : index
    %c0_227 = arith.constant 0 : index
    %c139 = arith.constant 139 : index
    %194 = vector.load %arg1[%c0_226, %c0_227, %c139] : memref<1x1x896xbf16, #tpu.memory_space<vmem>>, vector<1x1x512xbf16>
    %195 = vector.shape_cast %194 : vector<1x1x512xbf16> to vector<1x512xbf16>
    %c64 = arith.constant 64 : index
    %c0_228 = arith.constant 0 : index
    %196 = vector.load %arg4[%c64, %c0_228] : memref<128x512xbf16, #tpu.memory_space<vmem>>, vector<1x512xbf16>
    tpu.vector_store %arg4[%c64, %c0_228], %195 {strides = array<i32>} : memref<128x512xbf16, #tpu.memory_space<vmem>>, vector<1x512xbf16>,
    %c0_229 = arith.constant 0 : index
    %c0_230 = arith.constant 0 : index
    %c140 = arith.constant 140 : index
    %197 = vector.load %arg1[%c0_229, %c0_230, %c140] : memref<1x1x896xbf16, #tpu.memory_space<vmem>>, vector<1x1x512xbf16>
    %198 = vector.shape_cast %197 : vector<1x1x512xbf16> to vector<1x512xbf16>
    %c65 = arith.constant 65 : index
    %c0_231 = arith.constant 0 : index
    %199 = vector.load %arg4[%c65, %c0_231] : memref<128x512xbf16, #tpu.memory_space<vmem>>, vector<1x512xbf16>
    tpu.vector_store %arg4[%c65, %c0_231], %198 {strides = array<i32>} : memref<128x512xbf16, #tpu.memory_space<vmem>>, vector<1x512xbf16>,
    %c0_232 = arith.constant 0 : index
    %c0_233 = arith.constant 0 : index
    %c156 = arith.constant 156 : index
    %200 = vector.load %arg1[%c0_232, %c0_233, %c156] : memref<1x1x896xbf16, #tpu.memory_space<vmem>>, vector<1x1x512xbf16>
    %201 = vector.shape_cast %200 : vector<1x1x512xbf16> to vector<1x512xbf16>
    %c66 = arith.constant 66 : index
    %c0_234 = arith.constant 0 : index
    %202 = vector.load %arg4[%c66, %c0_234] : memref<128x512xbf16, #tpu.memory_space<vmem>>, vector<1x512xbf16>
    tpu.vector_store %arg4[%c66, %c0_234], %201 {strides = array<i32>} : memref<128x512xbf16, #tpu.memory_space<vmem>>, vector<1x512xbf16>,
    %c0_235 = arith.constant 0 : index
    %c0_236 = arith.constant 0 : index
    %c157 = arith.constant 157 : index
    %203 = vector.load %arg1[%c0_235, %c0_236, %c157] : memref<1x1x896xbf16, #tpu.memory_space<vmem>>, vector<1x1x512xbf16>
    %204 = vector.shape_cast %203 : vector<1x1x512xbf16> to vector<1x512xbf16>
    %c67 = arith.constant 67 : index
    %c0_237 = arith.constant 0 : index
    %205 = vector.load %arg4[%c67, %c0_237] : memref<128x512xbf16, #tpu.memory_space<vmem>>, vector<1x512xbf16>
    tpu.vector_store %arg4[%c67, %c0_237], %204 {strides = array<i32>} : memref<128x512xbf16, #tpu.memory_space<vmem>>, vector<1x512xbf16>,
    %c0_238 = arith.constant 0 : index
    %c0_239 = arith.constant 0 : index
    %c158 = arith.constant 158 : index
    %206 = vector.load %arg1[%c0_238, %c0_239, %c158] : memref<1x1x896xbf16, #tpu.memory_space<vmem>>, vector<1x1x512xbf16>
    %207 = vector.shape_cast %206 : vector<1x1x512xbf16> to vector<1x512xbf16>
    %c68 = arith.constant 68 : index
    %c0_240 = arith.constant 0 : index
    %208 = vector.load %arg4[%c68, %c0_240] : memref<128x512xbf16, #tpu.memory_space<vmem>>, vector<1x512xbf16>
    tpu.vector_store %arg4[%c68, %c0_240], %207 {strides = array<i32>} : memref<128x512xbf16, #tpu.memory_space<vmem>>, vector<1x512xbf16>,
    %c0_241 = arith.constant 0 : index
    %c0_242 = arith.constant 0 : index
    %c159 = arith.constant 159 : index
    %209 = vector.load %arg1[%c0_241, %c0_242, %c159] : memref<1x1x896xbf16, #tpu.memory_space<vmem>>, vector<1x1x512xbf16>
    %210 = vector.shape_cast %209 : vector<1x1x512xbf16> to vector<1x512xbf16>
    %c69 = arith.constant 69 : index
    %c0_243 = arith.constant 0 : index
    %211 = vector.load %arg4[%c69, %c0_243] : memref<128x512xbf16, #tpu.memory_space<vmem>>, vector<1x512xbf16>
    tpu.vector_store %arg4[%c69, %c0_243], %210 {strides = array<i32>} : memref<128x512xbf16, #tpu.memory_space<vmem>>, vector<1x512xbf16>,
    %c0_244 = arith.constant 0 : index
    %c0_245 = arith.constant 0 : index
    %c160 = arith.constant 160 : index
    %212 = vector.load %arg1[%c0_244, %c0_245, %c160] : memref<1x1x896xbf16, #tpu.memory_space<vmem>>, vector<1x1x512xbf16>
    %213 = vector.shape_cast %212 : vector<1x1x512xbf16> to vector<1x512xbf16>
    %c70 = arith.constant 70 : index
    %c0_246 = arith.constant 0 : index
    %214 = vector.load %arg4[%c70, %c0_246] : memref<128x512xbf16, #tpu.memory_space<vmem>>, vector<1x512xbf16>
    tpu.vector_store %arg4[%c70, %c0_246], %213 {strides = array<i32>} : memref<128x512xbf16, #tpu.memory_space<vmem>>, vector<1x512xbf16>,
    %c0_247 = arith.constant 0 : index
    %c0_248 = arith.constant 0 : index
    %c161 = arith.constant 161 : index
    %215 = vector.load %arg1[%c0_247, %c0_248, %c161] : memref<1x1x896xbf16, #tpu.memory_space<vmem>>, vector<1x1x512xbf16>
    %216 = vector.shape_cast %215 : vector<1x1x512xbf16> to vector<1x512xbf16>
    %c71 = arith.constant 71 : index
    %c0_249 = arith.constant 0 : index
    %217 = vector.load %arg4[%c71, %c0_249] : memref<128x512xbf16, #tpu.memory_space<vmem>>, vector<1x512xbf16>
    tpu.vector_store %arg4[%c71, %c0_249], %216 {strides = array<i32>} : memref<128x512xbf16, #tpu.memory_space<vmem>>, vector<1x512xbf16>,
    %c0_250 = arith.constant 0 : index
    %c0_251 = arith.constant 0 : index
    %c162 = arith.constant 162 : index
    %218 = vector.load %arg1[%c0_250, %c0_251, %c162] : memref<1x1x896xbf16, #tpu.memory_space<vmem>>, vector<1x1x512xbf16>
    %219 = vector.shape_cast %218 : vector<1x1x512xbf16> to vector<1x512xbf16>
    %c72 = arith.constant 72 : index
    %c0_252 = arith.constant 0 : index
    %220 = vector.load %arg4[%c72, %c0_252] : memref<128x512xbf16, #tpu.memory_space<vmem>>, vector<1x512xbf16>
    tpu.vector_store %arg4[%c72, %c0_252], %219 {strides = array<i32>} : memref<128x512xbf16, #tpu.memory_space<vmem>>, vector<1x512xbf16>,
    %c0_253 = arith.constant 0 : index
    %c0_254 = arith.constant 0 : index
    %c163 = arith.constant 163 : index
    %221 = vector.load %arg1[%c0_253, %c0_254, %c163] : memref<1x1x896xbf16, #tpu.memory_space<vmem>>, vector<1x1x512xbf16>
    %222 = vector.shape_cast %221 : vector<1x1x512xbf16> to vector<1x512xbf16>
    %c73 = arith.constant 73 : index
    %c0_255 = arith.constant 0 : index
    %223 = vector.load %arg4[%c73, %c0_255] : memref<128x512xbf16, #tpu.memory_space<vmem>>, vector<1x512xbf16>
    tpu.vector_store %arg4[%c73, %c0_255], %222 {strides = array<i32>} : memref<128x512xbf16, #tpu.memory_space<vmem>>, vector<1x512xbf16>,
    %c0_256 = arith.constant 0 : index
    %c0_257 = arith.constant 0 : index
    %c164 = arith.constant 164 : index
    %224 = vector.load %arg1[%c0_256, %c0_257, %c164] : memref<1x1x896xbf16, #tpu.memory_space<vmem>>, vector<1x1x512xbf16>
    %225 = vector.shape_cast %224 : vector<1x1x512xbf16> to vector<1x512xbf16>
    %c74 = arith.constant 74 : index
    %c0_258 = arith.constant 0 : index
    %226 = vector.load %arg4[%c74, %c0_258] : memref<128x512xbf16, #tpu.memory_space<vmem>>, vector<1x512xbf16>
    tpu.vector_store %arg4[%c74, %c0_258], %225 {strides = array<i32>} : memref<128x512xbf16, #tpu.memory_space<vmem>>, vector<1x512xbf16>,
    %c0_259 = arith.constant 0 : index
    %c0_260 = arith.constant 0 : index
    %c165 = arith.constant 165 : index
    %227 = vector.load %arg1[%c0_259, %c0_260, %c165] : memref<1x1x896xbf16, #tpu.memory_space<vmem>>, vector<1x1x512xbf16>
    %228 = vector.shape_cast %227 : vector<1x1x512xbf16> to vector<1x512xbf16>
    %c75 = arith.constant 75 : index
    %c0_261 = arith.constant 0 : index
    %229 = vector.load %arg4[%c75, %c0_261] : memref<128x512xbf16, #tpu.memory_space<vmem>>, vector<1x512xbf16>
    tpu.vector_store %arg4[%c75, %c0_261], %228 {strides = array<i32>} : memref<128x512xbf16, #tpu.memory_space<vmem>>, vector<1x512xbf16>,
    %c0_262 = arith.constant 0 : index
    %c0_263 = arith.constant 0 : index
    %c166 = arith.constant 166 : index
    %230 = vector.load %arg1[%c0_262, %c0_263, %c166] : memref<1x1x896xbf16, #tpu.memory_space<vmem>>, vector<1x1x512xbf16>
    %231 = vector.shape_cast %230 : vector<1x1x512xbf16> to vector<1x512xbf16>
    %c76 = arith.constant 76 : index
    %c0_264 = arith.constant 0 : index
    %232 = vector.load %arg4[%c76, %c0_264] : memref<128x512xbf16, #tpu.memory_space<vmem>>, vector<1x512xbf16>
    tpu.vector_store %arg4[%c76, %c0_264], %231 {strides = array<i32>} : memref<128x512xbf16, #tpu.memory_space<vmem>>, vector<1x512xbf16>,
    %c0_265 = arith.constant 0 : index
    %c0_266 = arith.constant 0 : index
    %c182 = arith.constant 182 : index
    %233 = vector.load %arg1[%c0_265, %c0_266, %c182] : memref<1x1x896xbf16, #tpu.memory_space<vmem>>, vector<1x1x512xbf16>
    %234 = vector.shape_cast %233 : vector<1x1x512xbf16> to vector<1x512xbf16>
    %c77 = arith.constant 77 : index
    %c0_267 = arith.constant 0 : index
    %235 = vector.load %arg4[%c77, %c0_267] : memref<128x512xbf16, #tpu.memory_space<vmem>>, vector<1x512xbf16>
    tpu.vector_store %arg4[%c77, %c0_267], %234 {strides = array<i32>} : memref<128x512xbf16, #tpu.memory_space<vmem>>, vector<1x512xbf16>,
    %c0_268 = arith.constant 0 : index
    %c0_269 = arith.constant 0 : index
    %c183 = arith.constant 183 : index
    %236 = vector.load %arg1[%c0_268, %c0_269, %c183] : memref<1x1x896xbf16, #tpu.memory_space<vmem>>, vector<1x1x512xbf16>
    %237 = vector.shape_cast %236 : vector<1x1x512xbf16> to vector<1x512xbf16>
    %c78_270 = arith.constant 78 : index
    %c0_271 = arith.constant 0 : index
    %238 = vector.load %arg4[%c78_270, %c0_271] : memref<128x512xbf16, #tpu.memory_space<vmem>>, vector<1x512xbf16>
    tpu.vector_store %arg4[%c78_270, %c0_271], %237 {strides = array<i32>} : memref<128x512xbf16, #tpu.memory_space<vmem>>, vector<1x512xbf16>,
    %c0_272 = arith.constant 0 : index
    %c0_273 = arith.constant 0 : index
    %c184 = arith.constant 184 : index
    %239 = vector.load %arg1[%c0_272, %c0_273, %c184] : memref<1x1x896xbf16, #tpu.memory_space<vmem>>, vector<1x1x512xbf16>
    %240 = vector.shape_cast %239 : vector<1x1x512xbf16> to vector<1x512xbf16>
    %c79_274 = arith.constant 79 : index
    %c0_275 = arith.constant 0 : index
    %241 = vector.load %arg4[%c79_274, %c0_275] : memref<128x512xbf16, #tpu.memory_space<vmem>>, vector<1x512xbf16>
    tpu.vector_store %arg4[%c79_274, %c0_275], %240 {strides = array<i32>} : memref<128x512xbf16, #tpu.memory_space<vmem>>, vector<1x512xbf16>,
    %c0_276 = arith.constant 0 : index
    %c0_277 = arith.constant 0 : index
    %c185 = arith.constant 185 : index
    %242 = vector.load %arg1[%c0_276, %c0_277, %c185] : memref<1x1x896xbf16, #tpu.memory_space<vmem>>, vector<1x1x512xbf16>
    %243 = vector.shape_cast %242 : vector<1x1x512xbf16> to vector<1x512xbf16>
    %c80_278 = arith.constant 80 : index
    %c0_279 = arith.constant 0 : index
    %244 = vector.load %arg4[%c80_278, %c0_279] : memref<128x512xbf16, #tpu.memory_space<vmem>>, vector<1x512xbf16>
    tpu.vector_store %arg4[%c80_278, %c0_279], %243 {strides = array<i32>} : memref<128x512xbf16, #tpu.memory_space<vmem>>, vector<1x512xbf16>,
    %c0_280 = arith.constant 0 : index
    %c0_281 = arith.constant 0 : index
    %c186 = arith.constant 186 : index
    %245 = vector.load %arg1[%c0_280, %c0_281, %c186] : memref<1x1x896xbf16, #tpu.memory_space<vmem>>, vector<1x1x512xbf16>
    %246 = vector.shape_cast %245 : vector<1x1x512xbf16> to vector<1x512xbf16>
    %c81_282 = arith.constant 81 : index
    %c0_283 = arith.constant 0 : index
    %247 = vector.load %arg4[%c81_282, %c0_283] : memref<128x512xbf16, #tpu.memory_space<vmem>>, vector<1x512xbf16>
    tpu.vector_store %arg4[%c81_282, %c0_283], %246 {strides = array<i32>} : memref<128x512xbf16, #tpu.memory_space<vmem>>, vector<1x512xbf16>,
    %c0_284 = arith.constant 0 : index
    %c0_285 = arith.constant 0 : index
    %c187 = arith.constant 187 : index
    %248 = vector.load %arg1[%c0_284, %c0_285, %c187] : memref<1x1x896xbf16, #tpu.memory_space<vmem>>, vector<1x1x512xbf16>
    %249 = vector.shape_cast %248 : vector<1x1x512xbf16> to vector<1x512xbf16>
    %c82_286 = arith.constant 82 : index
    %c0_287 = arith.constant 0 : index
    %250 = vector.load %arg4[%c82_286, %c0_287] : memref<128x512xbf16, #tpu.memory_space<vmem>>, vector<1x512xbf16>
    tpu.vector_store %arg4[%c82_286, %c0_287], %249 {strides = array<i32>} : memref<128x512xbf16, #tpu.memory_space<vmem>>, vector<1x512xbf16>,
    %c0_288 = arith.constant 0 : index
    %c0_289 = arith.constant 0 : index
    %c188 = arith.constant 188 : index
    %251 = vector.load %arg1[%c0_288, %c0_289, %c188] : memref<1x1x896xbf16, #tpu.memory_space<vmem>>, vector<1x1x512xbf16>
    %252 = vector.shape_cast %251 : vector<1x1x512xbf16> to vector<1x512xbf16>
    %c83_290 = arith.constant 83 : index
    %c0_291 = arith.constant 0 : index
    %253 = vector.load %arg4[%c83_290, %c0_291] : memref<128x512xbf16, #tpu.memory_space<vmem>>, vector<1x512xbf16>
    tpu.vector_store %arg4[%c83_290, %c0_291], %252 {strides = array<i32>} : memref<128x512xbf16, #tpu.memory_space<vmem>>, vector<1x512xbf16>,
    %c0_292 = arith.constant 0 : index
    %c0_293 = arith.constant 0 : index
    %c189 = arith.constant 189 : index
    %254 = vector.load %arg1[%c0_292, %c0_293, %c189] : memref<1x1x896xbf16, #tpu.memory_space<vmem>>, vector<1x1x512xbf16>
    %255 = vector.shape_cast %254 : vector<1x1x512xbf16> to vector<1x512xbf16>
    %c84_294 = arith.constant 84 : index
    %c0_295 = arith.constant 0 : index
    %256 = vector.load %arg4[%c84_294, %c0_295] : memref<128x512xbf16, #tpu.memory_space<vmem>>, vector<1x512xbf16>
    tpu.vector_store %arg4[%c84_294, %c0_295], %255 {strides = array<i32>} : memref<128x512xbf16, #tpu.memory_space<vmem>>, vector<1x512xbf16>,
    %c0_296 = arith.constant 0 : index
    %c0_297 = arith.constant 0 : index
    %c190 = arith.constant 190 : index
    %257 = vector.load %arg1[%c0_296, %c0_297, %c190] : memref<1x1x896xbf16, #tpu.memory_space<vmem>>, vector<1x1x512xbf16>
    %258 = vector.shape_cast %257 : vector<1x1x512xbf16> to vector<1x512xbf16>
    %c85_298 = arith.constant 85 : index
    %c0_299 = arith.constant 0 : index
    %259 = vector.load %arg4[%c85_298, %c0_299] : memref<128x512xbf16, #tpu.memory_space<vmem>>, vector<1x512xbf16>
    tpu.vector_store %arg4[%c85_298, %c0_299], %258 {strides = array<i32>} : memref<128x512xbf16, #tpu.memory_space<vmem>>, vector<1x512xbf16>,
    %c0_300 = arith.constant 0 : index
    %c0_301 = arith.constant 0 : index
    %c191 = arith.constant 191 : index
    %260 = vector.load %arg1[%c0_300, %c0_301, %c191] : memref<1x1x896xbf16, #tpu.memory_space<vmem>>, vector<1x1x512xbf16>
    %261 = vector.shape_cast %260 : vector<1x1x512xbf16> to vector<1x512xbf16>
    %c86_302 = arith.constant 86 : index
    %c0_303 = arith.constant 0 : index
    %262 = vector.load %arg4[%c86_302, %c0_303] : memref<128x512xbf16, #tpu.memory_space<vmem>>, vector<1x512xbf16>
    tpu.vector_store %arg4[%c86_302, %c0_303], %261 {strides = array<i32>} : memref<128x512xbf16, #tpu.memory_space<vmem>>, vector<1x512xbf16>,
    %c0_304 = arith.constant 0 : index
    %c0_305 = arith.constant 0 : index
    %c192 = arith.constant 192 : index
    %263 = vector.load %arg1[%c0_304, %c0_305, %c192] : memref<1x1x896xbf16, #tpu.memory_space<vmem>>, vector<1x1x512xbf16>
    %264 = vector.shape_cast %263 : vector<1x1x512xbf16> to vector<1x512xbf16>
    %c87_306 = arith.constant 87 : index
    %c0_307 = arith.constant 0 : index
    %265 = vector.load %arg4[%c87_306, %c0_307] : memref<128x512xbf16, #tpu.memory_space<vmem>>, vector<1x512xbf16>
    tpu.vector_store %arg4[%c87_306, %c0_307], %264 {strides = array<i32>} : memref<128x512xbf16, #tpu.memory_space<vmem>>, vector<1x512xbf16>,
    %c0_308 = arith.constant 0 : index
    %c0_309 = arith.constant 0 : index
    %c208 = arith.constant 208 : index
    %266 = vector.load %arg1[%c0_308, %c0_309, %c208] : memref<1x1x896xbf16, #tpu.memory_space<vmem>>, vector<1x1x512xbf16>
    %267 = vector.shape_cast %266 : vector<1x1x512xbf16> to vector<1x512xbf16>
    %c88_310 = arith.constant 88 : index
    %c0_311 = arith.constant 0 : index
    %268 = vector.load %arg4[%c88_310, %c0_311] : memref<128x512xbf16, #tpu.memory_space<vmem>>, vector<1x512xbf16>
    tpu.vector_store %arg4[%c88_310, %c0_311], %267 {strides = array<i32>} : memref<128x512xbf16, #tpu.memory_space<vmem>>, vector<1x512xbf16>,
    %c0_312 = arith.constant 0 : index
    %c0_313 = arith.constant 0 : index
    %c209 = arith.constant 209 : index
    %269 = vector.load %arg1[%c0_312, %c0_313, %c209] : memref<1x1x896xbf16, #tpu.memory_space<vmem>>, vector<1x1x512xbf16>
    %270 = vector.shape_cast %269 : vector<1x1x512xbf16> to vector<1x512xbf16>
    %c89 = arith.constant 89 : index
    %c0_314 = arith.constant 0 : index
    %271 = vector.load %arg4[%c89, %c0_314] : memref<128x512xbf16, #tpu.memory_space<vmem>>, vector<1x512xbf16>
    tpu.vector_store %arg4[%c89, %c0_314], %270 {strides = array<i32>} : memref<128x512xbf16, #tpu.memory_space<vmem>>, vector<1x512xbf16>,
    %c0_315 = arith.constant 0 : index
    %c0_316 = arith.constant 0 : index
    %c210 = arith.constant 210 : index
    %272 = vector.load %arg1[%c0_315, %c0_316, %c210] : memref<1x1x896xbf16, #tpu.memory_space<vmem>>, vector<1x1x512xbf16>
    %273 = vector.shape_cast %272 : vector<1x1x512xbf16> to vector<1x512xbf16>
    %c90 = arith.constant 90 : index
    %c0_317 = arith.constant 0 : index
    %274 = vector.load %arg4[%c90, %c0_317] : memref<128x512xbf16, #tpu.memory_space<vmem>>, vector<1x512xbf16>
    tpu.vector_store %arg4[%c90, %c0_317], %273 {strides = array<i32>} : memref<128x512xbf16, #tpu.memory_space<vmem>>, vector<1x512xbf16>,
    %c0_318 = arith.constant 0 : index
    %c0_319 = arith.constant 0 : index
    %c211 = arith.constant 211 : index
    %275 = vector.load %arg1[%c0_318, %c0_319, %c211] : memref<1x1x896xbf16, #tpu.memory_space<vmem>>, vector<1x1x512xbf16>
    %276 = vector.shape_cast %275 : vector<1x1x512xbf16> to vector<1x512xbf16>
    %c91 = arith.constant 91 : index
    %c0_320 = arith.constant 0 : index
    %277 = vector.load %arg4[%c91, %c0_320] : memref<128x512xbf16, #tpu.memory_space<vmem>>, vector<1x512xbf16>
    tpu.vector_store %arg4[%c91, %c0_320], %276 {strides = array<i32>} : memref<128x512xbf16, #tpu.memory_space<vmem>>, vector<1x512xbf16>,
    %c0_321 = arith.constant 0 : index
    %c0_322 = arith.constant 0 : index
    %c212 = arith.constant 212 : index
    %278 = vector.load %arg1[%c0_321, %c0_322, %c212] : memref<1x1x896xbf16, #tpu.memory_space<vmem>>, vector<1x1x512xbf16>
    %279 = vector.shape_cast %278 : vector<1x1x512xbf16> to vector<1x512xbf16>
    %c92 = arith.constant 92 : index
    %c0_323 = arith.constant 0 : index
    %280 = vector.load %arg4[%c92, %c0_323] : memref<128x512xbf16, #tpu.memory_space<vmem>>, vector<1x512xbf16>
    tpu.vector_store %arg4[%c92, %c0_323], %279 {strides = array<i32>} : memref<128x512xbf16, #tpu.memory_space<vmem>>, vector<1x512xbf16>,
    %c0_324 = arith.constant 0 : index
    %c0_325 = arith.constant 0 : index
    %c213 = arith.constant 213 : index
    %281 = vector.load %arg1[%c0_324, %c0_325, %c213] : memref<1x1x896xbf16, #tpu.memory_space<vmem>>, vector<1x1x512xbf16>
    %282 = vector.shape_cast %281 : vector<1x1x512xbf16> to vector<1x512xbf16>
    %c93 = arith.constant 93 : index
    %c0_326 = arith.constant 0 : index
    %283 = vector.load %arg4[%c93, %c0_326] : memref<128x512xbf16, #tpu.memory_space<vmem>>, vector<1x512xbf16>
    tpu.vector_store %arg4[%c93, %c0_326], %282 {strides = array<i32>} : memref<128x512xbf16, #tpu.memory_space<vmem>>, vector<1x512xbf16>,
    %c0_327 = arith.constant 0 : index
    %c0_328 = arith.constant 0 : index
    %c214 = arith.constant 214 : index
    %284 = vector.load %arg1[%c0_327, %c0_328, %c214] : memref<1x1x896xbf16, #tpu.memory_space<vmem>>, vector<1x1x512xbf16>
    %285 = vector.shape_cast %284 : vector<1x1x512xbf16> to vector<1x512xbf16>
    %c94 = arith.constant 94 : index
    %c0_329 = arith.constant 0 : index
    %286 = vector.load %arg4[%c94, %c0_329] : memref<128x512xbf16, #tpu.memory_space<vmem>>, vector<1x512xbf16>
    tpu.vector_store %arg4[%c94, %c0_329], %285 {strides = array<i32>} : memref<128x512xbf16, #tpu.memory_space<vmem>>, vector<1x512xbf16>,
    %c0_330 = arith.constant 0 : index
    %c0_331 = arith.constant 0 : index
    %c215 = arith.constant 215 : index
    %287 = vector.load %arg1[%c0_330, %c0_331, %c215] : memref<1x1x896xbf16, #tpu.memory_space<vmem>>, vector<1x1x512xbf16>
    %288 = vector.shape_cast %287 : vector<1x1x512xbf16> to vector<1x512xbf16>
    %c95 = arith.constant 95 : index
    %c0_332 = arith.constant 0 : index
    %289 = vector.load %arg4[%c95, %c0_332] : memref<128x512xbf16, #tpu.memory_space<vmem>>, vector<1x512xbf16>
    tpu.vector_store %arg4[%c95, %c0_332], %288 {strides = array<i32>} : memref<128x512xbf16, #tpu.memory_space<vmem>>, vector<1x512xbf16>,
    %c0_333 = arith.constant 0 : index
    %c0_334 = arith.constant 0 : index
    %c216 = arith.constant 216 : index
    %290 = vector.load %arg1[%c0_333, %c0_334, %c216] : memref<1x1x896xbf16, #tpu.memory_space<vmem>>, vector<1x1x512xbf16>
    %291 = vector.shape_cast %290 : vector<1x1x512xbf16> to vector<1x512xbf16>
    %c96 = arith.constant 96 : index
    %c0_335 = arith.constant 0 : index
    %292 = vector.load %arg4[%c96, %c0_335] : memref<128x512xbf16, #tpu.memory_space<vmem>>, vector<1x512xbf16>
    tpu.vector_store %arg4[%c96, %c0_335], %291 {strides = array<i32>} : memref<128x512xbf16, #tpu.memory_space<vmem>>, vector<1x512xbf16>,
    %c0_336 = arith.constant 0 : index
    %c0_337 = arith.constant 0 : index
    %c217 = arith.constant 217 : index
    %293 = vector.load %arg1[%c0_336, %c0_337, %c217] : memref<1x1x896xbf16, #tpu.memory_space<vmem>>, vector<1x1x512xbf16>
    %294 = vector.shape_cast %293 : vector<1x1x512xbf16> to vector<1x512xbf16>
    %c97 = arith.constant 97 : index
    %c0_338 = arith.constant 0 : index
    %295 = vector.load %arg4[%c97, %c0_338] : memref<128x512xbf16, #tpu.memory_space<vmem>>, vector<1x512xbf16>
    tpu.vector_store %arg4[%c97, %c0_338], %294 {strides = array<i32>} : memref<128x512xbf16, #tpu.memory_space<vmem>>, vector<1x512xbf16>,
    %c0_339 = arith.constant 0 : index
    %c0_340 = arith.constant 0 : index
    %c218 = arith.constant 218 : index
    %296 = vector.load %arg1[%c0_339, %c0_340, %c218] : memref<1x1x896xbf16, #tpu.memory_space<vmem>>, vector<1x1x512xbf16>
    %297 = vector.shape_cast %296 : vector<1x1x512xbf16> to vector<1x512xbf16>
    %c98 = arith.constant 98 : index
    %c0_341 = arith.constant 0 : index
    %298 = vector.load %arg4[%c98, %c0_341] : memref<128x512xbf16, #tpu.memory_space<vmem>>, vector<1x512xbf16>
    tpu.vector_store %arg4[%c98, %c0_341], %297 {strides = array<i32>} : memref<128x512xbf16, #tpu.memory_space<vmem>>, vector<1x512xbf16>,
    %c0_342 = arith.constant 0 : index
    %c0_343 = arith.constant 0 : index
    %c234 = arith.constant 234 : index
    %299 = vector.load %arg1[%c0_342, %c0_343, %c234] : memref<1x1x896xbf16, #tpu.memory_space<vmem>>, vector<1x1x512xbf16>
    %300 = vector.shape_cast %299 : vector<1x1x512xbf16> to vector<1x512xbf16>
    %c99 = arith.constant 99 : index
    %c0_344 = arith.constant 0 : index
    %301 = vector.load %arg4[%c99, %c0_344] : memref<128x512xbf16, #tpu.memory_space<vmem>>, vector<1x512xbf16>
    tpu.vector_store %arg4[%c99, %c0_344], %300 {strides = array<i32>} : memref<128x512xbf16, #tpu.memory_space<vmem>>, vector<1x512xbf16>,
    %c0_345 = arith.constant 0 : index
    %c0_346 = arith.constant 0 : index
    %c235 = arith.constant 235 : index
    %302 = vector.load %arg1[%c0_345, %c0_346, %c235] : memref<1x1x896xbf16, #tpu.memory_space<vmem>>, vector<1x1x512xbf16>
    %303 = vector.shape_cast %302 : vector<1x1x512xbf16> to vector<1x512xbf16>
    %c100 = arith.constant 100 : index
    %c0_347 = arith.constant 0 : index
    %304 = vector.load %arg4[%c100, %c0_347] : memref<128x512xbf16, #tpu.memory_space<vmem>>, vector<1x512xbf16>
    tpu.vector_store %arg4[%c100, %c0_347], %303 {strides = array<i32>} : memref<128x512xbf16, #tpu.memory_space<vmem>>, vector<1x512xbf16>,
    %c0_348 = arith.constant 0 : index
    %c0_349 = arith.constant 0 : index
    %c236 = arith.constant 236 : index
    %305 = vector.load %arg1[%c0_348, %c0_349, %c236] : memref<1x1x896xbf16, #tpu.memory_space<vmem>>, vector<1x1x512xbf16>
    %306 = vector.shape_cast %305 : vector<1x1x512xbf16> to vector<1x512xbf16>
    %c101 = arith.constant 101 : index
    %c0_350 = arith.constant 0 : index
    %307 = vector.load %arg4[%c101, %c0_350] : memref<128x512xbf16, #tpu.memory_space<vmem>>, vector<1x512xbf16>
    tpu.vector_store %arg4[%c101, %c0_350], %306 {strides = array<i32>} : memref<128x512xbf16, #tpu.memory_space<vmem>>, vector<1x512xbf16>,
    %c0_351 = arith.constant 0 : index
    %c0_352 = arith.constant 0 : index
    %c237 = arith.constant 237 : index
    %308 = vector.load %arg1[%c0_351, %c0_352, %c237] : memref<1x1x896xbf16, #tpu.memory_space<vmem>>, vector<1x1x512xbf16>
    %309 = vector.shape_cast %308 : vector<1x1x512xbf16> to vector<1x512xbf16>
    %c102 = arith.constant 102 : index
    %c0_353 = arith.constant 0 : index
    %310 = vector.load %arg4[%c102, %c0_353] : memref<128x512xbf16, #tpu.memory_space<vmem>>, vector<1x512xbf16>
    tpu.vector_store %arg4[%c102, %c0_353], %309 {strides = array<i32>} : memref<128x512xbf16, #tpu.memory_space<vmem>>, vector<1x512xbf16>,
    %c0_354 = arith.constant 0 : index
    %c0_355 = arith.constant 0 : index
    %c238 = arith.constant 238 : index
    %311 = vector.load %arg1[%c0_354, %c0_355, %c238] : memref<1x1x896xbf16, #tpu.memory_space<vmem>>, vector<1x1x512xbf16>
    %312 = vector.shape_cast %311 : vector<1x1x512xbf16> to vector<1x512xbf16>
    %c103 = arith.constant 103 : index
    %c0_356 = arith.constant 0 : index
    %313 = vector.load %arg4[%c103, %c0_356] : memref<128x512xbf16, #tpu.memory_space<vmem>>, vector<1x512xbf16>
    tpu.vector_store %arg4[%c103, %c0_356], %312 {strides = array<i32>} : memref<128x512xbf16, #tpu.memory_space<vmem>>, vector<1x512xbf16>,
    %c0_357 = arith.constant 0 : index
    %c0_358 = arith.constant 0 : index
    %c239 = arith.constant 239 : index
    %314 = vector.load %arg1[%c0_357, %c0_358, %c239] : memref<1x1x896xbf16, #tpu.memory_space<vmem>>, vector<1x1x512xbf16>
    %315 = vector.shape_cast %314 : vector<1x1x512xbf16> to vector<1x512xbf16>
    %c104_359 = arith.constant 104 : index
    %c0_360 = arith.constant 0 : index
    %316 = vector.load %arg4[%c104_359, %c0_360] : memref<128x512xbf16, #tpu.memory_space<vmem>>, vector<1x512xbf16>
    tpu.vector_store %arg4[%c104_359, %c0_360], %315 {strides = array<i32>} : memref<128x512xbf16, #tpu.memory_space<vmem>>, vector<1x512xbf16>,
    %c0_361 = arith.constant 0 : index
    %c0_362 = arith.constant 0 : index
    %c240 = arith.constant 240 : index
    %317 = vector.load %arg1[%c0_361, %c0_362, %c240] : memref<1x1x896xbf16, #tpu.memory_space<vmem>>, vector<1x1x512xbf16>
    %318 = vector.shape_cast %317 : vector<1x1x512xbf16> to vector<1x512xbf16>
    %c105_363 = arith.constant 105 : index
    %c0_364 = arith.constant 0 : index
    %319 = vector.load %arg4[%c105_363, %c0_364] : memref<128x512xbf16, #tpu.memory_space<vmem>>, vector<1x512xbf16>
    tpu.vector_store %arg4[%c105_363, %c0_364], %318 {strides = array<i32>} : memref<128x512xbf16, #tpu.memory_space<vmem>>, vector<1x512xbf16>,
    %c0_365 = arith.constant 0 : index
    %c0_366 = arith.constant 0 : index
    %c241 = arith.constant 241 : index
    %320 = vector.load %arg1[%c0_365, %c0_366, %c241] : memref<1x1x896xbf16, #tpu.memory_space<vmem>>, vector<1x1x512xbf16>
    %321 = vector.shape_cast %320 : vector<1x1x512xbf16> to vector<1x512xbf16>
    %c106_367 = arith.constant 106 : index
    %c0_368 = arith.constant 0 : index
    %322 = vector.load %arg4[%c106_367, %c0_368] : memref<128x512xbf16, #tpu.memory_space<vmem>>, vector<1x512xbf16>
    tpu.vector_store %arg4[%c106_367, %c0_368], %321 {strides = array<i32>} : memref<128x512xbf16, #tpu.memory_space<vmem>>, vector<1x512xbf16>,
    %c0_369 = arith.constant 0 : index
    %c0_370 = arith.constant 0 : index
    %c242 = arith.constant 242 : index
    %323 = vector.load %arg1[%c0_369, %c0_370, %c242] : memref<1x1x896xbf16, #tpu.memory_space<vmem>>, vector<1x1x512xbf16>
    %324 = vector.shape_cast %323 : vector<1x1x512xbf16> to vector<1x512xbf16>
    %c107_371 = arith.constant 107 : index
    %c0_372 = arith.constant 0 : index
    %325 = vector.load %arg4[%c107_371, %c0_372] : memref<128x512xbf16, #tpu.memory_space<vmem>>, vector<1x512xbf16>
    tpu.vector_store %arg4[%c107_371, %c0_372], %324 {strides = array<i32>} : memref<128x512xbf16, #tpu.memory_space<vmem>>, vector<1x512xbf16>,
    %c0_373 = arith.constant 0 : index
    %c0_374 = arith.constant 0 : index
    %c243 = arith.constant 243 : index
    %326 = vector.load %arg1[%c0_373, %c0_374, %c243] : memref<1x1x896xbf16, #tpu.memory_space<vmem>>, vector<1x1x512xbf16>
    %327 = vector.shape_cast %326 : vector<1x1x512xbf16> to vector<1x512xbf16>
    %c108_375 = arith.constant 108 : index
    %c0_376 = arith.constant 0 : index
    %328 = vector.load %arg4[%c108_375, %c0_376] : memref<128x512xbf16, #tpu.memory_space<vmem>>, vector<1x512xbf16>
    tpu.vector_store %arg4[%c108_375, %c0_376], %327 {strides = array<i32>} : memref<128x512xbf16, #tpu.memory_space<vmem>>, vector<1x512xbf16>,
    %c0_377 = arith.constant 0 : index
    %c0_378 = arith.constant 0 : index
    %c244 = arith.constant 244 : index
    %329 = vector.load %arg1[%c0_377, %c0_378, %c244] : memref<1x1x896xbf16, #tpu.memory_space<vmem>>, vector<1x1x512xbf16>
    %330 = vector.shape_cast %329 : vector<1x1x512xbf16> to vector<1x512xbf16>
    %c109_379 = arith.constant 109 : index
    %c0_380 = arith.constant 0 : index
    %331 = vector.load %arg4[%c109_379, %c0_380] : memref<128x512xbf16, #tpu.memory_space<vmem>>, vector<1x512xbf16>
    tpu.vector_store %arg4[%c109_379, %c0_380], %330 {strides = array<i32>} : memref<128x512xbf16, #tpu.memory_space<vmem>>, vector<1x512xbf16>,
    %c0_381 = arith.constant 0 : index
    %c0_382 = arith.constant 0 : index
    %c260 = arith.constant 260 : index
    %332 = vector.load %arg1[%c0_381, %c0_382, %c260] : memref<1x1x896xbf16, #tpu.memory_space<vmem>>, vector<1x1x512xbf16>
    %333 = vector.shape_cast %332 : vector<1x1x512xbf16> to vector<1x512xbf16>
    %c110_383 = arith.constant 110 : index
    %c0_384 = arith.constant 0 : index
    %334 = vector.load %arg4[%c110_383, %c0_384] : memref<128x512xbf16, #tpu.memory_space<vmem>>, vector<1x512xbf16>
    tpu.vector_store %arg4[%c110_383, %c0_384], %333 {strides = array<i32>} : memref<128x512xbf16, #tpu.memory_space<vmem>>, vector<1x512xbf16>,
    %c0_385 = arith.constant 0 : index
    %c0_386 = arith.constant 0 : index
    %c261 = arith.constant 261 : index
    %335 = vector.load %arg1[%c0_385, %c0_386, %c261] : memref<1x1x896xbf16, #tpu.memory_space<vmem>>, vector<1x1x512xbf16>
    %336 = vector.shape_cast %335 : vector<1x1x512xbf16> to vector<1x512xbf16>
    %c111_387 = arith.constant 111 : index
    %c0_388 = arith.constant 0 : index
    %337 = vector.load %arg4[%c111_387, %c0_388] : memref<128x512xbf16, #tpu.memory_space<vmem>>, vector<1x512xbf16>
    tpu.vector_store %arg4[%c111_387, %c0_388], %336 {strides = array<i32>} : memref<128x512xbf16, #tpu.memory_space<vmem>>, vector<1x512xbf16>,
    %c0_389 = arith.constant 0 : index
    %c0_390 = arith.constant 0 : index
    %c262 = arith.constant 262 : index
    %338 = vector.load %arg1[%c0_389, %c0_390, %c262] : memref<1x1x896xbf16, #tpu.memory_space<vmem>>, vector<1x1x512xbf16>
    %339 = vector.shape_cast %338 : vector<1x1x512xbf16> to vector<1x512xbf16>
    %c112_391 = arith.constant 112 : index
    %c0_392 = arith.constant 0 : index
    %340 = vector.load %arg4[%c112_391, %c0_392] : memref<128x512xbf16, #tpu.memory_space<vmem>>, vector<1x512xbf16>
    tpu.vector_store %arg4[%c112_391, %c0_392], %339 {strides = array<i32>} : memref<128x512xbf16, #tpu.memory_space<vmem>>, vector<1x512xbf16>,
    %c0_393 = arith.constant 0 : index
    %c0_394 = arith.constant 0 : index
    %c263 = arith.constant 263 : index
    %341 = vector.load %arg1[%c0_393, %c0_394, %c263] : memref<1x1x896xbf16, #tpu.memory_space<vmem>>, vector<1x1x512xbf16>
    %342 = vector.shape_cast %341 : vector<1x1x512xbf16> to vector<1x512xbf16>
    %c113_395 = arith.constant 113 : index
    %c0_396 = arith.constant 0 : index
    %343 = vector.load %arg4[%c113_395, %c0_396] : memref<128x512xbf16, #tpu.memory_space<vmem>>, vector<1x512xbf16>
    tpu.vector_store %arg4[%c113_395, %c0_396], %342 {strides = array<i32>} : memref<128x512xbf16, #tpu.memory_space<vmem>>, vector<1x512xbf16>,
    %c0_397 = arith.constant 0 : index
    %c0_398 = arith.constant 0 : index
    %c264 = arith.constant 264 : index
    %344 = vector.load %arg1[%c0_397, %c0_398, %c264] : memref<1x1x896xbf16, #tpu.memory_space<vmem>>, vector<1x1x512xbf16>
    %345 = vector.shape_cast %344 : vector<1x1x512xbf16> to vector<1x512xbf16>
    %c114_399 = arith.constant 114 : index
    %c0_400 = arith.constant 0 : index
    %346 = vector.load %arg4[%c114_399, %c0_400] : memref<128x512xbf16, #tpu.memory_space<vmem>>, vector<1x512xbf16>
    tpu.vector_store %arg4[%c114_399, %c0_400], %345 {strides = array<i32>} : memref<128x512xbf16, #tpu.memory_space<vmem>>, vector<1x512xbf16>,
    %c0_401 = arith.constant 0 : index
    %c0_402 = arith.constant 0 : index
    %c265 = arith.constant 265 : index
    %347 = vector.load %arg1[%c0_401, %c0_402, %c265] : memref<1x1x896xbf16, #tpu.memory_space<vmem>>, vector<1x1x512xbf16>
    %348 = vector.shape_cast %347 : vector<1x1x512xbf16> to vector<1x512xbf16>
    %c115 = arith.constant 115 : index
    %c0_403 = arith.constant 0 : index
    %349 = vector.load %arg4[%c115, %c0_403] : memref<128x512xbf16, #tpu.memory_space<vmem>>, vector<1x512xbf16>
    tpu.vector_store %arg4[%c115, %c0_403], %348 {strides = array<i32>} : memref<128x512xbf16, #tpu.memory_space<vmem>>, vector<1x512xbf16>,
    %c0_404 = arith.constant 0 : index
    %c0_405 = arith.constant 0 : index
    %c266 = arith.constant 266 : index
    %350 = vector.load %arg1[%c0_404, %c0_405, %c266] : memref<1x1x896xbf16, #tpu.memory_space<vmem>>, vector<1x1x512xbf16>
    %351 = vector.shape_cast %350 : vector<1x1x512xbf16> to vector<1x512xbf16>
    %c116 = arith.constant 116 : index
    %c0_406 = arith.constant 0 : index
    %352 = vector.load %arg4[%c116, %c0_406] : memref<128x512xbf16, #tpu.memory_space<vmem>>, vector<1x512xbf16>
    tpu.vector_store %arg4[%c116, %c0_406], %351 {strides = array<i32>} : memref<128x512xbf16, #tpu.memory_space<vmem>>, vector<1x512xbf16>,
    %c0_407 = arith.constant 0 : index
    %c0_408 = arith.constant 0 : index
    %c267 = arith.constant 267 : index
    %353 = vector.load %arg1[%c0_407, %c0_408, %c267] : memref<1x1x896xbf16, #tpu.memory_space<vmem>>, vector<1x1x512xbf16>
    %354 = vector.shape_cast %353 : vector<1x1x512xbf16> to vector<1x512xbf16>
    %c117 = arith.constant 117 : index
    %c0_409 = arith.constant 0 : index
    %355 = vector.load %arg4[%c117, %c0_409] : memref<128x512xbf16, #tpu.memory_space<vmem>>, vector<1x512xbf16>
    tpu.vector_store %arg4[%c117, %c0_409], %354 {strides = array<i32>} : memref<128x512xbf16, #tpu.memory_space<vmem>>, vector<1x512xbf16>,
    %c0_410 = arith.constant 0 : index
    %c0_411 = arith.constant 0 : index
    %c268 = arith.constant 268 : index
    %356 = vector.load %arg1[%c0_410, %c0_411, %c268] : memref<1x1x896xbf16, #tpu.memory_space<vmem>>, vector<1x1x512xbf16>
    %357 = vector.shape_cast %356 : vector<1x1x512xbf16> to vector<1x512xbf16>
    %c118 = arith.constant 118 : index
    %c0_412 = arith.constant 0 : index
    %358 = vector.load %arg4[%c118, %c0_412] : memref<128x512xbf16, #tpu.memory_space<vmem>>, vector<1x512xbf16>
    tpu.vector_store %arg4[%c118, %c0_412], %357 {strides = array<i32>} : memref<128x512xbf16, #tpu.memory_space<vmem>>, vector<1x512xbf16>,
    %c0_413 = arith.constant 0 : index
    %c0_414 = arith.constant 0 : index
    %c269 = arith.constant 269 : index
    %359 = vector.load %arg1[%c0_413, %c0_414, %c269] : memref<1x1x896xbf16, #tpu.memory_space<vmem>>, vector<1x1x512xbf16>
    %360 = vector.shape_cast %359 : vector<1x1x512xbf16> to vector<1x512xbf16>
    %c119 = arith.constant 119 : index
    %c0_415 = arith.constant 0 : index
    %361 = vector.load %arg4[%c119, %c0_415] : memref<128x512xbf16, #tpu.memory_space<vmem>>, vector<1x512xbf16>
    tpu.vector_store %arg4[%c119, %c0_415], %360 {strides = array<i32>} : memref<128x512xbf16, #tpu.memory_space<vmem>>, vector<1x512xbf16>,
    %c0_416 = arith.constant 0 : index
    %c0_417 = arith.constant 0 : index
    %c270 = arith.constant 270 : index
    %362 = vector.load %arg1[%c0_416, %c0_417, %c270] : memref<1x1x896xbf16, #tpu.memory_space<vmem>>, vector<1x1x512xbf16>
    %363 = vector.shape_cast %362 : vector<1x1x512xbf16> to vector<1x512xbf16>
    %c120 = arith.constant 120 : index
    %c0_418 = arith.constant 0 : index
    %364 = vector.load %arg4[%c120, %c0_418] : memref<128x512xbf16, #tpu.memory_space<vmem>>, vector<1x512xbf16>
    tpu.vector_store %arg4[%c120, %c0_418], %363 {strides = array<i32>} : memref<128x512xbf16, #tpu.memory_space<vmem>>, vector<1x512xbf16>,
    %c0_419 = arith.constant 0 : index
    %c0_420 = arith.constant 0 : index
    %365 = vector.load %arg2[%c0_419, %c0_420] : memref<48x128xbf16, #tpu.memory_space<vmem>>, vector<48x128xbf16>
    %c0_421 = arith.constant 0 : index
    %c0_422 = arith.constant 0 : index
    %366 = vector.load %arg4[%c0_421, %c0_422] : memref<128x512xbf16, #tpu.memory_space<vmem>>, vector<128x512xbf16>
    %cst_423 = arith.constant dense<0.000000e+00> : vector<48x512xf32>
    %367 = tpu.matmul %365, %366, %cst_423 {dimension_numbers = #tpu.dot_dimension_numbers<[1], [0], [0], [1], [0, 0, 1, 1], [], []>} : vector<48x128xbf16>, vector<128x512xbf16>, vector<48x512xf32> -> vector<48x512xf32>
    %c0_424 = arith.constant 0 : index
    %c0_425 = arith.constant 0 : index
    %c0_426 = arith.constant 0 : index
    %368 = vector.load %arg3[%c0_424, %c0_425, %c0_426] : memref<1x48x512xf32, #tpu.memory_space<vmem>>, vector<1x48x512xf32>
    %369 = vector.shape_cast %368 : vector<1x48x512xf32> to vector<48x512xf32>
    %370 = vector.shape_cast %367 : vector<48x512xf32> to vector<1x48x512xf32>
    tpu.vector_store %arg3[%c0_424, %c0_425, %c0_426], %370 {strides = array<i32>} : memref<1x48x512xf32, #tpu.memory_space<vmem>>, vector<1x48x512xf32>,
    return
  }
  func.func @transform_0(%arg0: i32) -> (i32, i32, i32) {
    %c0_i32 = arith.constant 0 : i32
    %c0_i32_0 = arith.constant 0 : i32
    %c0_i32_1 = arith.constant 0 : i32
    return %arg0, %c0_i32, %c0_i32_0 : i32, i32, i32
  }
  func.func @transform_1(%arg0: i32) -> (i32, i32) {
    %c0_i32 = arith.constant 0 : i32
    %c0_i32_0 = arith.constant 0 : i32
    %c0_i32_1 = arith.constant 0 : i32
    return %c0_i32, %c0_i32_0 : i32, i32
  }
  func.func @transform_2(%arg0: i32) -> (i32, i32, i32) {
    %c0_i32 = arith.constant 0 : i32
    %c0_i32_0 = arith.constant 0 : i32
    %c0_i32_1 = arith.constant 0 : i32
    return %arg0, %c0_i32, %c0_i32_0 : i32, i32, i32
  }
}

</mosaic_0001>

<llo_original>
// kernel: lm_forward.1
$region0: #{lm_forward.1}
  #allocation0 [shape = 'u32[]', space=smem, size = 0x4, offset = 0x4, fixed_abs, tag = 'smem constant byte address 0x4 - core index']
  #allocation1 [shape = 'u32[72,128]{1,0:T(1,128)}', space=vmem, size = 0x9000, scoped, tag = 'internal scratch']
  #allocation2 [shape = 'bf16[128,512]{1,0:T(8,128)(2,1)}', space=vmem, size = 0x20000, scoped, tag = 'scratch operand']
  %s0 = inlined_call_operand.vmem [shape: bf16[2,1,896], index: 0, kind: input, shape index: {}]
  %s1 = inlined_call_operand.vmem [shape: bf16[48,128], index: 1, kind: input, shape index: {}]
  %s2 = inlined_call_operand.vmem [shape: f32[2,48,512], index: 2, kind: output, shape index: {}]
  %s3 = sld [smem:[#allocation0]]
  $region41: #{lm_forward.1} parent=0
    _
  %s5 = ssub.s32 1, %s3
  %s6 = scalar_select 0, %s5, %s3
  loop: start=0, step=1, limit=4
  $region2: #{lm_forward.1} parent=0 // loop_pre_header
    _
  $region3: #{lm_forward.1} parent=0 // loop_header
    %s8 = sphi 0, %s12
    %p9 = scmp.ge.s32.totalorder %s8, 4
    %s18 = sphi 0, %s20
    %s21 = sphi 0, %s18
    %s22 = sphi 0, %s21
    %s38 = sphi 0, %s22
    %s42 = sphi 0, %s42
    %s44 = sphi 0, %s42
    %s45 = sphi 0, %s44
    %s59 = sphi 0, %s45
    %s65 = sphi 0, %s67
    %s68 = sphi 0, %s65
    %s69 = sphi 0, %s68
    %s85 = sphi 0, %s69
  $region4: #{lm_forward.1} parent=0 // loop_header_branch
    %11 = sbr.rel (%p9) target = $region8
  $region5: #{lm_forward.1} parent=0 // loop_body
    %s13 = ssub.s32 %s8, 1
    %s14 = ssub.s32 %s8, 2
    %s15 = sadd.s32 %s8, 1
    %s16 = ssub.s32 %s8, %s15
    %p17 = scmp.eq.s32.totalorder %s16, 0
    %s19 = sadd.s32 %s18, 1
    %s20 = scalar_select %p17, %s18, %s19
    %p23 = pneg %p17
    %p24 = scmp.eq.s32.totalorder %s8, 1
    %p25 = por %p23, %p24
    %p26 = scmp.ne.s32.totalorder %s18, %s21
    %p27 = scmp.eq.s32.totalorder %s8, 0
    %p28 = por %p26, %p27
    %p29 = scmp.ne.s32.totalorder %s18, %s21
    %p30 = scmp.eq.s32.totalorder %s13, 1
    %p31 = por %p29, %p30
    %p32 = scmp.ne.s32.totalorder %s21, %s22
    %p33 = scmp.eq.s32.totalorder %s13, 0
    %p34 = por %p32, %p33
    %p35 = scmp.ne.s32.totalorder %s21, %s22
    %p36 = scmp.eq.s32.totalorder %s14, 1
    %p37 = por %p35, %p36
    %p39 = scmp.ne.s32.totalorder %s22, %s38
    %p40 = scmp.eq.s32.totalorder %s14, 0
    %p41 = por %p39, %p40
    %s43 = sadd.s32 %s42, 1
    %p46 = scmp.eq.s32.totalorder %s8, 1
    %p47 = scmp.ne.s32.totalorder %s42, %s44
    %p48 = scmp.eq.s32.totalorder %s8, 0
    %p49 = por %p47, %p48
    %p50 = scmp.ne.s32.totalorder %s42, %s44
    %p51 = scmp.eq.s32.totalorder %s13, 1
    %p52 = por %p50, %p51
    %p53 = scmp.ne.s32.totalorder %s44, %s45
    %p54 = scmp.eq.s32.totalorder %s13, 0
    %p55 = por %p53, %p54
    %p56 = scmp.ne.s32.totalorder %s44, %s45
    %p57 = scmp.eq.s32.totalorder %s14, 1
    %p58 = por %p56, %p57
    %p60 = scmp.ne.s32.totalorder %s45, %s59
    %p61 = scmp.eq.s32.totalorder %s14, 0
    %p62 = por %p60, %p61
    %s63 = ssub.s32 %s8, %s15
    %p64 = scmp.eq.s32.totalorder %s63, 0
    %s66 = sadd.s32 %s65, 1
    %s67 = scalar_select %p64, %s65, %s66
    %p70 = pneg %p64
    %p71 = scmp.eq.s32.totalorder %s8, 1
    %p72 = por %p70, %p71
    %p73 = scmp.ne.s32.totalorder %s65, %s68
    %p74 = scmp.eq.s32.totalorder %s8, 0
    %p75 = por %p73, %p74
    %p76 = scmp.ne.s32.totalorder %s65, %s68
    %p77 = scmp.eq.s32.totalorder %s13, 1
    %p78 = por %p76, %p77
    %p79 = scmp.ne.s32.totalorder %s68, %s69
    %p80 = scmp.eq.s32.totalorder %s13, 0
    %p81 = por %p79, %p80
    %p82 = scmp.ne.s32.totalorder %s68, %s69
    %p83 = scmp.eq.s32.totalorder %s14, 1
    %p84 = por %p82, %p83
    %p86 = scmp.ne.s32.totalorder %s69, %s85
    %p87 = scmp.eq.s32.totalorder %s14, 0
    %p88 = por %p86, %p87
    %p89 = scmp.le.s32.totalorder 1, %s8
    %p90 = scmp.lt.s32.totalorder %s8, 3
    %p91 = pnand %p89, %p90
    %p92 = pneg %p91
    // Predicated region
    $region9: #{lm_forward.1} parent=5 // pred_check
      _
    $region10: #{lm_forward.1} parent=5 // pred_check_branch
      %94 = sbr.rel (%p91) target = $region12
    $region11: #{lm_forward.1} parent=5 // pred_region
      %s95 = ssub.s32 %s8, 1
      // Predicated region
      $region13: #{lm_forward.1} parent=11 // pred_check
        %p96 = pneg %p55
      $region14: #{lm_forward.1} parent=11 // pred_check_branch
        %98 = sbr.rel (%p96) target = $region16
      $region15: #{lm_forward.1} parent=11 // pred_region
        _
      $region16: #{lm_forward.1} parent=11 // pred_fallthru
        _
    $region12: #{lm_forward.1} parent=5 // pred_fallthru
      _
    %p99 = scmp.lt.s32.totalorder %s8, 2
    // Predicated region
    $region17: #{lm_forward.1} parent=5 // pred_check
      %p100 = pneg %p99
    $region18: #{lm_forward.1} parent=5 // pred_check_branch
      %102 = sbr.rel (%p100) target = $region20
    $region19: #{lm_forward.1} parent=5 // pred_region
      // Predicated region
      $region21: #{lm_forward.1} parent=19 // pred_check
        %p103 = pneg %p28
      $region22: #{lm_forward.1} parent=19 // pred_check_branch
        %105 = sbr.rel (%p103) target = $region24
      $region23: #{lm_forward.1} parent=19 // pred_region
        %p106 = scmp.lt.s32.totalorder %s8, 1
        %s107 = scalar_select %p106, %s8, 1
        %s108 = smul.addr %s107, 7
        %s109 = scalar_lea.vmem %s0, %s108
      $region24: #{lm_forward.1} parent=19 // pred_fallthru
        _
    $region20: #{lm_forward.1} parent=5 // pred_fallthru
      _
    %p110 = scmp.le.s32.totalorder 1, %s8
    %p111 = scmp.lt.s32.totalorder %s8, 3
    %p112 = pnand %p110, %p111
    %p113 = pneg %p112
    // Predicated region
    $region25: #{lm_forward.1} parent=5 // pred_check
      _
    $region26: #{lm_forward.1} parent=5 // pred_check_branch
      %115 = sbr.rel (%p112) target = $region28
    $region27: #{lm_forward.1} parent=5 // pred_region
      %s116 = ssub.s32 %s8, 1
      %p117 = scmp.lt.s32.totalorder %s13, 1
      %s118 = scalar_select %p117, %s13, 1
      %s119 = smul.addr %s118, 7
      %s120 = scalar_lea.vmem %s0, %s119
      %p121 = pneg %p34
      %p122 = pneg %p31
      %p123 = pneg %p55
      %p124 = pneg %p52
      %p125 = pneg %p81
      %p126 = pneg %p78
      %p127 = scmp.lt.s32.totalorder %s13, 1
      %s128 = scalar_select %p127, %s13, 1
      %s129 = smul.addr %s128, 24
      %s130 = smul.addr %s129, 8
      %s131 = scalar_lea.vmem %s2, %s130
      %p132 = scmp.lt.s32.totalorder %s13, 1
      %s133 = scalar_select %p132, %s13, 1
      %s134 = smul.addr %s133, 7
      %s135 = scalar_lea.vmem %s0, %s134
      %p136 = scmp.lt.s32.totalorder %s13, 1
      %s137 = scalar_select %p136, %s13, 1
      %s138 = smul.addr %s137, 24
      %s139 = smul.addr %s138, 8
      %s140 = scalar_lea.vmem %s2, %s139
      %vm142 = vcmask 1043456
      %vm143 = vsmask.f32 7938
      %vm144 = vmand %vm142, %vm143
      %vm145 = vcmask 1047556
      %vm146 = vsmask.f32 7954
      %vm147 = vmand %vm145, %vm146
      %vm148 = vmor %vm147, %vm144
      %v149 = vld [vmem:[#allocation2 + $0xf0] sm:$0xff]
      %v150 = vsel %vm148, 0, %v149
      %151 = vst [vmem:[#allocation2 + $0xf0] sm:$0xff] %v150
      %v152 = vld [vmem:[#allocation2 + $0xf8] sm:$0xff]
      %v153 = vsel %vm148, 0, %v152
      %154 = vst [vmem:[#allocation2 + $0xf8] sm:$0xff] %v153
      %v155 = vld [vmem:[%s135] sm:$0xf]
      %157 = vst [vmem:[#allocation1] ss:$4 sm:$0xff] %v155
      %v158 = vld [vmem:[#allocation1] sm:$0xff]
      %v159 = vld [vmem:[#allocation1 + $0x8] sm:$0xff]
      %vm162 = vcmask 1040384
      %vm163 = vsmask.f32 256
      %vm164 = vmand %vm162, %vm163
      %vm165 = vcmask 1044484
      %vm166 = vsmask.f32 4352
      %vm167 = vmand %vm165, %vm166
      %vm168 = vmor %vm167, %vm164
      %v169 = vld [vmem:[#allocation2] sm:$0x11]
      %v170 = vsel %vm168, %v158, %v169
      %171 = vst [vmem:[#allocation2] sm:$0x11] %v170
      %v172 = vld [vmem:[#allocation2 + $0x8] sm:$0x11]
      %v173 = vsel %vm168, %v159, %v172
      %174 = vst [vmem:[#allocation2 + $0x8] sm:$0x11] %v173
      %v175 = vld [vmem:[%s135] sm:$0x1f]
      %177 = vst [vmem:[#allocation1] ss:$4 sm:$0xff] %v175
      %v178 = vld [vmem:[#allocation1] sm:$0xff]
      %v179 = vld [vmem:[#allocation1 + $0x8] sm:$0xff]
      %v180 = vld [vmem:[#allocation1 + $0x10] sm:$0xff]
      %v181 = vshll.u32 %v178, 16
      %v183 = vshll.u32 %v179, 16
      %v185 = vshll.u32 %v180, 16
      %187 = vrot.lane.b32.xlu0 %v181, 127
      %v188 = vpop.permute.xlu0 %187
      %189 = vrot.lane.b32.xlu0 %v183, 127
      %v190 = vpop.permute.xlu0 %189
      %191 = vrot.lane.b32.xlu0 %v185, 127
      %v192 = vpop.permute.xlu0 %191
      %v193 = vrot.slane %v188, 4
      %v194 = vrot.slane %v190, 4
      %v195 = vrot.slane %v192, 4
      %v196 = vsel %vm142, %v193, %v194
      %vm197 = vcmask 1039360
      %v198 = vsel %vm197, %v188, %v196
      %v199 = vsel %vm142, %v194, %v195
      %v200 = vsel %vm197, %v190, %v199
      %vm203 = vmand %vm162, %vm143
      %vm204 = vmand %vm165, %vm146
      %vm205 = vmor %vm204, %vm203
      %v206 = vld [vmem:[#allocation2] sm:$0x11]
      %v207 = vsel %vm205, %v198, %v206
      %208 = vst [vmem:[#allocation2] sm:$0x11] %v207
      %v209 = vld [vmem:[#allocation2 + $0x8] sm:$0x11]
      %v210 = vsel %vm205, %v200, %v209
      %211 = vst [vmem:[#allocation2 + $0x8] sm:$0x11] %v210
      %v212 = vld [vmem:[%s135] sm:$0x1f]
      %s214 = scalar_lea.vmem [#allocation1], 1
      %215 = vst [vmem:[%s214] ss:$4 sm:$0xff] %v212
      %v216 = vld [vmem:[#allocation1] sm:$0xff]
      %v218 = vld [vmem:[#allocation1 + $0x8] sm:$0xff]
      %v220 = vld [vmem:[#allocation1 + $0x10] sm:$0xff]
      %222 = vrot.lane.b32.xlu0 %v216, 126
      %v223 = vpop.permute.xlu0 %222
      %224 = vrot.lane.b32.xlu0 %v218, 126
      %v225 = vpop.permute.xlu0 %224
      %226 = vrot.lane.b32.xlu0 %v220, 126
      %v227 = vpop.permute.xlu0 %226
      %v228 = vrot.slane %v223, 4
      %v229 = vrot.slane %v225, 4
      %v230 = vrot.slane %v227, 4
      %v231 = vsel %vm142, %v228, %v229
      %vm232 = vcmask 1031168
      %v233 = vsel %vm232, %v223, %v231
      %v234 = vsel %vm142, %v229, %v230
      %v235 = vsel %vm232, %v225, %v234
      %vm238 = vcmask 1041409
      %vm239 = vsmask.f32 1280
      %vm240 = vmand %vm238, %vm239
      %vm241 = vcmask 1045509
      %vm242 = vsmask.f32 5376
      %vm243 = vmand %vm241, %vm242
      %vm244 = vmor %vm243, %vm240
      %v245 = vld [vmem:[#allocation2] sm:$0x22]
      %v246 = vsel %vm244, %v233, %v245
      %247 = vst [vmem:[#allocation2] sm:$0x22] %v246
      %v248 = vld [vmem:[#allocation2 + $0x8] sm:$0x22]
      %v249 = vsel %vm244, %v235, %v248
      %250 = vst [vmem:[#allocation2 + $0x8] sm:$0x22] %v249
      %v251 = vld [vmem:[%s135] sm:$0x1f]
      %253 = vst [vmem:[#allocation1] ss:$4 sm:$0xff] %v251
      %v254 = vld [vmem:[#allocation1] sm:$0xff]
      %v255 = vld [vmem:[#allocation1 + $0x8] sm:$0xff]
      %v256 = vld [vmem:[#allocation1 + $0x10] sm:$0xff]
      %v257 = vshll.u32 %v254, 16
      %v259 = vrot.slane %v257, 7
      %v260 = vshll.u32 %v255, 16
      %v262 = vrot.slane %v260, 7
      %v263 = vshll.u32 %v256, 16
      %v265 = vrot.slane %v263, 7
      %266 = vrot.lane.b32.xlu0 %v259, 125
      %v267 = vpop.permute.xlu0 %266
      %268 = vrot.lane.b32.xlu0 %v262, 125
      %v269 = vpop.permute.xlu0 %268
      %270 = vrot.lane.b32.xlu0 %v265, 125
      %v271 = vpop.permute.xlu0 %270
      %v272 = vrot.slane %v267, 4
      %v273 = vrot.slane %v269, 4
      %v274 = vrot.slane %v271, 4
      %v275 = vsel %vm142, %v272, %v273
      %vm276 = vcmask 1022976
      %v277 = vsel %vm276, %v267, %v275
      %v278 = vsel %vm142, %v273, %v274
      %v279 = vsel %vm276, %v269, %v278
      %vm282 = vsmask.f32 7942
      %vm283 = vmand %vm238, %vm282
      %vm284 = vsmask.f32 7958
      %vm285 = vmand %vm241, %vm284
      %vm286 = vmor %vm285, %vm283
      %v287 = vld [vmem:[#allocation2] sm:$0x22]
      %v288 = vsel %vm286, %v277, %v287
      %289 = vst [vmem:[#allocation2] sm:$0x22] %v288
      %v290 = vld [vmem:[#allocation2 + $0x8] sm:$0x22]
      %v291 = vsel %vm286, %v279, %v290
      %292 = vst [vmem:[#allocation2 + $0x8] sm:$0x22] %v291
      %v293 = vld [vmem:[%s135] sm:$0x1f]
      %s295 = scalar_lea.vmem [#allocation1], 2
      %296 = vst [vmem:[%s295] ss:$4 sm:$0xff] %v293
      %v297 = vld [vmem:[#allocation1] sm:$0xff]
      %v299 = vld [vmem:[#allocation1 + $0x8] sm:$0xff]
      %v301 = vld [vmem:[#allocation1 + $0x10] sm:$0xff]
      %303 = vrot.lane.b32.xlu0 %v297, 124
      %v304 = vpop.permute.xlu0 %303
      %305 = vrot.lane.b32.xlu0 %v299, 124
      %v306 = vpop.permute.xlu0 %305
      %307 = vrot.lane.b32.xlu0 %v301, 124
      %v308 = vpop.permute.xlu0 %307
      %v309 = vrot.slane %v304, 4
      %v310 = vrot.slane %v306, 4
      %v311 = vrot.slane %v308, 4
      %v312 = vsel %vm142, %v309, %v310
      %vm313 = vcmask 1014784
      %v314 = vsel %vm313, %v304, %v312
      %v315 = vsel %vm142, %v310, %v311
      %v316 = vsel %vm313, %v306, %v315
      %vm319 = vcmask 1042434
      %vm320 = vsmask.f32 2304
      %vm321 = vmand %vm319, %vm320
      %vm322 = vcmask 1046534
      %vm323 = vsmask.f32 6400
      %vm324 = vmand %vm322, %vm323
      %vm325 = vmor %vm324, %vm321
      %v326 = vld [vmem:[#allocation2] sm:$0x44]
      %v327 = vsel %vm325, %v314, %v326
      %328 = vst [vmem:[#allocation2] sm:$0x44] %v327
      %v329 = vld [vmem:[#allocation2 + $0x8] sm:$0x44]
      %v330 = vsel %vm325, %v316, %v329
      %331 = vst [vmem:[#allocation2 + $0x8] sm:$0x44] %v330
      %v332 = vld [vmem:[%s135] sm:$0x1f]
      %334 = vst [vmem:[#allocation1] ss:$4 sm:$0xff] %v332
      %v335 = vld [vmem:[#allocation1] sm:$0xff]
      %v336 = vld [vmem:[#allocation1 + $0x8] sm:$0xff]
      %v337 = vld [vmem:[#allocation1 + $0x10] sm:$0xff]
      %v338 = vshll.u32 %v335, 16
      %v340 = vrot.slane %v338, 6
      %v341 = vshll.u32 %v336, 16
      %v343 = vrot.slane %v341, 6
      %v344 = vshll.u32 %v337, 16
      %v346 = vrot.slane %v344, 6
      %347 = vrot.lane.b32.xlu0 %v340, 123
      %v348 = vpop.permute.xlu0 %347
      %349 = vrot.lane.b32.xlu0 %v343, 123
      %v350 = vpop.permute.xlu0 %349
      %351 = vrot.lane.b32.xlu0 %v346, 123
      %v352 = vpop.permute.xlu0 %351
      %v353 = vrot.slane %v348, 4
      %v354 = vrot.slane %v350, 4
      %v355 = vrot.slane %v352, 4
      %v356 = vsel %vm142, %v353, %v354
      %vm357 = vcmask 1006592
      %v358 = vsel %vm357, %v348, %v356
      %v359 = vsel %vm142, %v354, %v355
      %v360 = vsel %vm357, %v350, %v359
      %vm363 = vsmask.f32 7946
      %vm364 = vmand %vm319, %vm363
      %vm365 = vsmask.f32 7962
      %vm366 = vmand %vm322, %vm365
      %vm367 = vmor %vm366, %vm364
      %v368 = vld [vmem:[#allocation2] sm:$0x44]
      %v369 = vsel %vm367, %v358, %v368
      %370 = vst [vmem:[#allocation2] sm:$0x44] %v369
      %v371 = vld [vmem:[#allocation2 + $0x8] sm:$0x44]
      %v372 = vsel %vm367, %v360, %v371
      %373 = vst [vmem:[#allocation2 + $0x8] sm:$0x44] %v372
      %v374 = vld [vmem:[%s135] sm:$0x1f]
      %s376 = scalar_lea.vmem [#allocation1], 3
      %377 = vst [vmem:[%s376] ss:$4 sm:$0xff] %v374
      %v378 = vld [vmem:[#allocation1] sm:$0xff]
      %v380 = vld [vmem:[#allocation1 + $0x8] sm:$0xff]
      %v382 = vld [vmem:[#allocation1 + $0x10] sm:$0xff]
      %384 = vrot.lane.b32.xlu0 %v378, 122
      %v385 = vpop.permute.xlu0 %384
      %386 = vrot.lane.b32.xlu0 %v380, 122
      %v387 = vpop.permute.xlu0 %386
      %388 = vrot.lane.b32.xlu0 %v382, 122
      %v389 = vpop.permute.xlu0 %388
      %v390 = vrot.slane %v385, 4
      %v391 = vrot.slane %v387, 4
      %v392 = vrot.slane %v389, 4
      %v393 = vsel %vm142, %v390, %v391
      %vm394 = vcmask 998400
      %v395 = vsel %vm394, %v385, %v393
      %v396 = vsel %vm142, %v391, %v392
      %v397 = vsel %vm394, %v387, %v396
      %vm400 = vcmask 1043459
      %vm401 = vsmask.f32 3328
      %vm402 = vmand %vm400, %vm401
      %vm403 = vcmask 1047559
      %vm404 = vsmask.f32 7424
      %vm405 = vmand %vm403, %vm404
      %vm406 = vmor %vm405, %vm402
      %v407 = vld [vmem:[#allocation2] sm:$0x88]
      %v408 = vsel %vm406, %v395, %v407
      %409 = vst [vmem:[#allocation2] sm:$0x88] %v408
      %v410 = vld [vmem:[#allocation2 + $0x8] sm:$0x88]
      %v411 = vsel %vm406, %v397, %v410
      %412 = vst [vmem:[#allocation2 + $0x8] sm:$0x88] %v411
      %v413 = vld [vmem:[%s135] sm:$0x1f]
      %415 = vst [vmem:[#allocation1] ss:$4 sm:$0xff] %v413
      %v416 = vld [vmem:[#allocation1] sm:$0xff]
      %v417 = vld [vmem:[#allocation1 + $0x8] sm:$0xff]
      %v418 = vld [vmem:[#allocation1 + $0x10] sm:$0xff]
      %v419 = vshll.u32 %v416, 16
      %v421 = vrot.slane %v419, 5
      %v422 = vshll.u32 %v417, 16
      %v424 = vrot.slane %v422, 5
      %v425 = vshll.u32 %v418, 16
      %v427 = vrot.slane %v425, 5
      %428 = vrot.lane.b32.xlu0 %v421, 121
      %v429 = vpop.permute.xlu0 %428
      %430 = vrot.lane.b32.xlu0 %v424, 121
      %v431 = vpop.permute.xlu0 %430
      %432 = vrot.lane.b32.xlu0 %v427, 121
      %v433 = vpop.permute.xlu0 %432
      %v434 = vrot.slane %v429, 4
      %v435 = vrot.slane %v431, 4
      %v436 = vrot.slane %v433, 4
      %v437 = vsel %vm142, %v434, %v435
      %vm438 = vcmask 990208
      %v439 = vsel %vm438, %v429, %v437
      %v440 = vsel %vm142, %v435, %v436
      %v441 = vsel %vm438, %v431, %v440
      %vm444 = vsmask.f32 7950
      %vm445 = vmand %vm400, %vm444
      %vm446 = vsmask.f32 7966
      %vm447 = vmand %vm403, %vm446
      %vm448 = vmor %vm447, %vm445
      %v449 = vld [vmem:[#allocation2] sm:$0x88]
      %v450 = vsel %vm448, %v439, %v449
      %451 = vst [vmem:[#allocation2] sm:$0x88] %v450
      %v452 = vld [vmem:[#allocation2 + $0x8] sm:$0x88]
      %v453 = vsel %vm448, %v441, %v452
      %454 = vst [vmem:[#allocation2 + $0x8] sm:$0x88] %v453
      %v455 = vld [vmem:[%s135] sm:$0x1f]
      %457 = vst [vmem:[#allocation1] ss:$4 sm:$0xff] %v455
      %v458 = vld [vmem:[#allocation1] sm:$0xff]
      %v460 = vld [vmem:[#allocation1 + $0x8] sm:$0xff]
      %v462 = vld [vmem:[#allocation1 + $0x10] sm:$0xff]
      %464 = vrot.lane.b32.xlu0 %v458, 120
      %v465 = vpop.permute.xlu0 %464
      %466 = vrot.lane.b32.xlu0 %v460, 120
      %v467 = vpop.permute.xlu0 %466
      %468 = vrot.lane.b32.xlu0 %v462, 120
      %v469 = vpop.permute.xlu0 %468
      %v470 = vrot.slane %v465, 4
      %v471 = vrot.slane %v467, 4
      %v472 = vrot.slane %v469, 4
      %v473 = vsel %vm142, %v470, %v471
      %vm474 = vcmask 982016
      %v475 = vsel %vm474, %v465, %v473
      %v476 = vsel %vm142, %v471, %v472
      %v477 = vsel %vm474, %v467, %v476
      %v480 = vld [vmem:[#allocation2 + $0x10] sm:$0x11]
      %v481 = vsel %vm168, %v475, %v480
      %482 = vst [vmem:[#allocation2 + $0x10] sm:$0x11] %v481
      %v483 = vld [vmem:[#allocation2 + $0x18] sm:$0x11]
      %v484 = vsel %vm168, %v477, %v483
      %485 = vst [vmem:[#allocation2 + $0x18] sm:$0x11] %v484
      %v486 = vld [vmem:[%s135] sm:$0x1f]
      %488 = vst [vmem:[#allocation1] ss:$4 sm:$0xff] %v486
      %v489 = vld [vmem:[#allocation1] sm:$0xff]
      %v490 = vld [vmem:[#allocation1 + $0x8] sm:$0xff]
      %v491 = vld [vmem:[#allocation1 + $0x10] sm:$0xff]
      %v492 = vshll.u32 %v489, 16
      %v494 = vshll.u32 %v490, 16
      %v496 = vshll.u32 %v491, 16
      %498 = vrot.lane.b32.xlu0 %v492, 119
      %v499 = vpop.permute.xlu0 %498
      %500 = vrot.lane.b32.xlu0 %v494, 119
      %v501 = vpop.permute.xlu0 %500
      %502 = vrot.lane.b32.xlu0 %v496, 119
      %v503 = vpop.permute.xlu0 %502
      %v504 = vrot.slane %v499, 4
      %v505 = vrot.slane %v501, 4
      %v506 = vrot.slane %v503, 4
      %v507 = vsel %vm142, %v504, %v505
      %vm508 = vcmask 973824
      %v509 = vsel %vm508, %v499, %v507
      %v510 = vsel %vm142, %v505, %v506
      %v511 = vsel %vm508, %v501, %v510
      %v514 = vld [vmem:[#allocation2 + $0x10] sm:$0x11]
      %v515 = vsel %vm205, %v509, %v514
      %516 = vst [vmem:[#allocation2 + $0x10] sm:$0x11] %v515
      %v517 = vld [vmem:[#allocation2 + $0x18] sm:$0x11]
      %v518 = vsel %vm205, %v511, %v517
      %519 = vst [vmem:[#allocation2 + $0x18] sm:$0x11] %v518
      %v520 = vld [vmem:[%s135] sm:$0x1f]
      %s522 = scalar_lea.vmem [#allocation1], 1
      %523 = vst [vmem:[%s522] ss:$4 sm:$0xff] %v520
      %v524 = vld [vmem:[#allocation1] sm:$0xff]
      %v526 = vld [vmem:[#allocation1 + $0x8] sm:$0xff]
      %v528 = vld [vmem:[#allocation1 + $0x10] sm:$0xff]
      %530 = vrot.lane.b32.xlu0 %v524, 118
      %v531 = vpop.permute.xlu0 %530
      %532 = vrot.lane.b32.xlu0 %v526, 118
      %v533 = vpop.permute.xlu0 %532
      %534 = vrot.lane.b32.xlu0 %v528, 118
      %v535 = vpop.permute.xlu0 %534
      %v536 = vrot.slane %v531, 4
      %v537 = vrot.slane %v533, 4
      %v538 = vrot.slane %v535, 4
      %v539 = vsel %vm142, %v536, %v537
      %vm540 = vcmask 965632
      %v541 = vsel %vm540, %v531, %v539
      %v542 = vsel %vm142, %v537, %v538
      %v543 = vsel %vm540, %v533, %v542
      %v546 = vld [vmem:[#allocation2 + $0x10] sm:$0x22]
      %v547 = vsel %vm244, %v541, %v546
      %548 = vst [vmem:[#allocation2 + $0x10] sm:$0x22] %v547
      %v549 = vld [vmem:[#allocation2 + $0x18] sm:$0x22]
      %v550 = vsel %vm244, %v543, %v549
      %551 = vst [vmem:[#allocation2 + $0x18] sm:$0x22] %v550
      %v552 = vld [vmem:[%s135] sm:$0x1f]
      %554 = vst [vmem:[#allocation1] ss:$4 sm:$0xff] %v552
      %v555 = vld [vmem:[#allocation1] sm:$0xff]
      %v556 = vld [vmem:[#allocation1 + $0x8] sm:$0xff]
      %v557 = vld [vmem:[#allocation1 + $0x10] sm:$0xff]
      %v558 = vshll.u32 %v555, 16
      %v560 = vrot.slane %v558, 7
      %v561 = vshll.u32 %v556, 16
      %v563 = vrot.slane %v561, 7
      %v564 = vshll.u32 %v557, 16
      %v566 = vrot.slane %v564, 7
      %567 = vrot.lane.b32.xlu0 %v560, 102
      %v568 = vpop.permute.xlu0 %567
      %569 = vrot.lane.b32.xlu0 %v563, 102
      %v570 = vpop.permute.xlu0 %569
      %571 = vrot.lane.b32.xlu0 %v566, 102
      %v572 = vpop.permute.xlu0 %571
      %v573 = vrot.slane %v568, 4
      %v574 = vrot.slane %v570, 4
      %v575 = vrot.slane %v572, 4
      %v576 = vsel %vm142, %v573, %v574
      %vm577 = vcmask 834560
      %v578 = vsel %vm577, %v568, %v576
      %v579 = vsel %vm142, %v574, %v575
      %v580 = vsel %vm577, %v570, %v579
      %v583 = vld [vmem:[#allocation2 + $0x10] sm:$0x22]
      %v584 = vsel %vm286, %v578, %v583
      %585 = vst [vmem:[#allocation2 + $0x10] sm:$0x22] %v584
      %v586 = vld [vmem:[#allocation2 + $0x18] sm:$0x22]
      %v587 = vsel %vm286, %v580, %v586
      %588 = vst [vmem:[#allocation2 + $0x18] sm:$0x22] %v587
      %v589 = vld [vmem:[%s135] sm:$0x1f]
      %s591 = scalar_lea.vmem [#allocation1], 2
      %592 = vst [vmem:[%s591] ss:$4 sm:$0xff] %v589
      %v593 = vld [vmem:[#allocation1] sm:$0xff]
      %v595 = vld [vmem:[#allocation1 + $0x8] sm:$0xff]
      %v597 = vld [vmem:[#allocation1 + $0x10] sm:$0xff]
      %599 = vrot.lane.b32.xlu0 %v593, 101
      %v600 = vpop.permute.xlu0 %599
      %601 = vrot.lane.b32.xlu0 %v595, 101
      %v602 = vpop.permute.xlu0 %601
      %603 = vrot.lane.b32.xlu0 %v597, 101
      %v604 = vpop.permute.xlu0 %603
      %v605 = vrot.slane %v600, 4
      %v606 = vrot.slane %v602, 4
      %v607 = vrot.slane %v604, 4
      %v608 = vsel %vm142, %v605, %v606
      %vm609 = vcmask 826368
      %v610 = vsel %vm609, %v600, %v608
      %v611 = vsel %vm142, %v606, %v607
      %v612 = vsel %vm609, %v602, %v611
      %v615 = vld [vmem:[#allocation2 + $0x10] sm:$0x44]
      %v616 = vsel %vm325, %v610, %v615
      %617 = vst [vmem:[#allocation2 + $0x10] sm:$0x44] %v616
      %v618 = vld [vmem:[#allocation2 + $0x18] sm:$0x44]
      %v619 = vsel %vm325, %v612, %v618
      %620 = vst [vmem:[#allocation2 + $0x18] sm:$0x44] %v619
      %v621 = vld [vmem:[%s135] sm:$0x1f]
      %623 = vst [vmem:[#allocation1] ss:$4 sm:$0xff] %v621
      %v624 = vld [vmem:[#allocation1] sm:$0xff]
      %v625 = vld [vmem:[#allocation1 + $0x8] sm:$0xff]
      %v626 = vld [vmem:[#allocation1 + $0x10] sm:$0xff]
      %v627 = vshll.u32 %v624, 16
      %v629 = vrot.slane %v627, 6
      %v630 = vshll.u32 %v625, 16
      %v632 = vrot.slane %v630, 6
      %v633 = vshll.u32 %v626, 16
      %v635 = vrot.slane %v633, 6
      %636 = vrot.lane.b32.xlu0 %v629, 100
      %v637 = vpop.permute.xlu0 %636
      %638 = vrot.lane.b32.xlu0 %v632, 100
      %v639 = vpop.permute.xlu0 %638
      %640 = vrot.lane.b32.xlu0 %v635, 100
      %v641 = vpop.permute.xlu0 %640
      %v642 = vrot.slane %v637, 4
      %v643 = vrot.slane %v639, 4
      %v644 = vrot.slane %v641, 4
      %v645 = vsel %vm142, %v642, %v643
      %vm646 = vcmask 818176
      %v647 = vsel %vm646, %v637, %v645
      %v648 = vsel %vm142, %v643, %v644
      %v649 = vsel %vm646, %v639, %v648
      %v652 = vld [vmem:[#allocation2 + $0x10] sm:$0x44]
      %v653 = vsel %vm367, %v647, %v652
      %654 = vst [vmem:[#allocation2 + $0x10] sm:$0x44] %v653
      %v655 = vld [vmem:[#allocation2 + $0x18] sm:$0x44]
      %v656 = vsel %vm367, %v649, %v655
      %657 = vst [vmem:[#allocation2 + $0x18] sm:$0x44] %v656
      %v658 = vld [vmem:[%s135] sm:$0x1f]
      %s660 = scalar_lea.vmem [#allocation1], 3
      %661 = vst [vmem:[%s660] ss:$4 sm:$0xff] %v658
      %v662 = vld [vmem:[#allocation1] sm:$0xff]
      %v664 = vld [vmem:[#allocation1 + $0x8] sm:$0xff]
      %v666 = vld [vmem:[#allocation1 + $0x10] sm:$0xff]
      %668 = vrot.lane.b32.xlu0 %v662, 99
      %v669 = vpop.permute.xlu0 %668
      %670 = vrot.lane.b32.xlu0 %v664, 99
      %v671 = vpop.permute.xlu0 %670
      %672 = vrot.lane.b32.xlu0 %v666, 99
      %v673 = vpop.permute.xlu0 %672
      %v674 = vrot.slane %v669, 4
      %v675 = vrot.slane %v671, 4
      %v676 = vrot.slane %v673, 4
      %v677 = vsel %vm142, %v674, %v675
      %vm678 = vcmask 809984
      %v679 = vsel %vm678, %v669, %v677
      %v680 = vsel %vm142, %v675, %v676
      %v681 = vsel %vm678, %v671, %v680
      %v684 = vld [vmem:[#allocation2 + $0x10] sm:$0x88]
      %v685 = vsel %vm406, %v679, %v684
      %686 = vst [vmem:[#allocation2 + $0x10] sm:$0x88] %v685
      %v687 = vld [vmem:[#allocation2 + $0x18] sm:$0x88]
      %v688 = vsel %vm406, %v681, %v687
      %689 = vst [vmem:[#allocation2 + $0x18] sm:$0x88] %v688
      %v690 = vld [vmem:[%s135] sm:$0x1f]
      %692 = vst [vmem:[#allocation1] ss:$4 sm:$0xff] %v690
      %v693 = vld [vmem:[#allocation1] sm:$0xff]
      %v694 = vld [vmem:[#allocation1 + $0x8] sm:$0xff]
      %v695 = vld [vmem:[#allocation1 + $0x10] sm:$0xff]
      %v696 = vshll.u32 %v693, 16
      %v698 = vrot.slane %v696, 5
      %v699 = vshll.u32 %v694, 16
      %v701 = vrot.slane %v699, 5
      %v702 = vshll.u32 %v695, 16
      %v704 = vrot.slane %v702, 5
      %705 = vrot.lane.b32.xlu0 %v698, 98
      %v706 = vpop.permute.xlu0 %705
      %707 = vrot.lane.b32.xlu0 %v701, 98
      %v708 = vpop.permute.xlu0 %707
      %709 = vrot.lane.b32.xlu0 %v704, 98
      %v710 = vpop.permute.xlu0 %709
      %v711 = vrot.slane %v706, 4
      %v712 = vrot.slane %v708, 4
      %v713 = vrot.slane %v710, 4
      %v714 = vsel %vm142, %v711, %v712
      %vm715 = vcmask 801792
      %v716 = vsel %vm715, %v706, %v714
      %v717 = vsel %vm142, %v712, %v713
      %v718 = vsel %vm715, %v708, %v717
      %v721 = vld [vmem:[#allocation2 + $0x10] sm:$0x88]
      %v722 = vsel %vm448, %v716, %v721
      %723 = vst [vmem:[#allocation2 + $0x10] sm:$0x88] %v722
      %v724 = vld [vmem:[#allocation2 + $0x18] sm:$0x88]
      %v725 = vsel %vm448, %v718, %v724
      %726 = vst [vmem:[#allocation2 + $0x18] sm:$0x88] %v725
      %v727 = vld [vmem:[%s135] sm:$0x1f]
      %729 = vst [vmem:[#allocation1] ss:$4 sm:$0xff] %v727
      %v730 = vld [vmem:[#allocation1] sm:$0xff]
      %v732 = vld [vmem:[#allocation1 + $0x8] sm:$0xff]
      %v734 = vld [vmem:[#allocation1 + $0x10] sm:$0xff]
      %736 = vrot.lane.b32.xlu0 %v730, 97
      %v737 = vpop.permute.xlu0 %736
      %738 = vrot.lane.b32.xlu0 %v732, 97
      %v739 = vpop.permute.xlu0 %738
      %740 = vrot.lane.b32.xlu0 %v734, 97
      %v741 = vpop.permute.xlu0 %740
      %v742 = vrot.slane %v737, 4
      %v743 = vrot.slane %v739, 4
      %v744 = vrot.slane %v741, 4
      %v745 = vsel %vm142, %v742, %v743
      %vm746 = vcmask 793600
      %v747 = vsel %vm746, %v737, %v745
      %v748 = vsel %vm142, %v743, %v744
      %v749 = vsel %vm746, %v739, %v748
      %v752 = vld [vmem:[#allocation2 + $0x20] sm:$0x11]
      %v753 = vsel %vm168, %v747, %v752
      %754 = vst [vmem:[#allocation2 + $0x20] sm:$0x11] %v753
      %v755 = vld [vmem:[#allocation2 + $0x28] sm:$0x11]
      %v756 = vsel %vm168, %v749, %v755
      %757 = vst [vmem:[#allocation2 + $0x28] sm:$0x11] %v756
      %v758 = vld [vmem:[%s135] sm:$0x1f]
      %760 = vst [vmem:[#allocation1] ss:$4 sm:$0xff] %v758
      %v761 = vld [vmem:[#allocation1] sm:$0xff]
      %v762 = vld [vmem:[#allocation1 + $0x8] sm:$0xff]
      %v763 = vld [vmem:[#allocation1 + $0x10] sm:$0xff]
      %v764 = vshll.u32 %v761, 16
      %v766 = vshll.u32 %v762, 16
      %v768 = vshll.u32 %v763, 16
      %770 = vrot.lane.b32.xlu0 %v764, 96
      %v771 = vpop.permute.xlu0 %770
      %772 = vrot.lane.b32.xlu0 %v766, 96
      %v773 = vpop.permute.xlu0 %772
      %774 = vrot.lane.b32.xlu0 %v768, 96
      %v775 = vpop.permute.xlu0 %774
      %v776 = vrot.slane %v771, 4
      %v777 = vrot.slane %v773, 4
      %v778 = vrot.slane %v775, 4
      %v779 = vsel %vm142, %v776, %v777
      %vm780 = vcmask 785408
      %v781 = vsel %vm780, %v771, %v779
      %v782 = vsel %vm142, %v777, %v778
      %v783 = vsel %vm780, %v773, %v782
      %v786 = vld [vmem:[#allocation2 + $0x20] sm:$0x11]
      %v787 = vsel %vm205, %v781, %v786
      %788 = vst [vmem:[#allocation2 + $0x20] sm:$0x11] %v787
      %v789 = vld [vmem:[#allocation2 + $0x28] sm:$0x11]
      %v790 = vsel %vm205, %v783, %v789
      %791 = vst [vmem:[#allocation2 + $0x28] sm:$0x11] %v790
      %v792 = vld [vmem:[%s135] sm:$0x1f]
      %s794 = scalar_lea.vmem [#allocation1], 1
      %795 = vst [vmem:[%s794] ss:$4 sm:$0xff] %v792
      %v796 = vld [vmem:[#allocation1] sm:$0xff]
      %v798 = vld [vmem:[#allocation1 + $0x8] sm:$0xff]
      %v800 = vld [vmem:[#allocation1 + $0x10] sm:$0xff]
      %802 = vrot.lane.b32.xlu0 %v796, 95
      %v803 = vpop.permute.xlu0 %802
      %804 = vrot.lane.b32.xlu0 %v798, 95
      %v805 = vpop.permute.xlu0 %804
      %806 = vrot.lane.b32.xlu0 %v800, 95
      %v807 = vpop.permute.xlu0 %806
      %v808 = vrot.slane %v803, 4
      %v809 = vrot.slane %v805, 4
      %v810 = vrot.slane %v807, 4
      %v811 = vsel %vm142, %v808, %v809
      %vm812 = vcmask 777216
      %v813 = vsel %vm812, %v803, %v811
      %v814 = vsel %vm142, %v809, %v810
      %v815 = vsel %vm812, %v805, %v814
      %v818 = vld [vmem:[#allocation2 + $0x20] sm:$0x22]
      %v819 = vsel %vm244, %v813, %v818
      %820 = vst [vmem:[#allocation2 + $0x20] sm:$0x22] %v819
      %v821 = vld [vmem:[#allocation2 + $0x28] sm:$0x22]
      %v822 = vsel %vm244, %v815, %v821
      %823 = vst [vmem:[#allocation2 + $0x28] sm:$0x22] %v822
      %v824 = vld [vmem:[%s135] sm:$0x1f]
      %826 = vst [vmem:[#allocation1] ss:$4 sm:$0xff] %v824
      %v827 = vld [vmem:[#allocation1] sm:$0xff]
      %v828 = vld [vmem:[#allocation1 + $0x8] sm:$0xff]
      %v829 = vld [vmem:[#allocation1 + $0x10] sm:$0xff]
      %v830 = vshll.u32 %v827, 16
      %v832 = vrot.slane %v830, 7
      %v833 = vshll.u32 %v828, 16
      %v835 = vrot.slane %v833, 7
      %v836 = vshll.u32 %v829, 16
      %v838 = vrot.slane %v836, 7
      %839 = vrot.lane.b32.xlu0 %v832, 94
      %v840 = vpop.permute.xlu0 %839
      %841 = vrot.lane.b32.xlu0 %v835, 94
      %v842 = vpop.permute.xlu0 %841
      %843 = vrot.lane.b32.xlu0 %v838, 94
      %v844 = vpop.permute.xlu0 %843
      %v845 = vrot.slane %v840, 4
      %v846 = vrot.slane %v842, 4
      %v847 = vrot.slane %v844, 4
      %v848 = vsel %vm142, %v845, %v846
      %vm849 = vcmask 769024
      %v850 = vsel %vm849, %v840, %v848
      %v851 = vsel %vm142, %v846, %v847
      %v852 = vsel %vm849, %v842, %v851
      %v855 = vld [vmem:[#allocation2 + $0x20] sm:$0x22]
      %v856 = vsel %vm286, %v850, %v855
      %857 = vst [vmem:[#allocation2 + $0x20] sm:$0x22] %v856
      %v858 = vld [vmem:[#allocation2 + $0x28] sm:$0x22]
      %v859 = vsel %vm286, %v852, %v858
      %860 = vst [vmem:[#allocation2 + $0x28] sm:$0x22] %v859
      %v861 = vld [vmem:[%s135] sm:$0x1f]
      %s863 = scalar_lea.vmem [#allocation1], 2
      %864 = vst [vmem:[%s863] ss:$4 sm:$0xff] %v861
      %v865 = vld [vmem:[#allocation1] sm:$0xff]
      %v867 = vld [vmem:[#allocation1 + $0x8] sm:$0xff]
      %v869 = vld [vmem:[#allocation1 + $0x10] sm:$0xff]
      %871 = vrot.lane.b32.xlu0 %v865, 93
      %v872 = vpop.permute.xlu0 %871
      %873 = vrot.lane.b32.xlu0 %v867, 93
      %v874 = vpop.permute.xlu0 %873
      %875 = vrot.lane.b32.xlu0 %v869, 93
      %v876 = vpop.permute.xlu0 %875
      %v877 = vrot.slane %v872, 4
      %v878 = vrot.slane %v874, 4
      %v879 = vrot.slane %v876, 4
      %v880 = vsel %vm142, %v877, %v878
      %vm881 = vcmask 760832
      %v882 = vsel %vm881, %v872, %v880
      %v883 = vsel %vm142, %v878, %v879
      %v884 = vsel %vm881, %v874, %v883
      %v887 = vld [vmem:[#allocation2 + $0x20] sm:$0x44]
      %v888 = vsel %vm325, %v882, %v887
      %889 = vst [vmem:[#allocation2 + $0x20] sm:$0x44] %v888
      %v890 = vld [vmem:[#allocation2 + $0x28] sm:$0x44]
      %v891 = vsel %vm325, %v884, %v890
      %892 = vst [vmem:[#allocation2 + $0x28] sm:$0x44] %v891
      %v893 = vld [vmem:[%s135] sm:$0x1f]
      %895 = vst [vmem:[#allocation1] ss:$4 sm:$0xff] %v893
      %v896 = vld [vmem:[#allocation1] sm:$0xff]
      %v897 = vld [vmem:[#allocation1 + $0x8] sm:$0xff]
      %v898 = vld [vmem:[#allocation1 + $0x10] sm:$0xff]
      %v899 = vshll.u32 %v896, 16
      %v901 = vrot.slane %v899, 6
      %v902 = vshll.u32 %v897, 16
      %v904 = vrot.slane %v902, 6
      %v905 = vshll.u32 %v898, 16
      %v907 = vrot.slane %v905, 6
      %908 = vrot.lane.b32.xlu0 %v901, 92
      %v909 = vpop.permute.xlu0 %908
      %910 = vrot.lane.b32.xlu0 %v904, 92
      %v911 = vpop.permute.xlu0 %910
      %912 = vrot.lane.b32.xlu0 %v907, 92
      %v913 = vpop.permute.xlu0 %912
      %v914 = vrot.slane %v909, 4
      %v915 = vrot.slane %v911, 4
      %v916 = vrot.slane %v913, 4
      %v917 = vsel %vm142, %v914, %v915
      %vm918 = vcmask 752640
      %v919 = vsel %vm918, %v909, %v917
      %v920 = vsel %vm142, %v915, %v916
      %v921 = vsel %vm918, %v911, %v920
      %v924 = vld [vmem:[#allocation2 + $0x20] sm:$0x44]
      %v925 = vsel %vm367, %v919, %v924
      %926 = vst [vmem:[#allocation2 + $0x20] sm:$0x44] %v925
      %v927 = vld [vmem:[#allocation2 + $0x28] sm:$0x44]
      %v928 = vsel %vm367, %v921, %v927
      %929 = vst [vmem:[#allocation2 + $0x28] sm:$0x44] %v928
      %v930 = vld [vmem:[%s135] sm:$0x1f]
      %s932 = scalar_lea.vmem [#allocation1], 3
      %933 = vst [vmem:[%s932] ss:$4 sm:$0xff] %v930
      %v934 = vld [vmem:[#allocation1] sm:$0xff]
      %v936 = vld [vmem:[#allocation1 + $0x8] sm:$0xff]
      %v938 = vld [vmem:[#allocation1 + $0x10] sm:$0xff]
      %940 = vrot.lane.b32.xlu0 %v934, 76
      %v941 = vpop.permute.xlu0 %940
      %942 = vrot.lane.b32.xlu0 %v936, 76
      %v943 = vpop.permute.xlu0 %942
      %944 = vrot.lane.b32.xlu0 %v938, 76
      %v945 = vpop.permute.xlu0 %944
      %v946 = vrot.slane %v941, 4
      %v947 = vrot.slane %v943, 4
      %v948 = vrot.slane %v945, 4
      %v949 = vsel %vm142, %v946, %v947
      %vm950 = vcmask 621568
      %v951 = vsel %vm950, %v941, %v949
      %v952 = vsel %vm142, %v947, %v948
      %v953 = vsel %vm950, %v943, %v952
      %v956 = vld [vmem:[#allocation2 + $0x20] sm:$0x88]
      %v957 = vsel %vm406, %v951, %v956
      %958 = vst [vmem:[#allocation2 + $0x20] sm:$0x88] %v957
      %v959 = vld [vmem:[#allocation2 + $0x28] sm:$0x88]
      %v960 = vsel %vm406, %v953, %v959
      %961 = vst [vmem:[#allocation2 + $0x28] sm:$0x88] %v960
      %v962 = vld [vmem:[%s135] sm:$0x1f]
      %964 = vst [vmem:[#allocation1] ss:$4 sm:$0xff] %v962
      %v965 = vld [vmem:[#allocation1] sm:$0xff]
      %v966 = vld [vmem:[#allocation1 + $0x8] sm:$0xff]
      %v967 = vld [vmem:[#allocation1 + $0x10] sm:$0xff]
      %v968 = vshll.u32 %v965, 16
      %v970 = vrot.slane %v968, 5
      %v971 = vshll.u32 %v966, 16
      %v973 = vrot.slane %v971, 5
      %v974 = vshll.u32 %v967, 16
      %v976 = vrot.slane %v974, 5
      %977 = vrot.lane.b32.xlu0 %v970, 75
      %v978 = vpop.permute.xlu0 %977
      %979 = vrot.lane.b32.xlu0 %v973, 75
      %v980 = vpop.permute.xlu0 %979
      %981 = vrot.lane.b32.xlu0 %v976, 75
      %v982 = vpop.permute.xlu0 %981
      %v983 = vrot.slane %v978, 4
      %v984 = vrot.slane %v980, 4
      %v985 = vrot.slane %v982, 4
      %v986 = vsel %vm142, %v983, %v984
      %vm987 = vcmask 613376
      %v988 = vsel %vm987, %v978, %v986
      %v989 = vsel %vm142, %v984, %v985
      %v990 = vsel %vm987, %v980, %v989
      %v993 = vld [vmem:[#allocation2 + $0x20] sm:$0x88]
      %v994 = vsel %vm448, %v988, %v993
      %995 = vst [vmem:[#allocation2 + $0x20] sm:$0x88] %v994
      %v996 = vld [vmem:[#allocation2 + $0x28] sm:$0x88]
      %v997 = vsel %vm448, %v990, %v996
      %998 = vst [vmem:[#allocation2 + $0x28] sm:$0x88] %v997
      %v999 = vld [vmem:[%s135] sm:$0x1f]
      %1001 = vst [vmem:[#allocation1] ss:$4 sm:$0xff] %v999
      %v1002 = vld [vmem:[#allocation1] sm:$0xff]
      %v1004 = vld [vmem:[#allocation1 + $0x8] sm:$0xff]
      %v1006 = vld [vmem:[#allocation1 + $0x10] sm:$0xff]
      %1008 = vrot.lane.b32.xlu0 %v1002, 74
      %v1009 = vpop.permute.xlu0 %1008
      %1010 = vrot.lane.b32.xlu0 %v1004, 74
      %v1011 = vpop.permute.xlu0 %1010
      %1012 = vrot.lane.b32.xlu0 %v1006, 74
      %v1013 = vpop.permute.xlu0 %1012
      %v1014 = vrot.slane %v1009, 4
      %v1015 = vrot.slane %v1011, 4
      %v1016 = vrot.slane %v1013, 4
      %v1017 = vsel %vm142, %v1014, %v1015
      %vm1018 = vcmask 605184
      %v1019 = vsel %vm1018, %v1009, %v1017
      %v1020 = vsel %vm142, %v1015, %v1016
      %v1021 = vsel %vm1018, %v1011, %v1020
      %v1024 = vld [vmem:[#allocation2 + $0x30] sm:$0x11]
      %v1025 = vsel %vm168, %v1019, %v1024
      %1026 = vst [vmem:[#allocation2 + $0x30] sm:$0x11] %v1025
      %v1027 = vld [vmem:[#allocation2 + $0x38] sm:$0x11]
      %v1028 = vsel %vm168, %v1021, %v1027
      %1029 = vst [vmem:[#allocation2 + $0x38] sm:$0x11] %v1028
      %v1030 = vld [vmem:[%s135] sm:$0x1f]
      %1032 = vst [vmem:[#allocation1] ss:$4 sm:$0xff] %v1030
      %v1033 = vld [vmem:[#allocation1] sm:$0xff]
      %v1034 = vld [vmem:[#allocation1 + $0x8] sm:$0xff]
      %v1035 = vld [vmem:[#allocation1 + $0x10] sm:$0xff]
      %v1036 = vshll.u32 %v1033, 16
      %v1038 = vshll.u32 %v1034, 16
      %v1040 = vshll.u32 %v1035, 16
      %1042 = vrot.lane.b32.xlu0 %v1036, 73
      %v1043 = vpop.permute.xlu0 %1042
      %1044 = vrot.lane.b32.xlu0 %v1038, 73
      %v1045 = vpop.permute.xlu0 %1044
      %1046 = vrot.lane.b32.xlu0 %v1040, 73
      %v1047 = vpop.permute.xlu0 %1046
      %v1048 = vrot.slane %v1043, 4
      %v1049 = vrot.slane %v1045, 4
      %v1050 = vrot.slane %v1047, 4
      %v1051 = vsel %vm142, %v1048, %v1049
      %vm1052 = vcmask 596992
      %v1053 = vsel %vm1052, %v1043, %v1051
      %v1054 = vsel %vm142, %v1049, %v1050
      %v1055 = vsel %vm1052, %v1045, %v1054
      %v1058 = vld [vmem:[#allocation2 + $0x30] sm:$0x11]
      %v1059 = vsel %vm205, %v1053, %v1058
      %1060 = vst [vmem:[#allocation2 + $0x30] sm:$0x11] %v1059
      %v1061 = vld [vmem:[#allocation2 + $0x38] sm:$0x11]
      %v1062 = vsel %vm205, %v1055, %v1061
      %1063 = vst [vmem:[#allocation2 + $0x38] sm:$0x11] %v1062
      %v1064 = vld [vmem:[%s135] sm:$0x1f]
      %s1066 = scalar_lea.vmem [#allocation1], 1
      %1067 = vst [vmem:[%s1066] ss:$4 sm:$0xff] %v1064
      %v1068 = vld [vmem:[#allocation1] sm:$0xff]
      %v1070 = vld [vmem:[#allocation1 + $0x8] sm:$0xff]
      %v1072 = vld [vmem:[#allocation1 + $0x10] sm:$0xff]
      %1074 = vrot.lane.b32.xlu0 %v1068, 72
      %v1075 = vpop.permute.xlu0 %1074
      %1076 = vrot.lane.b32.xlu0 %v1070, 72
      %v1077 = vpop.permute.xlu0 %1076
      %1078 = vrot.lane.b32.xlu0 %v1072, 72
      %v1079 = vpop.permute.xlu0 %1078
      %v1080 = vrot.slane %v1075, 4
      %v1081 = vrot.slane %v1077, 4
      %v1082 = vrot.slane %v1079, 4
      %v1083 = vsel %vm142, %v1080, %v1081
      %vm1084 = vcmask 588800
      %v1085 = vsel %vm1084, %v1075, %v1083
      %v1086 = vsel %vm142, %v1081, %v1082
      %v1087 = vsel %vm1084, %v1077, %v1086
      %v1090 = vld [vmem:[#allocation2 + $0x30] sm:$0x22]
      %v1091 = vsel %vm244, %v1085, %v1090
      %1092 = vst [vmem:[#allocation2 + $0x30] sm:$0x22] %v1091
      %v1093 = vld [vmem:[#allocation2 + $0x38] sm:$0x22]
      %v1094 = vsel %vm244, %v1087, %v1093
      %1095 = vst [vmem:[#allocation2 + $0x38] sm:$0x22] %v1094
      %v1096 = vld [vmem:[%s135] sm:$0x1f]
      %1098 = vst [vmem:[#allocation1] ss:$4 sm:$0xff] %v1096
      %v1099 = vld [vmem:[#allocation1] sm:$0xff]
      %v1100 = vld [vmem:[#allocation1 + $0x8] sm:$0xff]
      %v1101 = vld [vmem:[#allocation1 + $0x10] sm:$0xff]
      %v1102 = vshll.u32 %v1099, 16
      %v1104 = vrot.slane %v1102, 7
      %v1105 = vshll.u32 %v1100, 16
      %v1107 = vrot.slane %v1105, 7
      %v1108 = vshll.u32 %v1101, 16
      %v1110 = vrot.slane %v1108, 7
      %1111 = vrot.lane.b32.xlu0 %v1104, 71
      %v1112 = vpop.permute.xlu0 %1111
      %1113 = vrot.lane.b32.xlu0 %v1107, 71
      %v1114 = vpop.permute.xlu0 %1113
      %1115 = vrot.lane.b32.xlu0 %v1110, 71
      %v1116 = vpop.permute.xlu0 %1115
      %v1117 = vrot.slane %v1112, 4
      %v1118 = vrot.slane %v1114, 4
      %v1119 = vrot.slane %v1116, 4
      %v1120 = vsel %vm142, %v1117, %v1118
      %vm1121 = vcmask 580608
      %v1122 = vsel %vm1121, %v1112, %v1120
      %v1123 = vsel %vm142, %v1118, %v1119
      %v1124 = vsel %vm1121, %v1114, %v1123
      %v1127 = vld [vmem:[#allocation2 + $0x30] sm:$0x22]
      %v1128 = vsel %vm286, %v1122, %v1127
      %1129 = vst [vmem:[#allocation2 + $0x30] sm:$0x22] %v1128
      %v1130 = vld [vmem:[#allocation2 + $0x38] sm:$0x22]
      %v1131 = vsel %vm286, %v1124, %v1130
      %1132 = vst [vmem:[#allocation2 + $0x38] sm:$0x22] %v1131
      %v1133 = vld [vmem:[%s135] sm:$0x1f]
      %s1135 = scalar_lea.vmem [#allocation1], 2
      %1136 = vst [vmem:[%s1135] ss:$4 sm:$0xff] %v1133
      %v1137 = vld [vmem:[#allocation1] sm:$0xff]
      %v1139 = vld [vmem:[#allocation1 + $0x8] sm:$0xff]
      %v1141 = vld [vmem:[#allocation1 + $0x10] sm:$0xff]
      %1143 = vrot.lane.b32.xlu0 %v1137, 70
      %v1144 = vpop.permute.xlu0 %1143
      %1145 = vrot.lane.b32.xlu0 %v1139, 70
      %v1146 = vpop.permute.xlu0 %1145
      %1147 = vrot.lane.b32.xlu0 %v1141, 70
      %v1148 = vpop.permute.xlu0 %1147
      %v1149 = vrot.slane %v1144, 4
      %v1150 = vrot.slane %v1146, 4
      %v1151 = vrot.slane %v1148, 4
      %v1152 = vsel %vm142, %v1149, %v1150
      %vm1153 = vcmask 572416
      %v1154 = vsel %vm1153, %v1144, %v1152
      %v1155 = vsel %vm142, %v1150, %v1151
      %v1156 = vsel %vm1153, %v1146, %v1155
      %v1159 = vld [vmem:[#allocation2 + $0x30] sm:$0x44]
      %v1160 = vsel %vm325, %v1154, %v1159
      %1161 = vst [vmem:[#allocation2 + $0x30] sm:$0x44] %v1160
      %v1162 = vld [vmem:[#allocation2 + $0x38] sm:$0x44]
      %v1163 = vsel %vm325, %v1156, %v1162
      %1164 = vst [vmem:[#allocation2 + $0x38] sm:$0x44] %v1163
      %v1165 = vld [vmem:[%s135] sm:$0x1f]
      %1167 = vst [vmem:[#allocation1] ss:$4 sm:$0xff] %v1165
      %v1168 = vld [vmem:[#allocation1] sm:$0xff]
      %v1169 = vld [vmem:[#allocation1 + $0x8] sm:$0xff]
      %v1170 = vld [vmem:[#allocation1 + $0x10] sm:$0xff]
      %v1171 = vshll.u32 %v1168, 16
      %v1173 = vrot.slane %v1171, 6
      %v1174 = vshll.u32 %v1169, 16
      %v1176 = vrot.slane %v1174, 6
      %v1177 = vshll.u32 %v1170, 16
      %v1179 = vrot.slane %v1177, 6
      %1180 = vrot.lane.b32.xlu0 %v1173, 69
      %v1181 = vpop.permute.xlu0 %1180
      %1182 = vrot.lane.b32.xlu0 %v1176, 69
      %v1183 = vpop.permute.xlu0 %1182
      %1184 = vrot.lane.b32.xlu0 %v1179, 69
      %v1185 = vpop.permute.xlu0 %1184
      %v1186 = vrot.slane %v1181, 4
      %v1187 = vrot.slane %v1183, 4
      %v1188 = vrot.slane %v1185, 4
      %v1189 = vsel %vm142, %v1186, %v1187
      %vm1190 = vcmask 564224
      %v1191 = vsel %vm1190, %v1181, %v1189
      %v1192 = vsel %vm142, %v1187, %v1188
      %v1193 = vsel %vm1190, %v1183, %v1192
      %v1196 = vld [vmem:[#allocation2 + $0x30] sm:$0x44]
      %v1197 = vsel %vm367, %v1191, %v1196
      %1198 = vst [vmem:[#allocation2 + $0x30] sm:$0x44] %v1197
      %v1199 = vld [vmem:[#allocation2 + $0x38] sm:$0x44]
      %v1200 = vsel %vm367, %v1193, %v1199
      %1201 = vst [vmem:[#allocation2 + $0x38] sm:$0x44] %v1200
      %v1202 = vld [vmem:[%s135] sm:$0x1f]
      %s1204 = scalar_lea.vmem [#allocation1], 3
      %1205 = vst [vmem:[%s1204] ss:$4 sm:$0xff] %v1202
      %v1206 = vld [vmem:[#allocation1] sm:$0xff]
      %v1208 = vld [vmem:[#allocation1 + $0x8] sm:$0xff]
      %v1210 = vld [vmem:[#allocation1 + $0x10] sm:$0xff]
      %1212 = vrot.lane.b32.xlu0 %v1206, 68
      %v1213 = vpop.permute.xlu0 %1212
      %1214 = vrot.lane.b32.xlu0 %v1208, 68
      %v1215 = vpop.permute.xlu0 %1214
      %1216 = vrot.lane.b32.xlu0 %v1210, 68
      %v1217 = vpop.permute.xlu0 %1216
      %v1218 = vrot.slane %v1213, 4
      %v1219 = vrot.slane %v1215, 4
      %v1220 = vrot.slane %v1217, 4
      %v1221 = vsel %vm142, %v1218, %v1219
      %vm1222 = vcmask 556032
      %v1223 = vsel %vm1222, %v1213, %v1221
      %v1224 = vsel %vm142, %v1219, %v1220
      %v1225 = vsel %vm1222, %v1215, %v1224
      %v1228 = vld [vmem:[#allocation2 + $0x30] sm:$0x88]
      %v1229 = vsel %vm406, %v1223, %v1228
      %1230 = vst [vmem:[#allocation2 + $0x30] sm:$0x88] %v1229
      %v1231 = vld [vmem:[#allocation2 + $0x38] sm:$0x88]
      %v1232 = vsel %vm406, %v1225, %v1231
      %1233 = vst [vmem:[#allocation2 + $0x38] sm:$0x88] %v1232
      %v1234 = vld [vmem:[%s135] sm:$0x1f]
      %1236 = vst [vmem:[#allocation1] ss:$4 sm:$0xff] %v1234
      %v1237 = vld [vmem:[#allocation1] sm:$0xff]
      %v1238 = vld [vmem:[#allocation1 + $0x8] sm:$0xff]
      %v1239 = vld [vmem:[#allocation1 + $0x10] sm:$0xff]
      %v1240 = vshll.u32 %v1237, 16
      %v1242 = vrot.slane %v1240, 5
      %v1243 = vshll.u32 %v1238, 16
      %v1245 = vrot.slane %v1243, 5
      %v1246 = vshll.u32 %v1239, 16
      %v1248 = vrot.slane %v1246, 5
      %1249 = vrot.lane.b32.xlu0 %v1242, 67
      %v1250 = vpop.permute.xlu0 %1249
      %1251 = vrot.lane.b32.xlu0 %v1245, 67
      %v1252 = vpop.permute.xlu0 %1251
      %1253 = vrot.lane.b32.xlu0 %v1248, 67
      %v1254 = vpop.permute.xlu0 %1253
      %v1255 = vrot.slane %v1250, 4
      %v1256 = vrot.slane %v1252, 4
      %v1257 = vrot.slane %v1254, 4
      %v1258 = vsel %vm142, %v1255, %v1256
      %vm1259 = vcmask 547840
      %v1260 = vsel %vm1259, %v1250, %v1258
      %v1261 = vsel %vm142, %v1256, %v1257
      %v1262 = vsel %vm1259, %v1252, %v1261
      %v1265 = vld [vmem:[#allocation2 + $0x30] sm:$0x88]
      %v1266 = vsel %vm448, %v1260, %v1265
      %1267 = vst [vmem:[#allocation2 + $0x30] sm:$0x88] %v1266
      %v1268 = vld [vmem:[#allocation2 + $0x38] sm:$0x88]
      %v1269 = vsel %vm448, %v1262, %v1268
      %1270 = vst [vmem:[#allocation2 + $0x38] sm:$0x88] %v1269
      %v1271 = vld [vmem:[%s135] sm:$0x1f]
      %1273 = vst [vmem:[#allocation1] ss:$4 sm:$0xff] %v1271
      %v1274 = vld [vmem:[#allocation1] sm:$0xff]
      %v1276 = vld [vmem:[#allocation1 + $0x8] sm:$0xff]
      %v1278 = vld [vmem:[#allocation1 + $0x10] sm:$0xff]
      %1280 = vrot.lane.b32.xlu0 %v1274, 66
      %v1281 = vpop.permute.xlu0 %1280
      %1282 = vrot.lane.b32.xlu0 %v1276, 66
      %v1283 = vpop.permute.xlu0 %1282
      %1284 = vrot.lane.b32.xlu0 %v1278, 66
      %v1285 = vpop.permute.xlu0 %1284
      %v1286 = vrot.slane %v1281, 4
      %v1287 = vrot.slane %v1283, 4
      %v1288 = vrot.slane %v1285, 4
      %v1289 = vsel %vm142, %v1286, %v1287
      %vm1290 = vcmask 539648
      %v1291 = vsel %vm1290, %v1281, %v1289
      %v1292 = vsel %vm142, %v1287, %v1288
      %v1293 = vsel %vm1290, %v1283, %v1292
      %v1296 = vld [vmem:[#allocation2 + $0x40] sm:$0x11]
      %v1297 = vsel %vm168, %v1291, %v1296
      %1298 = vst [vmem:[#allocation2 + $0x40] sm:$0x11] %v1297
      %v1299 = vld [vmem:[#allocation2 + $0x48] sm:$0x11]
      %v1300 = vsel %vm168, %v1293, %v1299
      %1301 = vst [vmem:[#allocation2 + $0x48] sm:$0x11] %v1300
      %v1302 = vld [vmem:[%s135] sm:$0x1f]
      %1304 = vst [vmem:[#allocation1] ss:$4 sm:$0xff] %v1302
      %v1305 = vld [vmem:[#allocation1] sm:$0xff]
      %v1306 = vld [vmem:[#allocation1 + $0x8] sm:$0xff]
      %v1307 = vld [vmem:[#allocation1 + $0x10] sm:$0xff]
      %v1308 = vshll.u32 %v1305, 16
      %v1310 = vshll.u32 %v1306, 16
      %v1312 = vshll.u32 %v1307, 16
      %1314 = vrot.lane.b32.xlu0 %v1308, 50
      %v1315 = vpop.permute.xlu0 %1314
      %1316 = vrot.lane.b32.xlu0 %v1310, 50
      %v1317 = vpop.permute.xlu0 %1316
      %1318 = vrot.lane.b32.xlu0 %v1312, 50
      %v1319 = vpop.permute.xlu0 %1318
      %v1320 = vrot.slane %v1315, 4
      %v1321 = vrot.slane %v1317, 4
      %v1322 = vrot.slane %v1319, 4
      %v1323 = vsel %vm142, %v1320, %v1321
      %vm1324 = vcmask 408576
      %v1325 = vsel %vm1324, %v1315, %v1323
      %v1326 = vsel %vm142, %v1321, %v1322
      %v1327 = vsel %vm1324, %v1317, %v1326
      %v1330 = vld [vmem:[#allocation2 + $0x40] sm:$0x11]
      %v1331 = vsel %vm205, %v1325, %v1330
      %1332 = vst [vmem:[#allocation2 + $0x40] sm:$0x11] %v1331
      %v1333 = vld [vmem:[#allocation2 + $0x48] sm:$0x11]
      %v1334 = vsel %vm205, %v1327, %v1333
      %1335 = vst [vmem:[#allocation2 + $0x48] sm:$0x11] %v1334
      %v1336 = vld [vmem:[%s135] sm:$0x1f]
      %s1338 = scalar_lea.vmem [#allocation1], 1
      %1339 = vst [vmem:[%s1338] ss:$4 sm:$0xff] %v1336
      %v1340 = vld [vmem:[#allocation1] sm:$0xff]
      %v1342 = vld [vmem:[#allocation1 + $0x8] sm:$0xff]
      %v1344 = vld [vmem:[#allocation1 + $0x10] sm:$0xff]
      %1346 = vrot.lane.b32.xlu0 %v1340, 49
      %v1347 = vpop.permute.xlu0 %1346
      %1348 = vrot.lane.b32.xlu0 %v1342, 49
      %v1349 = vpop.permute.xlu0 %1348
      %1350 = vrot.lane.b32.xlu0 %v1344, 49
      %v1351 = vpop.permute.xlu0 %1350
      %v1352 = vrot.slane %v1347, 4
      %v1353 = vrot.slane %v1349, 4
      %v1354 = vrot.slane %v1351, 4
      %v1355 = vsel %vm142, %v1352, %v1353
      %vm1356 = vcmask 400384
      %v1357 = vsel %vm1356, %v1347, %v1355
      %v1358 = vsel %vm142, %v1353, %v1354
      %v1359 = vsel %vm1356, %v1349, %v1358
      %v1362 = vld [vmem:[#allocation2 + $0x40] sm:$0x22]
      %v1363 = vsel %vm244, %v1357, %v1362
      %1364 = vst [vmem:[#allocation2 + $0x40] sm:$0x22] %v1363
      %v1365 = vld [vmem:[#allocation2 + $0x48] sm:$0x22]
      %v1366 = vsel %vm244, %v1359, %v1365
      %1367 = vst [vmem:[#allocation2 + $0x48] sm:$0x22] %v1366
      %v1368 = vld [vmem:[%s135] sm:$0x1f]
      %1370 = vst [vmem:[#allocation1] ss:$4 sm:$0xff] %v1368
      %v1371 = vld [vmem:[#allocation1] sm:$0xff]
      %v1372 = vld [vmem:[#allocation1 + $0x8] sm:$0xff]
      %v1373 = vld [vmem:[#allocation1 + $0x10] sm:$0xff]
      %v1374 = vshll.u32 %v1371, 16
      %v1376 = vrot.slane %v1374, 7
      %v1377 = vshll.u32 %v1372, 16
      %v1379 = vrot.slane %v1377, 7
      %v1380 = vshll.u32 %v1373, 16
      %v1382 = vrot.slane %v1380, 7
      %1383 = vrot.lane.b32.xlu0 %v1376, 48
      %v1384 = vpop.permute.xlu0 %1383
      %1385 = vrot.lane.b32.xlu0 %v1379, 48
      %v1386 = vpop.permute.xlu0 %1385
      %1387 = vrot.lane.b32.xlu0 %v1382, 48
      %v1388 = vpop.permute.xlu0 %1387
      %v1389 = vrot.slane %v1384, 4
      %v1390 = vrot.slane %v1386, 4
      %v1391 = vrot.slane %v1388, 4
      %v1392 = vsel %vm142, %v1389, %v1390
      %vm1393 = vcmask 392192
      %v1394 = vsel %vm1393, %v1384, %v1392
      %v1395 = vsel %vm142, %v1390, %v1391
      %v1396 = vsel %vm1393, %v1386, %v1395
      %v1399 = vld [vmem:[#allocation2 + $0x40] sm:$0x22]
      %v1400 = vsel %vm286, %v1394, %v1399
      %1401 = vst [vmem:[#allocation2 + $0x40] sm:$0x22] %v1400
      %v1402 = vld [vmem:[#allocation2 + $0x48] sm:$0x22]
      %v1403 = vsel %vm286, %v1396, %v1402
      %1404 = vst [vmem:[#allocation2 + $0x48] sm:$0x22] %v1403
      %v1405 = vld [vmem:[%s135] sm:$0x1f]
      %s1407 = scalar_lea.vmem [#allocation1], 2
      %1408 = vst [vmem:[%s1407] ss:$4 sm:$0xff] %v1405
      %v1409 = vld [vmem:[#allocation1] sm:$0xff]
      %v1411 = vld [vmem:[#allocation1 + $0x8] sm:$0xff]
      %v1413 = vld [vmem:[#allocation1 + $0x10] sm:$0xff]
      %1415 = vrot.lane.b32.xlu0 %v1409, 47
      %v1416 = vpop.permute.xlu0 %1415
      %1417 = vrot.lane.b32.xlu0 %v1411, 47
      %v1418 = vpop.permute.xlu0 %1417
      %1419 = vrot.lane.b32.xlu0 %v1413, 47
      %v1420 = vpop.permute.xlu0 %1419
      %v1421 = vrot.slane %v1416, 4
      %v1422 = vrot.slane %v1418, 4
      %v1423 = vrot.slane %v1420, 4
      %v1424 = vsel %vm142, %v1421, %v1422
      %vm1425 = vcmask 384000
      %v1426 = vsel %vm1425, %v1416, %v1424
      %v1427 = vsel %vm142, %v1422, %v1423
      %v1428 = vsel %vm1425, %v1418, %v1427
      %v1431 = vld [vmem:[#allocation2 + $0x40] sm:$0x44]
      %v1432 = vsel %vm325, %v1426, %v1431
      %1433 = vst [vmem:[#allocation2 + $0x40] sm:$0x44] %v1432
      %v1434 = vld [vmem:[#allocation2 + $0x48] sm:$0x44]
      %v1435 = vsel %vm325, %v1428, %v1434
      %1436 = vst [vmem:[#allocation2 + $0x48] sm:$0x44] %v1435
      %v1437 = vld [vmem:[%s135] sm:$0x1f]
      %1439 = vst [vmem:[#allocation1] ss:$4 sm:$0xff] %v1437
      %v1440 = vld [vmem:[#allocation1] sm:$0xff]
      %v1441 = vld [vmem:[#allocation1 + $0x8] sm:$0xff]
      %v1442 = vld [vmem:[#allocation1 + $0x10] sm:$0xff]
      %v1443 = vshll.u32 %v1440, 16
      %v1445 = vrot.slane %v1443, 6
      %v1446 = vshll.u32 %v1441, 16
      %v1448 = vrot.slane %v1446, 6
      %v1449 = vshll.u32 %v1442, 16
      %v1451 = vrot.slane %v1449, 6
      %1452 = vrot.lane.b32.xlu0 %v1445, 46
      %v1453 = vpop.permute.xlu0 %1452
      %1454 = vrot.lane.b32.xlu0 %v1448, 46
      %v1455 = vpop.permute.xlu0 %1454
      %1456 = vrot.lane.b32.xlu0 %v1451, 46
      %v1457 = vpop.permute.xlu0 %1456
      %v1458 = vrot.slane %v1453, 4
      %v1459 = vrot.slane %v1455, 4
      %v1460 = vrot.slane %v1457, 4
      %v1461 = vsel %vm142, %v1458, %v1459
      %vm1462 = vcmask 375808
      %v1463 = vsel %vm1462, %v1453, %v1461
      %v1464 = vsel %vm142, %v1459, %v1460
      %v1465 = vsel %vm1462, %v1455, %v1464
      %v1468 = vld [vmem:[#allocation2 + $0x40] sm:$0x44]
      %v1469 = vsel %vm367, %v1463, %v1468
      %1470 = vst [vmem:[#allocation2 + $0x40] sm:$0x44] %v1469
      %v1471 = vld [vmem:[#allocation2 + $0x48] sm:$0x44]
      %v1472 = vsel %vm367, %v1465, %v1471
      %1473 = vst [vmem:[#allocation2 + $0x48] sm:$0x44] %v1472
      %v1474 = vld [vmem:[%s135] sm:$0x1f]
      %s1476 = scalar_lea.vmem [#allocation1], 3
      %1477 = vst [vmem:[%s1476] ss:$4 sm:$0xff] %v1474
      %v1478 = vld [vmem:[#allocation1] sm:$0xff]
      %v1480 = vld [vmem:[#allocation1 + $0x8] sm:$0xff]
      %v1482 = vld [vmem:[#allocation1 + $0x10] sm:$0xff]
      %1484 = vrot.lane.b32.xlu0 %v1478, 45
      %v1485 = vpop.permute.xlu0 %1484
      %1486 = vrot.lane.b32.xlu0 %v1480, 45
      %v1487 = vpop.permute.xlu0 %1486
      %1488 = vrot.lane.b32.xlu0 %v1482, 45
      %v1489 = vpop.permute.xlu0 %1488
      %v1490 = vrot.slane %v1485, 4
      %v1491 = vrot.slane %v1487, 4
      %v1492 = vrot.slane %v1489, 4
      %v1493 = vsel %vm142, %v1490, %v1491
      %vm1494 = vcmask 367616
      %v1495 = vsel %vm1494, %v1485, %v1493
      %v1496 = vsel %vm142, %v1491, %v1492
      %v1497 = vsel %vm1494, %v1487, %v1496
      %v1500 = vld [vmem:[#allocation2 + $0x40] sm:$0x88]
      %v1501 = vsel %vm406, %v1495, %v1500
      %1502 = vst [vmem:[#allocation2 + $0x40] sm:$0x88] %v1501
      %v1503 = vld [vmem:[#allocation2 + $0x48] sm:$0x88]
      %v1504 = vsel %vm406, %v1497, %v1503
      %1505 = vst [vmem:[#allocation2 + $0x48] sm:$0x88] %v1504
      %v1506 = vld [vmem:[%s135] sm:$0x1f]
      %1508 = vst [vmem:[#allocation1] ss:$4 sm:$0xff] %v1506
      %v1509 = vld [vmem:[#allocation1] sm:$0xff]
      %v1510 = vld [vmem:[#allocation1 + $0x8] sm:$0xff]
      %v1511 = vld [vmem:[#allocation1 + $0x10] sm:$0xff]
      %v1512 = vshll.u32 %v1509, 16
      %v1514 = vrot.slane %v1512, 5
      %v1515 = vshll.u32 %v1510, 16
      %v1517 = vrot.slane %v1515, 5
      %v1518 = vshll.u32 %v1511, 16
      %v1520 = vrot.slane %v1518, 5
      %1521 = vrot.lane.b32.xlu0 %v1514, 44
      %v1522 = vpop.permute.xlu0 %1521
      %1523 = vrot.lane.b32.xlu0 %v1517, 44
      %v1524 = vpop.permute.xlu0 %1523
      %1525 = vrot.lane.b32.xlu0 %v1520, 44
      %v1526 = vpop.permute.xlu0 %1525
      %v1527 = vrot.slane %v1522, 4
      %v1528 = vrot.slane %v1524, 4
      %v1529 = vrot.slane %v1526, 4
      %v1530 = vsel %vm142, %v1527, %v1528
      %vm1531 = vcmask 359424
      %v1532 = vsel %vm1531, %v1522, %v1530
      %v1533 = vsel %vm142, %v1528, %v1529
      %v1534 = vsel %vm1531, %v1524, %v1533
      %v1537 = vld [vmem:[#allocation2 + $0x40] sm:$0x88]
      %v1538 = vsel %vm448, %v1532, %v1537
      %1539 = vst [vmem:[#allocation2 + $0x40] sm:$0x88] %v1538
      %v1540 = vld [vmem:[#allocation2 + $0x48] sm:$0x88]
      %v1541 = vsel %vm448, %v1534, %v1540
      %1542 = vst [vmem:[#allocation2 + $0x48] sm:$0x88] %v1541
      %v1543 = vld [vmem:[%s135] sm:$0x1f]
      %1545 = vst [vmem:[#allocation1] ss:$4 sm:$0xff] %v1543
      %v1546 = vld [vmem:[#allocation1] sm:$0xff]
      %v1548 = vld [vmem:[#allocation1 + $0x8] sm:$0xff]
      %v1550 = vld [vmem:[#allocation1 + $0x10] sm:$0xff]
      %1552 = vrot.lane.b32.xlu0 %v1546, 43
      %v1553 = vpop.permute.xlu0 %1552
      %1554 = vrot.lane.b32.xlu0 %v1548, 43
      %v1555 = vpop.permute.xlu0 %1554
      %1556 = vrot.lane.b32.xlu0 %v1550, 43
      %v1557 = vpop.permute.xlu0 %1556
      %v1558 = vrot.slane %v1553, 4
      %v1559 = vrot.slane %v1555, 4
      %v1560 = vrot.slane %v1557, 4
      %v1561 = vsel %vm142, %v1558, %v1559
      %vm1562 = vcmask 351232
      %v1563 = vsel %vm1562, %v1553, %v1561
      %v1564 = vsel %vm142, %v1559, %v1560
      %v1565 = vsel %vm1562, %v1555, %v1564
      %v1568 = vld [vmem:[#allocation2 + $0x50] sm:$0x11]
      %v1569 = vsel %vm168, %v1563, %v1568
      %1570 = vst [vmem:[#allocation2 + $0x50] sm:$0x11] %v1569
      %v1571 = vld [vmem:[#allocation2 + $0x58] sm:$0x11]
      %v1572 = vsel %vm168, %v1565, %v1571
      %1573 = vst [vmem:[#allocation2 + $0x58] sm:$0x11] %v1572
      %v1574 = vld [vmem:[%s135] sm:$0x1f]
      %1576 = vst [vmem:[#allocation1] ss:$4 sm:$0xff] %v1574
      %v1577 = vld [vmem:[#allocation1] sm:$0xff]
      %v1578 = vld [vmem:[#allocation1 + $0x8] sm:$0xff]
      %v1579 = vld [vmem:[#allocation1 + $0x10] sm:$0xff]
      %v1580 = vshll.u32 %v1577, 16
      %v1582 = vshll.u32 %v1578, 16
      %v1584 = vshll.u32 %v1579, 16
      %1586 = vrot.lane.b32.xlu0 %v1580, 42
      %v1587 = vpop.permute.xlu0 %1586
      %1588 = vrot.lane.b32.xlu0 %v1582, 42
      %v1589 = vpop.permute.xlu0 %1588
      %1590 = vrot.lane.b32.xlu0 %v1584, 42
      %v1591 = vpop.permute.xlu0 %1590
      %v1592 = vrot.slane %v1587, 4
      %v1593 = vrot.slane %v1589, 4
      %v1594 = vrot.slane %v1591, 4
      %v1595 = vsel %vm142, %v1592, %v1593
      %vm1596 = vcmask 343040
      %v1597 = vsel %vm1596, %v1587, %v1595
      %v1598 = vsel %vm142, %v1593, %v1594
      %v1599 = vsel %vm1596, %v1589, %v1598
      %v1602 = vld [vmem:[#allocation2 + $0x50] sm:$0x11]
      %v1603 = vsel %vm205, %v1597, %v1602
      %1604 = vst [vmem:[#allocation2 + $0x50] sm:$0x11] %v1603
      %v1605 = vld [vmem:[#allocation2 + $0x58] sm:$0x11]
      %v1606 = vsel %vm205, %v1599, %v1605
      %1607 = vst [vmem:[#allocation2 + $0x58] sm:$0x11] %v1606
      %v1608 = vld [vmem:[%s135] sm:$0x1f]
      %s1610 = scalar_lea.vmem [#allocation1], 1
      %1611 = vst [vmem:[%s1610] ss:$4 sm:$0xff] %v1608
      %v1612 = vld [vmem:[#allocation1] sm:$0xff]
      %v1614 = vld [vmem:[#allocation1 + $0x8] sm:$0xff]
      %v1616 = vld [vmem:[#allocation1 + $0x10] sm:$0xff]
      %1618 = vrot.lane.b32.xlu0 %v1612, 41
      %v1619 = vpop.permute.xlu0 %1618
      %1620 = vrot.lane.b32.xlu0 %v1614, 41
      %v1621 = vpop.permute.xlu0 %1620
      %1622 = vrot.lane.b32.xlu0 %v1616, 41
      %v1623 = vpop.permute.xlu0 %1622
      %v1624 = vrot.slane %v1619, 4
      %v1625 = vrot.slane %v1621, 4
      %v1626 = vrot.slane %v1623, 4
      %v1627 = vsel %vm142, %v1624, %v1625
      %vm1628 = vcmask 334848
      %v1629 = vsel %vm1628, %v1619, %v1627
      %v1630 = vsel %vm142, %v1625, %v1626
      %v1631 = vsel %vm1628, %v1621, %v1630
      %v1634 = vld [vmem:[#allocation2 + $0x50] sm:$0x22]
      %v1635 = vsel %vm244, %v1629, %v1634
      %1636 = vst [vmem:[#allocation2 + $0x50] sm:$0x22] %v1635
      %v1637 = vld [vmem:[#allocation2 + $0x58] sm:$0x22]
      %v1638 = vsel %vm244, %v1631, %v1637
      %1639 = vst [vmem:[#allocation2 + $0x58] sm:$0x22] %v1638
      %v1640 = vld [vmem:[%s135] sm:$0x1f]
      %1642 = vst [vmem:[#allocation1] ss:$4 sm:$0xff] %v1640
      %v1643 = vld [vmem:[#allocation1] sm:$0xff]
      %v1644 = vld [vmem:[#allocation1 + $0x8] sm:$0xff]
      %v1645 = vld [vmem:[#allocation1 + $0x10] sm:$0xff]
      %v1646 = vshll.u32 %v1643, 16
      %v1648 = vrot.slane %v1646, 7
      %v1649 = vshll.u32 %v1644, 16
      %v1651 = vrot.slane %v1649, 7
      %v1652 = vshll.u32 %v1645, 16
      %v1654 = vrot.slane %v1652, 7
      %1655 = vrot.lane.b32.xlu0 %v1648, 40
      %v1656 = vpop.permute.xlu0 %1655
      %1657 = vrot.lane.b32.xlu0 %v1651, 40
      %v1658 = vpop.permute.xlu0 %1657
      %1659 = vrot.lane.b32.xlu0 %v1654, 40
      %v1660 = vpop.permute.xlu0 %1659
      %v1661 = vrot.slane %v1656, 4
      %v1662 = vrot.slane %v1658, 4
      %v1663 = vrot.slane %v1660, 4
      %v1664 = vsel %vm142, %v1661, %v1662
      %vm1665 = vcmask 326656
      %v1666 = vsel %vm1665, %v1656, %v1664
      %v1667 = vsel %vm142, %v1662, %v1663
      %v1668 = vsel %vm1665, %v1658, %v1667
      %v1671 = vld [vmem:[#allocation2 + $0x50] sm:$0x22]
      %v1672 = vsel %vm286, %v1666, %v1671
      %1673 = vst [vmem:[#allocation2 + $0x50] sm:$0x22] %v1672
      %v1674 = vld [vmem:[#allocation2 + $0x58] sm:$0x22]
      %v1675 = vsel %vm286, %v1668, %v1674
      %1676 = vst [vmem:[#allocation2 + $0x58] sm:$0x22] %v1675
      %v1677 = vld [vmem:[%s135] sm:$0x1f]
      %s1679 = scalar_lea.vmem [#allocation1], 2
      %1680 = vst [vmem:[%s1679] ss:$4 sm:$0xff] %v1677
      %v1681 = vld [vmem:[#allocation1] sm:$0xff]
      %v1683 = vld [vmem:[#allocation1 + $0x8] sm:$0xff]
      %v1685 = vld [vmem:[#allocation1 + $0x10] sm:$0xff]
      %1687 = vrot.lane.b32.xlu0 %v1681, 24
      %v1688 = vpop.permute.xlu0 %1687
      %1689 = vrot.lane.b32.xlu0 %v1683, 24
      %v1690 = vpop.permute.xlu0 %1689
      %1691 = vrot.lane.b32.xlu0 %v1685, 24
      %v1692 = vpop.permute.xlu0 %1691
      %v1693 = vrot.slane %v1688, 4
      %v1694 = vrot.slane %v1690, 4
      %v1695 = vrot.slane %v1692, 4
      %v1696 = vsel %vm142, %v1693, %v1694
      %vm1697 = vcmask 195584
      %v1698 = vsel %vm1697, %v1688, %v1696
      %v1699 = vsel %vm142, %v1694, %v1695
      %v1700 = vsel %vm1697, %v1690, %v1699
      %v1703 = vld [vmem:[#allocation2 + $0x50] sm:$0x44]
      %v1704 = vsel %vm325, %v1698, %v1703
      %1705 = vst [vmem:[#allocation2 + $0x50] sm:$0x44] %v1704
      %v1706 = vld [vmem:[#allocation2 + $0x58] sm:$0x44]
      %v1707 = vsel %vm325, %v1700, %v1706
      %1708 = vst [vmem:[#allocation2 + $0x58] sm:$0x44] %v1707
      %v1709 = vld [vmem:[%s135] sm:$0x1f]
      %1711 = vst [vmem:[#allocation1] ss:$4 sm:$0xff] %v1709
      %v1712 = vld [vmem:[#allocation1] sm:$0xff]
      %v1713 = vld [vmem:[#allocation1 + $0x8] sm:$0xff]
      %v1714 = vld [vmem:[#allocation1 + $0x10] sm:$0xff]
      %v1715 = vshll.u32 %v1712, 16
      %v1717 = vrot.slane %v1715, 6
      %v1718 = vshll.u32 %v1713, 16
      %v1720 = vrot.slane %v1718, 6
      %v1721 = vshll.u32 %v1714, 16
      %v1723 = vrot.slane %v1721, 6
      %1724 = vrot.lane.b32.xlu0 %v1717, 23
      %v1725 = vpop.permute.xlu0 %1724
      %1726 = vrot.lane.b32.xlu0 %v1720, 23
      %v1727 = vpop.permute.xlu0 %1726
      %1728 = vrot.lane.b32.xlu0 %v1723, 23
      %v1729 = vpop.permute.xlu0 %1728
      %v1730 = vrot.slane %v1725, 4
      %v1731 = vrot.slane %v1727, 4
      %v1732 = vrot.slane %v1729, 4
      %v1733 = vsel %vm142, %v1730, %v1731
      %vm1734 = vcmask 187392
      %v1735 = vsel %vm1734, %v1725, %v1733
      %v1736 = vsel %vm142, %v1731, %v1732
      %v1737 = vsel %vm1734, %v1727, %v1736
      %v1740 = vld [vmem:[#allocation2 + $0x50] sm:$0x44]
      %v1741 = vsel %vm367, %v1735, %v1740
      %1742 = vst [vmem:[#allocation2 + $0x50] sm:$0x44] %v1741
      %v1743 = vld [vmem:[#allocation2 + $0x58] sm:$0x44]
      %v1744 = vsel %vm367, %v1737, %v1743
      %1745 = vst [vmem:[#allocation2 + $0x58] sm:$0x44] %v1744
      %v1746 = vld [vmem:[%s135] sm:$0x1f]
      %s1748 = scalar_lea.vmem [#allocation1], 3
      %1749 = vst [vmem:[%s1748] ss:$4 sm:$0xff] %v1746
      %v1750 = vld [vmem:[#allocation1] sm:$0xff]
      %v1752 = vld [vmem:[#allocation1 + $0x8] sm:$0xff]
      %v1754 = vld [vmem:[#allocation1 + $0x10] sm:$0xff]
      %1756 = vrot.lane.b32.xlu0 %v1750, 22
      %v1757 = vpop.permute.xlu0 %1756
      %1758 = vrot.lane.b32.xlu0 %v1752, 22
      %v1759 = vpop.permute.xlu0 %1758
      %1760 = vrot.lane.b32.xlu0 %v1754, 22
      %v1761 = vpop.permute.xlu0 %1760
      %v1762 = vrot.slane %v1757, 4
      %v1763 = vrot.slane %v1759, 4
      %v1764 = vrot.slane %v1761, 4
      %v1765 = vsel %vm142, %v1762, %v1763
      %vm1766 = vcmask 179200
      %v1767 = vsel %vm1766, %v1757, %v1765
      %v1768 = vsel %vm142, %v1763, %v1764
      %v1769 = vsel %vm1766, %v1759, %v1768
      %v1772 = vld [vmem:[#allocation2 + $0x50] sm:$0x88]
      %v1773 = vsel %vm406, %v1767, %v1772
      %1774 = vst [vmem:[#allocation2 + $0x50] sm:$0x88] %v1773
      %v1775 = vld [vmem:[#allocation2 + $0x58] sm:$0x88]
      %v1776 = vsel %vm406, %v1769, %v1775
      %1777 = vst [vmem:[#allocation2 + $0x58] sm:$0x88] %v1776
      %v1778 = vld [vmem:[%s135] sm:$0x1f]
      %1780 = vst [vmem:[#allocation1] ss:$4 sm:$0xff] %v1778
      %v1781 = vld [vmem:[#allocation1] sm:$0xff]
      %v1782 = vld [vmem:[#allocation1 + $0x8] sm:$0xff]
      %v1783 = vld [vmem:[#allocation1 + $0x10] sm:$0xff]
      %v1784 = vshll.u32 %v1781, 16
      %v1786 = vrot.slane %v1784, 5
      %v1787 = vshll.u32 %v1782, 16
      %v1789 = vrot.slane %v1787, 5
      %v1790 = vshll.u32 %v1783, 16
      %v1792 = vrot.slane %v1790, 5
      %1793 = vrot.lane.b32.xlu0 %v1786, 21
      %v1794 = vpop.permute.xlu0 %1793
      %1795 = vrot.lane.b32.xlu0 %v1789, 21
      %v1796 = vpop.permute.xlu0 %1795
      %1797 = vrot.lane.b32.xlu0 %v1792, 21
      %v1798 = vpop.permute.xlu0 %1797
      %v1799 = vrot.slane %v1794, 4
      %v1800 = vrot.slane %v1796, 4
      %v1801 = vrot.slane %v1798, 4
      %v1802 = vsel %vm142, %v1799, %v1800
      %vm1803 = vcmask 171008
      %v1804 = vsel %vm1803, %v1794, %v1802
      %v1805 = vsel %vm142, %v1800, %v1801
      %v1806 = vsel %vm1803, %v1796, %v1805
      %v1809 = vld [vmem:[#allocation2 + $0x50] sm:$0x88]
      %v1810 = vsel %vm448, %v1804, %v1809
      %1811 = vst [vmem:[#allocation2 + $0x50] sm:$0x88] %v1810
      %v1812 = vld [vmem:[#allocation2 + $0x58] sm:$0x88]
      %v1813 = vsel %vm448, %v1806, %v1812
      %1814 = vst [vmem:[#allocation2 + $0x58] sm:$0x88] %v1813
      %v1815 = vld [vmem:[%s135] sm:$0x1f]
      %1817 = vst [vmem:[#allocation1] ss:$4 sm:$0xff] %v1815
      %v1818 = vld [vmem:[#allocation1] sm:$0xff]
      %v1820 = vld [vmem:[#allocation1 + $0x8] sm:$0xff]
      %v1822 = vld [vmem:[#allocation1 + $0x10] sm:$0xff]
      %1824 = vrot.lane.b32.xlu0 %v1818, 20
      %v1825 = vpop.permute.xlu0 %1824
      %1826 = vrot.lane.b32.xlu0 %v1820, 20
      %v1827 = vpop.permute.xlu0 %1826
      %1828 = vrot.lane.b32.xlu0 %v1822, 20
      %v1829 = vpop.permute.xlu0 %1828
      %v1830 = vrot.slane %v1825, 4
      %v1831 = vrot.slane %v1827, 4
      %v1832 = vrot.slane %v1829, 4
      %v1833 = vsel %vm142, %v1830, %v1831
      %vm1834 = vcmask 162816
      %v1835 = vsel %vm1834, %v1825, %v1833
      %v1836 = vsel %vm142, %v1831, %v1832
      %v1837 = vsel %vm1834, %v1827, %v1836
      %v1840 = vld [vmem:[#allocation2 + $0x60] sm:$0x11]
      %v1841 = vsel %vm168, %v1835, %v1840
      %1842 = vst [vmem:[#allocation2 + $0x60] sm:$0x11] %v1841
      %v1843 = vld [vmem:[#allocation2 + $0x68] sm:$0x11]
      %v1844 = vsel %vm168, %v1837, %v1843
      %1845 = vst [vmem:[#allocation2 + $0x68] sm:$0x11] %v1844
      %v1846 = vld [vmem:[%s135] sm:$0x1f]
      %1848 = vst [vmem:[#allocation1] ss:$4 sm:$0xff] %v1846
      %v1849 = vld [vmem:[#allocation1] sm:$0xff]
      %v1850 = vld [vmem:[#allocation1 + $0x8] sm:$0xff]
      %v1851 = vld [vmem:[#allocation1 + $0x10] sm:$0xff]
      %v1852 = vshll.u32 %v1849, 16
      %v1854 = vshll.u32 %v1850, 16
      %v1856 = vshll.u32 %v1851, 16
      %1858 = vrot.lane.b32.xlu0 %v1852, 19
      %v1859 = vpop.permute.xlu0 %1858
      %1860 = vrot.lane.b32.xlu0 %v1854, 19
      %v1861 = vpop.permute.xlu0 %1860
      %1862 = vrot.lane.b32.xlu0 %v1856, 19
      %v1863 = vpop.permute.xlu0 %1862
      %v1864 = vrot.slane %v1859, 4
      %v1865 = vrot.slane %v1861, 4
      %v1866 = vrot.slane %v1863, 4
      %v1867 = vsel %vm142, %v1864, %v1865
      %vm1868 = vcmask 154624
      %v1869 = vsel %vm1868, %v1859, %v1867
      %v1870 = vsel %vm142, %v1865, %v1866
      %v1871 = vsel %vm1868, %v1861, %v1870
      %v1874 = vld [vmem:[#allocation2 + $0x60] sm:$0x11]
      %v1875 = vsel %vm205, %v1869, %v1874
      %1876 = vst [vmem:[#allocation2 + $0x60] sm:$0x11] %v1875
      %v1877 = vld [vmem:[#allocation2 + $0x68] sm:$0x11]
      %v1878 = vsel %vm205, %v1871, %v1877
      %1879 = vst [vmem:[#allocation2 + $0x68] sm:$0x11] %v1878
      %v1880 = vld [vmem:[%s135] sm:$0x1f]
      %s1882 = scalar_lea.vmem [#allocation1], 1
      %1883 = vst [vmem:[%s1882] ss:$4 sm:$0xff] %v1880
      %v1884 = vld [vmem:[#allocation1] sm:$0xff]
      %v1886 = vld [vmem:[#allocation1 + $0x8] sm:$0xff]
      %v1888 = vld [vmem:[#allocation1 + $0x10] sm:$0xff]
      %1890 = vrot.lane.b32.xlu0 %v1884, 18
      %v1891 = vpop.permute.xlu0 %1890
      %1892 = vrot.lane.b32.xlu0 %v1886, 18
      %v1893 = vpop.permute.xlu0 %1892
      %1894 = vrot.lane.b32.xlu0 %v1888, 18
      %v1895 = vpop.permute.xlu0 %1894
      %v1896 = vrot.slane %v1891, 4
      %v1897 = vrot.slane %v1893, 4
      %v1898 = vrot.slane %v1895, 4
      %v1899 = vsel %vm142, %v1896, %v1897
      %vm1900 = vcmask 146432
      %v1901 = vsel %vm1900, %v1891, %v1899
      %v1902 = vsel %vm142, %v1897, %v1898
      %v1903 = vsel %vm1900, %v1893, %v1902
      %v1906 = vld [vmem:[#allocation2 + $0x60] sm:$0x22]
      %v1907 = vsel %vm244, %v1901, %v1906
      %1908 = vst [vmem:[#allocation2 + $0x60] sm:$0x22] %v1907
      %v1909 = vld [vmem:[#allocation2 + $0x68] sm:$0x22]
      %v1910 = vsel %vm244, %v1903, %v1909
      %1911 = vst [vmem:[#allocation2 + $0x68] sm:$0x22] %v1910
      %v1912 = vld [vmem:[%s135] sm:$0x1f]
      %1914 = vst [vmem:[#allocation1] ss:$4 sm:$0xff] %v1912
      %v1915 = vld [vmem:[#allocation1] sm:$0xff]
      %v1916 = vld [vmem:[#allocation1 + $0x8] sm:$0xff]
      %v1917 = vld [vmem:[#allocation1 + $0x10] sm:$0xff]
      %v1918 = vshll.u32 %v1915, 16
      %v1920 = vrot.slane %v1918, 7
      %v1921 = vshll.u32 %v1916, 16
      %v1923 = vrot.slane %v1921, 7
      %v1924 = vshll.u32 %v1917, 16
      %v1926 = vrot.slane %v1924, 7
      %1927 = vrot.lane.b32.xlu0 %v1920, 17
      %v1928 = vpop.permute.xlu0 %1927
      %1929 = vrot.lane.b32.xlu0 %v1923, 17
      %v1930 = vpop.permute.xlu0 %1929
      %1931 = vrot.lane.b32.xlu0 %v1926, 17
      %v1932 = vpop.permute.xlu0 %1931
      %v1933 = vrot.slane %v1928, 4
      %v1934 = vrot.slane %v1930, 4
      %v1935 = vrot.slane %v1932, 4
      %v1936 = vsel %vm142, %v1933, %v1934
      %vm1937 = vcmask 138240
      %v1938 = vsel %vm1937, %v1928, %v1936
      %v1939 = vsel %vm142, %v1934, %v1935
      %v1940 = vsel %vm1937, %v1930, %v1939
      %v1943 = vld [vmem:[#allocation2 + $0x60] sm:$0x22]
      %v1944 = vsel %vm286, %v1938, %v1943
      %1945 = vst [vmem:[#allocation2 + $0x60] sm:$0x22] %v1944
      %v1946 = vld [vmem:[#allocation2 + $0x68] sm:$0x22]
      %v1947 = vsel %vm286, %v1940, %v1946
      %1948 = vst [vmem:[#allocation2 + $0x68] sm:$0x22] %v1947
      %v1949 = vld [vmem:[%s135] sm:$0x1f]
      %s1951 = scalar_lea.vmem [#allocation1], 2
      %1952 = vst [vmem:[%s1951] ss:$4 sm:$0xff] %v1949
      %v1953 = vld [vmem:[#allocation1] sm:$0xff]
      %v1955 = vld [vmem:[#allocation1 + $0x8] sm:$0xff]
      %v1957 = vld [vmem:[#allocation1 + $0x10] sm:$0xff]
      %1959 = vrot.lane.b32.xlu0 %v1953, 16
      %v1960 = vpop.permute.xlu0 %1959
      %1961 = vrot.lane.b32.xlu0 %v1955, 16
      %v1962 = vpop.permute.xlu0 %1961
      %1963 = vrot.lane.b32.xlu0 %v1957, 16
      %v1964 = vpop.permute.xlu0 %1963
      %v1965 = vrot.slane %v1960, 4
      %v1966 = vrot.slane %v1962, 4
      %v1967 = vrot.slane %v1964, 4
      %v1968 = vsel %vm142, %v1965, %v1966
      %vm1969 = vcmask 130048
      %v1970 = vsel %vm1969, %v1960, %v1968
      %v1971 = vsel %vm142, %v1966, %v1967
      %v1972 = vsel %vm1969, %v1962, %v1971
      %v1975 = vld [vmem:[#allocation2 + $0x60] sm:$0x44]
      %v1976 = vsel %vm325, %v1970, %v1975
      %1977 = vst [vmem:[#allocation2 + $0x60] sm:$0x44] %v1976
      %v1978 = vld [vmem:[#allocation2 + $0x68] sm:$0x44]
      %v1979 = vsel %vm325, %v1972, %v1978
      %1980 = vst [vmem:[#allocation2 + $0x68] sm:$0x44] %v1979
      %v1981 = vld [vmem:[%s135] sm:$0x1f]
      %1983 = vst [vmem:[#allocation1] ss:$4 sm:$0xff] %v1981
      %v1984 = vld [vmem:[#allocation1] sm:$0xff]
      %v1985 = vld [vmem:[#allocation1 + $0x8] sm:$0xff]
      %v1986 = vld [vmem:[#allocation1 + $0x10] sm:$0xff]
      %v1987 = vshll.u32 %v1984, 16
      %v1989 = vrot.slane %v1987, 6
      %v1990 = vshll.u32 %v1985, 16
      %v1992 = vrot.slane %v1990, 6
      %v1993 = vshll.u32 %v1986, 16
      %v1995 = vrot.slane %v1993, 6
      %1996 = vrot.lane.b32.xlu0 %v1989, 15
      %v1997 = vpop.permute.xlu0 %1996
      %1998 = vrot.lane.b32.xlu0 %v1992, 15
      %v1999 = vpop.permute.xlu0 %1998
      %2000 = vrot.lane.b32.xlu0 %v1995, 15
      %v2001 = vpop.permute.xlu0 %2000
      %v2002 = vrot.slane %v1997, 4
      %v2003 = vrot.slane %v1999, 4
      %v2004 = vrot.slane %v2001, 4
      %v2005 = vsel %vm142, %v2002, %v2003
      %vm2006 = vcmask 121856
      %v2007 = vsel %vm2006, %v1997, %v2005
      %v2008 = vsel %vm142, %v2003, %v2004
      %v2009 = vsel %vm2006, %v1999, %v2008
      %v2012 = vld [vmem:[#allocation2 + $0x60] sm:$0x44]
      %v2013 = vsel %vm367, %v2007, %v2012
      %2014 = vst [vmem:[#allocation2 + $0x60] sm:$0x44] %v2013
      %v2015 = vld [vmem:[#allocation2 + $0x68] sm:$0x44]
      %v2016 = vsel %vm367, %v2009, %v2015
      %2017 = vst [vmem:[#allocation2 + $0x68] sm:$0x44] %v2016
      %v2018 = vld [vmem:[%s135] sm:$0x1f]
      %s2020 = scalar_lea.vmem [#allocation1], 3
      %2021 = vst [vmem:[%s2020] ss:$4 sm:$0xff] %v2018
      %v2022 = vld [vmem:[#allocation1] sm:$0xff]
      %v2024 = vld [vmem:[#allocation1 + $0x8] sm:$0xff]
      %v2026 = vld [vmem:[#allocation1 + $0x10] sm:$0xff]
      %2028 = vrot.lane.b32.xlu0 %v2022, 14
      %v2029 = vpop.permute.xlu0 %2028
      %2030 = vrot.lane.b32.xlu0 %v2024, 14
      %v2031 = vpop.permute.xlu0 %2030
      %2032 = vrot.lane.b32.xlu0 %v2026, 14
      %v2033 = vpop.permute.xlu0 %2032
      %v2034 = vrot.slane %v2029, 4
      %v2035 = vrot.slane %v2031, 4
      %v2036 = vrot.slane %v2033, 4
      %v2037 = vsel %vm142, %v2034, %v2035
      %vm2038 = vcmask 113664
      %v2039 = vsel %vm2038, %v2029, %v2037
      %v2040 = vsel %vm142, %v2035, %v2036
      %v2041 = vsel %vm2038, %v2031, %v2040
      %v2044 = vld [vmem:[#allocation2 + $0x60] sm:$0x88]
      %v2045 = vsel %vm406, %v2039, %v2044
      %2046 = vst [vmem:[#allocation2 + $0x60] sm:$0x88] %v2045
      %v2047 = vld [vmem:[#allocation2 + $0x68] sm:$0x88]
      %v2048 = vsel %vm406, %v2041, %v2047
      %2049 = vst [vmem:[#allocation2 + $0x68] sm:$0x88] %v2048
      %v2050 = vld [vmem:[%s135 + $0x1] sm:$0x1f]
      %2052 = vst [vmem:[#allocation1] ss:$4 sm:$0xff] %v2050
      %v2053 = vld [vmem:[#allocation1] sm:$0xff]
      %v2054 = vld [vmem:[#allocation1 + $0x8] sm:$0xff]
      %v2055 = vld [vmem:[#allocation1 + $0x10] sm:$0xff]
      %v2056 = vshll.u32 %v2053, 16
      %v2058 = vrot.slane %v2056, 5
      %v2059 = vshll.u32 %v2054, 16
      %v2061 = vrot.slane %v2059, 5
      %v2062 = vshll.u32 %v2055, 16
      %v2064 = vrot.slane %v2062, 5
      %2065 = vrot.lane.b32.xlu0 %v2058, 126
      %v2066 = vpop.permute.xlu0 %2065
      %2067 = vrot.lane.b32.xlu0 %v2061, 126
      %v2068 = vpop.permute.xlu0 %2067
      %2069 = vrot.lane.b32.xlu0 %v2064, 126
      %v2070 = vpop.permute.xlu0 %2069
      %v2071 = vrot.slane %v2066, 4
      %v2072 = vrot.slane %v2068, 4
      %v2073 = vrot.slane %v2070, 4
      %v2074 = vsel %vm142, %v2071, %v2072
      %v2075 = vsel %vm232, %v2066, %v2074
      %v2076 = vsel %vm142, %v2072, %v2073
      %v2077 = vsel %vm232, %v2068, %v2076
      %v2080 = vld [vmem:[#allocation2 + $0x60] sm:$0x88]
      %v2081 = vsel %vm448, %v2075, %v2080
      %2082 = vst [vmem:[#allocation2 + $0x60] sm:$0x88] %v2081
      %v2083 = vld [vmem:[#allocation2 + $0x68] sm:$0x88]
      %v2084 = vsel %vm448, %v2077, %v2083
      %2085 = vst [vmem:[#allocation2 + $0x68] sm:$0x88] %v2084
      %v2086 = vld [vmem:[%s135 + $0x1] sm:$0x1f]
      %2088 = vst [vmem:[#allocation1] ss:$4 sm:$0xff] %v2086
      %v2089 = vld [vmem:[#allocation1] sm:$0xff]
      %v2091 = vld [vmem:[#allocation1 + $0x8] sm:$0xff]
      %v2093 = vld [vmem:[#allocation1 + $0x10] sm:$0xff]
      %2095 = vrot.lane.b32.xlu0 %v2089, 125
      %v2096 = vpop.permute.xlu0 %2095
      %2097 = vrot.lane.b32.xlu0 %v2091, 125
      %v2098 = vpop.permute.xlu0 %2097
      %2099 = vrot.lane.b32.xlu0 %v2093, 125
      %v2100 = vpop.permute.xlu0 %2099
      %v2101 = vrot.slane %v2096, 4
      %v2102 = vrot.slane %v2098, 4
      %v2103 = vrot.slane %v2100, 4
      %v2104 = vsel %vm142, %v2101, %v2102
      %v2105 = vsel %vm276, %v2096, %v2104
      %v2106 = vsel %vm142, %v2102, %v2103
      %v2107 = vsel %vm276, %v2098, %v2106
      %v2110 = vld [vmem:[#allocation2 + $0x70] sm:$0x11]
      %v2111 = vsel %vm168, %v2105, %v2110
      %2112 = vst [vmem:[#allocation2 + $0x70] sm:$0x11] %v2111
      %v2113 = vld [vmem:[#allocation2 + $0x78] sm:$0x11]
      %v2114 = vsel %vm168, %v2107, %v2113
      %2115 = vst [vmem:[#allocation2 + $0x78] sm:$0x11] %v2114
      %v2116 = vld [vmem:[%s135 + $0x1] sm:$0x1f]
      %2118 = vst [vmem:[#allocation1] ss:$4 sm:$0xff] %v2116
      %v2119 = vld [vmem:[#allocation1] sm:$0xff]
      %v2120 = vld [vmem:[#allocation1 + $0x8] sm:$0xff]
      %v2121 = vld [vmem:[#allocation1 + $0x10] sm:$0xff]
      %v2122 = vshll.u32 %v2119, 16
      %v2124 = vshll.u32 %v2120, 16
      %v2126 = vshll.u32 %v2121, 16
      %2128 = vrot.lane.b32.xlu0 %v2122, 124
      %v2129 = vpop.permute.xlu0 %2128
      %2130 = vrot.lane.b32.xlu0 %v2124, 124
      %v2131 = vpop.permute.xlu0 %2130
      %2132 = vrot.lane.b32.xlu0 %v2126, 124
      %v2133 = vpop.permute.xlu0 %2132
      %v2134 = vrot.slane %v2129, 4
      %v2135 = vrot.slane %v2131, 4
      %v2136 = vrot.slane %v2133, 4
      %v2137 = vsel %vm142, %v2134, %v2135
      %v2138 = vsel %vm313, %v2129, %v2137
      %v2139 = vsel %vm142, %v2135, %v2136
      %v2140 = vsel %vm313, %v2131, %v2139
      %v2143 = vld [vmem:[#allocation2 + $0x70] sm:$0x11]
      %v2144 = vsel %vm205, %v2138, %v2143
      %2145 = vst [vmem:[#allocation2 + $0x70] sm:$0x11] %v2144
      %v2146 = vld [vmem:[#allocation2 + $0x78] sm:$0x11]
      %v2147 = vsel %vm205, %v2140, %v2146
      %2148 = vst [vmem:[#allocation2 + $0x78] sm:$0x11] %v2147
      %v2149 = vld [vmem:[%s135 + $0x1] sm:$0x1f]
      %s2151 = scalar_lea.vmem [#allocation1], 1
      %2152 = vst [vmem:[%s2151] ss:$4 sm:$0xff] %v2149
      %v2153 = vld [vmem:[#allocation1] sm:$0xff]
      %v2155 = vld [vmem:[#allocation1 + $0x8] sm:$0xff]
      %v2157 = vld [vmem:[#allocation1 + $0x10] sm:$0xff]
      %2159 = vrot.lane.b32.xlu0 %v2153, 123
      %v2160 = vpop.permute.xlu0 %2159
      %2161 = vrot.lane.b32.xlu0 %v2155, 123
      %v2162 = vpop.permute.xlu0 %2161
      %2163 = vrot.lane.b32.xlu0 %v2157, 123
      %v2164 = vpop.permute.xlu0 %2163
      %v2165 = vrot.slane %v2160, 4
      %v2166 = vrot.slane %v2162, 4
      %v2167 = vrot.slane %v2164, 4
      %v2168 = vsel %vm142, %v2165, %v2166
      %v2169 = vsel %vm357, %v2160, %v2168
      %v2170 = vsel %vm142, %v2166, %v2167
      %v2171 = vsel %vm357, %v2162, %v2170
      %v2174 = vld [vmem:[#allocation2 + $0x70] sm:$0x22]
      %v2175 = vsel %vm244, %v2169, %v2174
      %2176 = vst [vmem:[#allocation2 + $0x70] sm:$0x22] %v2175
      %v2177 = vld [vmem:[#allocation2 + $0x78] sm:$0x22]
      %v2178 = vsel %vm244, %v2171, %v2177
      %2179 = vst [vmem:[#allocation2 + $0x78] sm:$0x22] %v2178
      %v2180 = vld [vmem:[%s135 + $0x1] sm:$0x1f]
      %2182 = vst [vmem:[#allocation1] ss:$4 sm:$0xff] %v2180
      %v2183 = vld [vmem:[#allocation1] sm:$0xff]
      %v2184 = vld [vmem:[#allocation1 + $0x8] sm:$0xff]
      %v2185 = vld [vmem:[#allocation1 + $0x10] sm:$0xff]
      %v2186 = vshll.u32 %v2183, 16
      %v2188 = vrot.slane %v2186, 7
      %v2189 = vshll.u32 %v2184, 16
      %v2191 = vrot.slane %v2189, 7
      %v2192 = vshll.u32 %v2185, 16
      %v2194 = vrot.slane %v2192, 7
      %2195 = vrot.lane.b32.xlu0 %v2188, 122
      %v2196 = vpop.permute.xlu0 %2195
      %2197 = vrot.lane.b32.xlu0 %v2191, 122
      %v2198 = vpop.permute.xlu0 %2197
      %2199 = vrot.lane.b32.xlu0 %v2194, 122
      %v2200 = vpop.permute.xlu0 %2199
      %v2201 = vrot.slane %v2196, 4
      %v2202 = vrot.slane %v2198, 4
      %v2203 = vrot.slane %v2200, 4
      %v2204 = vsel %vm142, %v2201, %v2202
      %v2205 = vsel %vm394, %v2196, %v2204
      %v2206 = vsel %vm142, %v2202, %v2203
      %v2207 = vsel %vm394, %v2198, %v2206
      %v2210 = vld [vmem:[#allocation2 + $0x70] sm:$0x22]
      %v2211 = vsel %vm286, %v2205, %v2210
      %2212 = vst [vmem:[#allocation2 + $0x70] sm:$0x22] %v2211
      %v2213 = vld [vmem:[#allocation2 + $0x78] sm:$0x22]
      %v2214 = vsel %vm286, %v2207, %v2213
      %2215 = vst [vmem:[#allocation2 + $0x78] sm:$0x22] %v2214
      %v2216 = vld [vmem:[%s135 + $0x1] sm:$0x1f]
      %s2218 = scalar_lea.vmem [#allocation1], 2
      %2219 = vst [vmem:[%s2218] ss:$4 sm:$0xff] %v2216
      %v2220 = vld [vmem:[#allocation1] sm:$0xff]
      %v2222 = vld [vmem:[#allocation1 + $0x8] sm:$0xff]
      %v2224 = vld [vmem:[#allocation1 + $0x10] sm:$0xff]
      %2226 = vrot.lane.b32.xlu0 %v2220, 121
      %v2227 = vpop.permute.xlu0 %2226
      %2228 = vrot.lane.b32.xlu0 %v2222, 121
      %v2229 = vpop.permute.xlu0 %2228
      %2230 = vrot.lane.b32.xlu0 %v2224, 121
      %v2231 = vpop.permute.xlu0 %2230
      %v2232 = vrot.slane %v2227, 4
      %v2233 = vrot.slane %v2229, 4
      %v2234 = vrot.slane %v2231, 4
      %v2235 = vsel %vm142, %v2232, %v2233
      %v2236 = vsel %vm438, %v2227, %v2235
      %v2237 = vsel %vm142, %v2233, %v2234
      %v2238 = vsel %vm438, %v2229, %v2237
      %v2241 = vld [vmem:[#allocation2 + $0x70] sm:$0x44]
      %v2242 = vsel %vm325, %v2236, %v2241
      %2243 = vst [vmem:[#allocation2 + $0x70] sm:$0x44] %v2242
      %v2244 = vld [vmem:[#allocation2 + $0x78] sm:$0x44]
      %v2245 = vsel %vm325, %v2238, %v2244
      %2246 = vst [vmem:[#allocation2 + $0x78] sm:$0x44] %v2245
      %v2247 = vld [vmem:[%s135 + $0x1] sm:$0x1f]
      %2249 = vst [vmem:[#allocation1] ss:$4 sm:$0xff] %v2247
      %v2250 = vld [vmem:[#allocation1] sm:$0xff]
      %v2251 = vld [vmem:[#allocation1 + $0x8] sm:$0xff]
      %v2252 = vld [vmem:[#allocation1 + $0x10] sm:$0xff]
      %v2253 = vshll.u32 %v2250, 16
      %v2255 = vrot.slane %v2253, 6
      %v2256 = vshll.u32 %v2251, 16
      %v2258 = vrot.slane %v2256, 6
      %v2259 = vshll.u32 %v2252, 16
      %v2261 = vrot.slane %v2259, 6
      %2262 = vrot.lane.b32.xlu0 %v2255, 120
      %v2263 = vpop.permute.xlu0 %2262
      %2264 = vrot.lane.b32.xlu0 %v2258, 120
      %v2265 = vpop.permute.xlu0 %2264
      %2266 = vrot.lane.b32.xlu0 %v2261, 120
      %v2267 = vpop.permute.xlu0 %2266
      %v2268 = vrot.slane %v2263, 4
      %v2269 = vrot.slane %v2265, 4
      %v2270 = vrot.slane %v2267, 4
      %v2271 = vsel %vm142, %v2268, %v2269
      %v2272 = vsel %vm474, %v2263, %v2271
      %v2273 = vsel %vm142, %v2269, %v2270
      %v2274 = vsel %vm474, %v2265, %v2273
      %v2277 = vld [vmem:[#allocation2 + $0x70] sm:$0x44]
      %v2278 = vsel %vm367, %v2272, %v2277
      %2279 = vst [vmem:[#allocation2 + $0x70] sm:$0x44] %v2278
      %v2280 = vld [vmem:[#allocation2 + $0x78] sm:$0x44]
      %v2281 = vsel %vm367, %v2274, %v2280
      %2282 = vst [vmem:[#allocation2 + $0x78] sm:$0x44] %v2281
      %v2283 = vld [vmem:[%s135 + $0x1] sm:$0x1f]
      %s2285 = scalar_lea.vmem [#allocation1], 3
      %2286 = vst [vmem:[%s2285] ss:$4 sm:$0xff] %v2283
      %v2287 = vld [vmem:[#allocation1] sm:$0xff]
      %v2289 = vld [vmem:[#allocation1 + $0x8] sm:$0xff]
      %v2291 = vld [vmem:[#allocation1 + $0x10] sm:$0xff]
      %2293 = vrot.lane.b32.xlu0 %v2287, 119
      %v2294 = vpop.permute.xlu0 %2293
      %2295 = vrot.lane.b32.xlu0 %v2289, 119
      %v2296 = vpop.permute.xlu0 %2295
      %2297 = vrot.lane.b32.xlu0 %v2291, 119
      %v2298 = vpop.permute.xlu0 %2297
      %v2299 = vrot.slane %v2294, 4
      %v2300 = vrot.slane %v2296, 4
      %v2301 = vrot.slane %v2298, 4
      %v2302 = vsel %vm142, %v2299, %v2300
      %v2303 = vsel %vm508, %v2294, %v2302
      %v2304 = vsel %vm142, %v2300, %v2301
      %v2305 = vsel %vm508, %v2296, %v2304
      %v2308 = vld [vmem:[#allocation2 + $0x70] sm:$0x88]
      %v2309 = vsel %vm406, %v2303, %v2308
      %2310 = vst [vmem:[#allocation2 + $0x70] sm:$0x88] %v2309
      %v2311 = vld [vmem:[#allocation2 + $0x78] sm:$0x88]
      %v2312 = vsel %vm406, %v2305, %v2311
      %2313 = vst [vmem:[#allocation2 + $0x78] sm:$0x88] %v2312
      %v2314 = vld [vmem:[%s135 + $0x1] sm:$0x1f]
      %2316 = vst [vmem:[#allocation1] ss:$4 sm:$0xff] %v2314
      %v2317 = vld [vmem:[#allocation1] sm:$0xff]
      %v2318 = vld [vmem:[#allocation1 + $0x8] sm:$0xff]
      %v2319 = vld [vmem:[#allocation1 + $0x10] sm:$0xff]
      %v2320 = vshll.u32 %v2317, 16
      %v2322 = vrot.slane %v2320, 5
      %v2323 = vshll.u32 %v2318, 16
      %v2325 = vrot.slane %v2323, 5
      %v2326 = vshll.u32 %v2319, 16
      %v2328 = vrot.slane %v2326, 5
      %2329 = vrot.lane.b32.xlu0 %v2322, 118
      %v2330 = vpop.permute.xlu0 %2329
      %2331 = vrot.lane.b32.xlu0 %v2325, 118
      %v2332 = vpop.permute.xlu0 %2331
      %2333 = vrot.lane.b32.xlu0 %v2328, 118
      %v2334 = vpop.permute.xlu0 %2333
      %v2335 = vrot.slane %v2330, 4
      %v2336 = vrot.slane %v2332, 4
      %v2337 = vrot.slane %v2334, 4
      %v2338 = vsel %vm142, %v2335, %v2336
      %v2339 = vsel %vm540, %v2330, %v2338
      %v2340 = vsel %vm142, %v2336, %v2337
      %v2341 = vsel %vm540, %v2332, %v2340
      %v2344 = vld [vmem:[#allocation2 + $0x70] sm:$0x88]
      %v2345 = vsel %vm448, %v2339, %v2344
      %2346 = vst [vmem:[#allocation2 + $0x70] sm:$0x88] %v2345
      %v2347 = vld [vmem:[#allocation2 + $0x78] sm:$0x88]
      %v2348 = vsel %vm448, %v2341, %v2347
      %2349 = vst [vmem:[#allocation2 + $0x78] sm:$0x88] %v2348
      %v2350 = vld [vmem:[%s135 + $0x1] sm:$0x1f]
      %2352 = vst [vmem:[#allocation1] ss:$4 sm:$0xff] %v2350
      %v2353 = vld [vmem:[#allocation1] sm:$0xff]
      %v2355 = vld [vmem:[#allocation1 + $0x8] sm:$0xff]
      %v2357 = vld [vmem:[#allocation1 + $0x10] sm:$0xff]
      %2359 = vrot.lane.b32.xlu0 %v2353, 117
      %v2360 = vpop.permute.xlu0 %2359
      %2361 = vrot.lane.b32.xlu0 %v2355, 117
      %v2362 = vpop.permute.xlu0 %2361
      %2363 = vrot.lane.b32.xlu0 %v2357, 117
      %v2364 = vpop.permute.xlu0 %2363
      %v2365 = vrot.slane %v2360, 4
      %v2366 = vrot.slane %v2362, 4
      %v2367 = vrot.slane %v2364, 4
      %v2368 = vsel %vm142, %v2365, %v2366
      %vm2369 = vcmask 957440
      %v2370 = vsel %vm2369, %v2360, %v2368
      %v2371 = vsel %vm142, %v2366, %v2367
      %v2372 = vsel %vm2369, %v2362, %v2371
      %v2375 = vld [vmem:[#allocation2 + $0x80] sm:$0x11]
      %v2376 = vsel %vm168, %v2370, %v2375
      %2377 = vst [vmem:[#allocation2 + $0x80] sm:$0x11] %v2376
      %v2378 = vld [vmem:[#allocation2 + $0x88] sm:$0x11]
      %v2379 = vsel %vm168, %v2372, %v2378
      %2380 = vst [vmem:[#allocation2 + $0x88] sm:$0x11] %v2379
      %v2381 = vld [vmem:[%s135 + $0x1] sm:$0x1f]
      %2383 = vst [vmem:[#allocation1] ss:$4 sm:$0xff] %v2381
      %v2384 = vld [vmem:[#allocation1] sm:$0xff]
      %v2385 = vld [vmem:[#allocation1 + $0x8] sm:$0xff]
      %v2386 = vld [vmem:[#allocation1 + $0x10] sm:$0xff]
      %v2387 = vshll.u32 %v2384, 16
      %v2389 = vshll.u32 %v2385, 16
      %v2391 = vshll.u32 %v2386, 16
      %2393 = vrot.lane.b32.xlu0 %v2387, 116
      %v2394 = vpop.permute.xlu0 %2393
      %2395 = vrot.lane.b32.xlu0 %v2389, 116
      %v2396 = vpop.permute.xlu0 %2395
      %2397 = vrot.lane.b32.xlu0 %v2391, 116
      %v2398 = vpop.permute.xlu0 %2397
      %v2399 = vrot.slane %v2394, 4
      %v2400 = vrot.slane %v2396, 4
      %v2401 = vrot.slane %v2398, 4
      %v2402 = vsel %vm142, %v2399, %v2400
      %vm2403 = vcmask 949248
      %v2404 = vsel %vm2403, %v2394, %v2402
      %v2405 = vsel %vm142, %v2400, %v2401
      %v2406 = vsel %vm2403, %v2396, %v2405
      %v2409 = vld [vmem:[#allocation2 + $0x80] sm:$0x11]
      %v2410 = vsel %vm205, %v2404, %v2409
      %2411 = vst [vmem:[#allocation2 + $0x80] sm:$0x11] %v2410
      %v2412 = vld [vmem:[#allocation2 + $0x88] sm:$0x11]
      %v2413 = vsel %vm205, %v2406, %v2412
      %2414 = vst [vmem:[#allocation2 + $0x88] sm:$0x11] %v2413
      %v2415 = vld [vmem:[%s135 + $0x1] sm:$0x1f]
      %s2417 = scalar_lea.vmem [#allocation1], 1
      %2418 = vst [vmem:[%s2417] ss:$4 sm:$0xff] %v2415
      %v2419 = vld [vmem:[#allocation1] sm:$0xff]
      %v2421 = vld [vmem:[#allocation1 + $0x8] sm:$0xff]
      %v2423 = vld [vmem:[#allocation1 + $0x10] sm:$0xff]
      %2425 = vrot.lane.b32.xlu0 %v2419, 100
      %v2426 = vpop.permute.xlu0 %2425
      %2427 = vrot.lane.b32.xlu0 %v2421, 100
      %v2428 = vpop.permute.xlu0 %2427
      %2429 = vrot.lane.b32.xlu0 %v2423, 100
      %v2430 = vpop.permute.xlu0 %2429
      %v2431 = vrot.slane %v2426, 4
      %v2432 = vrot.slane %v2428, 4
      %v2433 = vrot.slane %v2430, 4
      %v2434 = vsel %vm142, %v2431, %v2432
      %v2435 = vsel %vm646, %v2426, %v2434
      %v2436 = vsel %vm142, %v2432, %v2433
      %v2437 = vsel %vm646, %v2428, %v2436
      %v2440 = vld [vmem:[#allocation2 + $0x80] sm:$0x22]
      %v2441 = vsel %vm244, %v2435, %v2440
      %2442 = vst [vmem:[#allocation2 + $0x80] sm:$0x22] %v2441
      %v2443 = vld [vmem:[#allocation2 + $0x88] sm:$0x22]
      %v2444 = vsel %vm244, %v2437, %v2443
      %2445 = vst [vmem:[#allocation2 + $0x88] sm:$0x22] %v2444
      %v2446 = vld [vmem:[%s135 + $0x1] sm:$0x1f]
      %2448 = vst [vmem:[#allocation1] ss:$4 sm:$0xff] %v2446
      %v2449 = vld [vmem:[#allocation1] sm:$0xff]
      %v2450 = vld [vmem:[#allocation1 + $0x8] sm:$0xff]
      %v2451 = vld [vmem:[#allocation1 + $0x10] sm:$0xff]
      %v2452 = vshll.u32 %v2449, 16
      %v2454 = vrot.slane %v2452, 7
      %v2455 = vshll.u32 %v2450, 16
      %v2457 = vrot.slane %v2455, 7
      %v2458 = vshll.u32 %v2451, 16
      %v2460 = vrot.slane %v2458, 7
      %2461 = vrot.lane.b32.xlu0 %v2454, 99
      %v2462 = vpop.permute.xlu0 %2461
      %2463 = vrot.lane.b32.xlu0 %v2457, 99
      %v2464 = vpop.permute.xlu0 %2463
      %2465 = vrot.lane.b32.xlu0 %v2460, 99
      %v2466 = vpop.permute.xlu0 %2465
      %v2467 = vrot.slane %v2462, 4
      %v2468 = vrot.slane %v2464, 4
      %v2469 = vrot.slane %v2466, 4
      %v2470 = vsel %vm142, %v2467, %v2468
      %v2471 = vsel %vm678, %v2462, %v2470
      %v2472 = vsel %vm142, %v2468, %v2469
      %v2473 = vsel %vm678, %v2464, %v2472
      %v2476 = vld [vmem:[#allocation2 + $0x80] sm:$0x22]
      %v2477 = vsel %vm286, %v2471, %v2476
      %2478 = vst [vmem:[#allocation2 + $0x80] sm:$0x22] %v2477
      %v2479 = vld [vmem:[#allocation2 + $0x88] sm:$0x22]
      %v2480 = vsel %vm286, %v2473, %v2479
      %2481 = vst [vmem:[#allocation2 + $0x88] sm:$0x22] %v2480
      %v2482 = vld [vmem:[%s135 + $0x1] sm:$0x1f]
      %s2484 = scalar_lea.vmem [#allocation1], 2
      %2485 = vst [vmem:[%s2484] ss:$4 sm:$0xff] %v2482
      %v2486 = vld [vmem:[#allocation1] sm:$0xff]
      %v2488 = vld [vmem:[#allocation1 + $0x8] sm:$0xff]
      %v2490 = vld [vmem:[#allocation1 + $0x10] sm:$0xff]
      %2492 = vrot.lane.b32.xlu0 %v2486, 98
      %v2493 = vpop.permute.xlu0 %2492
      %2494 = vrot.lane.b32.xlu0 %v2488, 98
      %v2495 = vpop.permute.xlu0 %2494
      %2496 = vrot.lane.b32.xlu0 %v2490, 98
      %v2497 = vpop.permute.xlu0 %2496
      %v2498 = vrot.slane %v2493, 4
      %v2499 = vrot.slane %v2495, 4
      %v2500 = vrot.slane %v2497, 4
      %v2501 = vsel %vm142, %v2498, %v2499
      %v2502 = vsel %vm715, %v2493, %v2501
      %v2503 = vsel %vm142, %v2499, %v2500
      %v2504 = vsel %vm715, %v2495, %v2503
      %v2507 = vld [vmem:[#allocation2 + $0x80] sm:$0x44]
      %v2508 = vsel %vm325, %v2502, %v2507
      %2509 = vst [vmem:[#allocation2 + $0x80] sm:$0x44] %v2508
      %v2510 = vld [vmem:[#allocation2 + $0x88] sm:$0x44]
      %v2511 = vsel %vm325, %v2504, %v2510
      %2512 = vst [vmem:[#allocation2 + $0x88] sm:$0x44] %v2511
      %v2513 = vld [vmem:[%s135 + $0x1] sm:$0x1f]
      %2515 = vst [vmem:[#allocation1] ss:$4 sm:$0xff] %v2513
      %v2516 = vld [vmem:[#allocation1] sm:$0xff]
      %v2517 = vld [vmem:[#allocation1 + $0x8] sm:$0xff]
      %v2518 = vld [vmem:[#allocation1 + $0x10] sm:$0xff]
      %v2519 = vshll.u32 %v2516, 16
      %v2521 = vrot.slane %v2519, 6
      %v2522 = vshll.u32 %v2517, 16
      %v2524 = vrot.slane %v2522, 6
      %v2525 = vshll.u32 %v2518, 16
      %v2527 = vrot.slane %v2525, 6
      %2528 = vrot.lane.b32.xlu0 %v2521, 97
      %v2529 = vpop.permute.xlu0 %2528
      %2530 = vrot.lane.b32.xlu0 %v2524, 97
      %v2531 = vpop.permute.xlu0 %2530
      %2532 = vrot.lane.b32.xlu0 %v2527, 97
      %v2533 = vpop.permute.xlu0 %2532
      %v2534 = vrot.slane %v2529, 4
      %v2535 = vrot.slane %v2531, 4
      %v2536 = vrot.slane %v2533, 4
      %v2537 = vsel %vm142, %v2534, %v2535
      %v2538 = vsel %vm746, %v2529, %v2537
      %v2539 = vsel %vm142, %v2535, %v2536
      %v2540 = vsel %vm746, %v2531, %v2539
      %v2543 = vld [vmem:[#allocation2 + $0x80] sm:$0x44]
      %v2544 = vsel %vm367, %v2538, %v2543
      %2545 = vst [vmem:[#allocation2 + $0x80] sm:$0x44] %v2544
      %v2546 = vld [vmem:[#allocation2 + $0x88] sm:$0x44]
      %v2547 = vsel %vm367, %v2540, %v2546
      %2548 = vst [vmem:[#allocation2 + $0x88] sm:$0x44] %v2547
      %v2549 = vld [vmem:[%s135 + $0x1] sm:$0x1f]
      %s2551 = scalar_lea.vmem [#allocation1], 3
      %2552 = vst [vmem:[%s2551] ss:$4 sm:$0xff] %v2549
      %v2553 = vld [vmem:[#allocation1] sm:$0xff]
      %v2555 = vld [vmem:[#allocation1 + $0x8] sm:$0xff]
      %v2557 = vld [vmem:[#allocation1 + $0x10] sm:$0xff]
      %2559 = vrot.lane.b32.xlu0 %v2553, 96
      %v2560 = vpop.permute.xlu0 %2559
      %2561 = vrot.lane.b32.xlu0 %v2555, 96
      %v2562 = vpop.permute.xlu0 %2561
      %2563 = vrot.lane.b32.xlu0 %v2557, 96
      %v2564 = vpop.permute.xlu0 %2563
      %v2565 = vrot.slane %v2560, 4
      %v2566 = vrot.slane %v2562, 4
      %v2567 = vrot.slane %v2564, 4
      %v2568 = vsel %vm142, %v2565, %v2566
      %v2569 = vsel %vm780, %v2560, %v2568
      %v2570 = vsel %vm142, %v2566, %v2567
      %v2571 = vsel %vm780, %v2562, %v2570
      %v2574 = vld [vmem:[#allocation2 + $0x80] sm:$0x88]
      %v2575 = vsel %vm406, %v2569, %v2574
      %2576 = vst [vmem:[#allocation2 + $0x80] sm:$0x88] %v2575
      %v2577 = vld [vmem:[#allocation2 + $0x88] sm:$0x88]
      %v2578 = vsel %vm406, %v2571, %v2577
      %2579 = vst [vmem:[#allocation2 + $0x88] sm:$0x88] %v2578
      %v2580 = vld [vmem:[%s135 + $0x1] sm:$0x1f]
      %2582 = vst [vmem:[#allocation1] ss:$4 sm:$0xff] %v2580
      %v2583 = vld [vmem:[#allocation1] sm:$0xff]
      %v2584 = vld [vmem:[#allocation1 + $0x8] sm:$0xff]
      %v2585 = vld [vmem:[#allocation1 + $0x10] sm:$0xff]
      %v2586 = vshll.u32 %v2583, 16
      %v2588 = vrot.slane %v2586, 5
      %v2589 = vshll.u32 %v2584, 16
      %v2591 = vrot.slane %v2589, 5
      %v2592 = vshll.u32 %v2585, 16
      %v2594 = vrot.slane %v2592, 5
      %2595 = vrot.lane.b32.xlu0 %v2588, 95
      %v2596 = vpop.permute.xlu0 %2595
      %2597 = vrot.lane.b32.xlu0 %v2591, 95
      %v2598 = vpop.permute.xlu0 %2597
      %2599 = vrot.lane.b32.xlu0 %v2594, 95
      %v2600 = vpop.permute.xlu0 %2599
      %v2601 = vrot.slane %v2596, 4
      %v2602 = vrot.slane %v2598, 4
      %v2603 = vrot.slane %v2600, 4
      %v2604 = vsel %vm142, %v2601, %v2602
      %v2605 = vsel %vm812, %v2596, %v2604
      %v2606 = vsel %vm142, %v2602, %v2603
      %v2607 = vsel %vm812, %v2598, %v2606
      %v2610 = vld [vmem:[#allocation2 + $0x80] sm:$0x88]
      %v2611 = vsel %vm448, %v2605, %v2610
      %2612 = vst [vmem:[#allocation2 + $0x80] sm:$0x88] %v2611
      %v2613 = vld [vmem:[#allocation2 + $0x88] sm:$0x88]
      %v2614 = vsel %vm448, %v2607, %v2613
      %2615 = vst [vmem:[#allocation2 + $0x88] sm:$0x88] %v2614
      %v2616 = vld [vmem:[%s135 + $0x1] sm:$0x1f]
      %2618 = vst [vmem:[#allocation1] ss:$4 sm:$0xff] %v2616
      %v2619 = vld [vmem:[#allocation1] sm:$0xff]
      %v2621 = vld [vmem:[#allocation1 + $0x8] sm:$0xff]
      %v2623 = vld [vmem:[#allocation1 + $0x10] sm:$0xff]
      %2625 = vrot.lane.b32.xlu0 %v2619, 94
      %v2626 = vpop.permute.xlu0 %2625
      %2627 = vrot.lane.b32.xlu0 %v2621, 94
      %v2628 = vpop.permute.xlu0 %2627
      %2629 = vrot.lane.b32.xlu0 %v2623, 94
      %v2630 = vpop.permute.xlu0 %2629
      %v2631 = vrot.slane %v2626, 4
      %v2632 = vrot.slane %v2628, 4
      %v2633 = vrot.slane %v2630, 4
      %v2634 = vsel %vm142, %v2631, %v2632
      %v2635 = vsel %vm849, %v2626, %v2634
      %v2636 = vsel %vm142, %v2632, %v2633
      %v2637 = vsel %vm849, %v2628, %v2636
      %v2640 = vld [vmem:[#allocation2 + $0x90] sm:$0x11]
      %v2641 = vsel %vm168, %v2635, %v2640
      %2642 = vst [vmem:[#allocation2 + $0x90] sm:$0x11] %v2641
      %v2643 = vld [vmem:[#allocation2 + $0x98] sm:$0x11]
      %v2644 = vsel %vm168, %v2637, %v2643
      %2645 = vst [vmem:[#allocation2 + $0x98] sm:$0x11] %v2644
      %v2646 = vld [vmem:[%s135 + $0x1] sm:$0x1f]
      %2648 = vst [vmem:[#allocation1] ss:$4 sm:$0xff] %v2646
      %v2649 = vld [vmem:[#allocation1] sm:$0xff]
      %v2650 = vld [vmem:[#allocation1 + $0x8] sm:$0xff]
      %v2651 = vld [vmem:[#allocation1 + $0x10] sm:$0xff]
      %v2652 = vshll.u32 %v2649, 16
      %v2654 = vshll.u32 %v2650, 16
      %v2656 = vshll.u32 %v2651, 16
      %2658 = vrot.lane.b32.xlu0 %v2652, 93
      %v2659 = vpop.permute.xlu0 %2658
      %2660 = vrot.lane.b32.xlu0 %v2654, 93
      %v2661 = vpop.permute.xlu0 %2660
      %2662 = vrot.lane.b32.xlu0 %v2656, 93
      %v2663 = vpop.permute.xlu0 %2662
      %v2664 = vrot.slane %v2659, 4
      %v2665 = vrot.slane %v2661, 4
      %v2666 = vrot.slane %v2663, 4
      %v2667 = vsel %vm142, %v2664, %v2665
      %v2668 = vsel %vm881, %v2659, %v2667
      %v2669 = vsel %vm142, %v2665, %v2666
      %v2670 = vsel %vm881, %v2661, %v2669
      %v2673 = vld [vmem:[#allocation2 + $0x90] sm:$0x11]
      %v2674 = vsel %vm205, %v2668, %v2673
      %2675 = vst [vmem:[#allocation2 + $0x90] sm:$0x11] %v2674
      %v2676 = vld [vmem:[#allocation2 + $0x98] sm:$0x11]
      %v2677 = vsel %vm205, %v2670, %v2676
      %2678 = vst [vmem:[#allocation2 + $0x98] sm:$0x11] %v2677
      %v2679 = vld [vmem:[%s135 + $0x1] sm:$0x1f]
      %s2681 = scalar_lea.vmem [#allocation1], 1
      %2682 = vst [vmem:[%s2681] ss:$4 sm:$0xff] %v2679
      %v2683 = vld [vmem:[#allocation1] sm:$0xff]
      %v2685 = vld [vmem:[#allocation1 + $0x8] sm:$0xff]
      %v2687 = vld [vmem:[#allocation1 + $0x10] sm:$0xff]
      %2689 = vrot.lane.b32.xlu0 %v2683, 92
      %v2690 = vpop.permute.xlu0 %2689
      %2691 = vrot.lane.b32.xlu0 %v2685, 92
      %v2692 = vpop.permute.xlu0 %2691
      %2693 = vrot.lane.b32.xlu0 %v2687, 92
      %v2694 = vpop.permute.xlu0 %2693
      %v2695 = vrot.slane %v2690, 4
      %v2696 = vrot.slane %v2692, 4
      %v2697 = vrot.slane %v2694, 4
      %v2698 = vsel %vm142, %v2695, %v2696
      %v2699 = vsel %vm918, %v2690, %v2698
      %v2700 = vsel %vm142, %v2696, %v2697
      %v2701 = vsel %vm918, %v2692, %v2700
      %v2704 = vld [vmem:[#allocation2 + $0x90] sm:$0x22]
      %v2705 = vsel %vm244, %v2699, %v2704
      %2706 = vst [vmem:[#allocation2 + $0x90] sm:$0x22] %v2705
      %v2707 = vld [vmem:[#allocation2 + $0x98] sm:$0x22]
      %v2708 = vsel %vm244, %v2701, %v2707
      %2709 = vst [vmem:[#allocation2 + $0x98] sm:$0x22] %v2708
      %v2710 = vld [vmem:[%s135 + $0x1] sm:$0x1f]
      %2712 = vst [vmem:[#allocation1] ss:$4 sm:$0xff] %v2710
      %v2713 = vld [vmem:[#allocation1] sm:$0xff]
      %v2714 = vld [vmem:[#allocation1 + $0x8] sm:$0xff]
      %v2715 = vld [vmem:[#allocation1 + $0x10] sm:$0xff]
      %v2716 = vshll.u32 %v2713, 16
      %v2718 = vrot.slane %v2716, 7
      %v2719 = vshll.u32 %v2714, 16
      %v2721 = vrot.slane %v2719, 7
      %v2722 = vshll.u32 %v2715, 16
      %v2724 = vrot.slane %v2722, 7
      %2725 = vrot.lane.b32.xlu0 %v2718, 91
      %v2726 = vpop.permute.xlu0 %2725
      %2727 = vrot.lane.b32.xlu0 %v2721, 91
      %v2728 = vpop.permute.xlu0 %2727
      %2729 = vrot.lane.b32.xlu0 %v2724, 91
      %v2730 = vpop.permute.xlu0 %2729
      %v2731 = vrot.slane %v2726, 4
      %v2732 = vrot.slane %v2728, 4
      %v2733 = vrot.slane %v2730, 4
      %v2734 = vsel %vm142, %v2731, %v2732
      %vm2735 = vcmask 744448
      %v2736 = vsel %vm2735, %v2726, %v2734
      %v2737 = vsel %vm142, %v2732, %v2733
      %v2738 = vsel %vm2735, %v2728, %v2737
      %v2741 = vld [vmem:[#allocation2 + $0x90] sm:$0x22]
      %v2742 = vsel %vm286, %v2736, %v2741
      %2743 = vst [vmem:[#allocation2 + $0x90] sm:$0x22] %v2742
      %v2744 = vld [vmem:[#allocation2 + $0x98] sm:$0x22]
      %v2745 = vsel %vm286, %v2738, %v2744
      %2746 = vst [vmem:[#allocation2 + $0x98] sm:$0x22] %v2745
      %v2747 = vld [vmem:[%s135 + $0x1] sm:$0x1f]
      %s2749 = scalar_lea.vmem [#allocation1], 2
      %2750 = vst [vmem:[%s2749] ss:$4 sm:$0xff] %v2747
      %v2751 = vld [vmem:[#allocation1] sm:$0xff]
      %v2753 = vld [vmem:[#allocation1 + $0x8] sm:$0xff]
      %v2755 = vld [vmem:[#allocation1 + $0x10] sm:$0xff]
      %2757 = vrot.lane.b32.xlu0 %v2751, 90
      %v2758 = vpop.permute.xlu0 %2757
      %2759 = vrot.lane.b32.xlu0 %v2753, 90
      %v2760 = vpop.permute.xlu0 %2759
      %2761 = vrot.lane.b32.xlu0 %v2755, 90
      %v2762 = vpop.permute.xlu0 %2761
      %v2763 = vrot.slane %v2758, 4
      %v2764 = vrot.slane %v2760, 4
      %v2765 = vrot.slane %v2762, 4
      %v2766 = vsel %vm142, %v2763, %v2764
      %vm2767 = vcmask 736256
      %v2768 = vsel %vm2767, %v2758, %v2766
      %v2769 = vsel %vm142, %v2764, %v2765
      %v2770 = vsel %vm2767, %v2760, %v2769
      %v2773 = vld [vmem:[#allocation2 + $0x90] sm:$0x44]
      %v2774 = vsel %vm325, %v2768, %v2773
      %2775 = vst [vmem:[#allocation2 + $0x90] sm:$0x44] %v2774
      %v2776 = vld [vmem:[#allocation2 + $0x98] sm:$0x44]
      %v2777 = vsel %vm325, %v2770, %v2776
      %2778 = vst [vmem:[#allocation2 + $0x98] sm:$0x44] %v2777
      %v2779 = vld [vmem:[%s135 + $0x1] sm:$0x1f]
      %2781 = vst [vmem:[#allocation1] ss:$4 sm:$0xff] %v2779
      %v2782 = vld [vmem:[#allocation1] sm:$0xff]
      %v2783 = vld [vmem:[#allocation1 + $0x8] sm:$0xff]
      %v2784 = vld [vmem:[#allocation1 + $0x10] sm:$0xff]
      %v2785 = vshll.u32 %v2782, 16
      %v2787 = vrot.slane %v2785, 6
      %v2788 = vshll.u32 %v2783, 16
      %v2790 = vrot.slane %v2788, 6
      %v2791 = vshll.u32 %v2784, 16
      %v2793 = vrot.slane %v2791, 6
      %2794 = vrot.lane.b32.xlu0 %v2787, 74
      %v2795 = vpop.permute.xlu0 %2794
      %2796 = vrot.lane.b32.xlu0 %v2790, 74
      %v2797 = vpop.permute.xlu0 %2796
      %2798 = vrot.lane.b32.xlu0 %v2793, 74
      %v2799 = vpop.permute.xlu0 %2798
      %v2800 = vrot.slane %v2795, 4
      %v2801 = vrot.slane %v2797, 4
      %v2802 = vrot.slane %v2799, 4
      %v2803 = vsel %vm142, %v2800, %v2801
      %v2804 = vsel %vm1018, %v2795, %v2803
      %v2805 = vsel %vm142, %v2801, %v2802
      %v2806 = vsel %vm1018, %v2797, %v2805
      %v2809 = vld [vmem:[#allocation2 + $0x90] sm:$0x44]
      %v2810 = vsel %vm367, %v2804, %v2809
      %2811 = vst [vmem:[#allocation2 + $0x90] sm:$0x44] %v2810
      %v2812 = vld [vmem:[#allocation2 + $0x98] sm:$0x44]
      %v2813 = vsel %vm367, %v2806, %v2812
      %2814 = vst [vmem:[#allocation2 + $0x98] sm:$0x44] %v2813
      %v2815 = vld [vmem:[%s135 + $0x1] sm:$0x1f]
      %s2817 = scalar_lea.vmem [#allocation1], 3
      %2818 = vst [vmem:[%s2817] ss:$4 sm:$0xff] %v2815
      %v2819 = vld [vmem:[#allocation1] sm:$0xff]
      %v2821 = vld [vmem:[#allocation1 + $0x8] sm:$0xff]
      %v2823 = vld [vmem:[#allocation1 + $0x10] sm:$0xff]
      %2825 = vrot.lane.b32.xlu0 %v2819, 73
      %v2826 = vpop.permute.xlu0 %2825
      %2827 = vrot.lane.b32.xlu0 %v2821, 73
      %v2828 = vpop.permute.xlu0 %2827
      %2829 = vrot.lane.b32.xlu0 %v2823, 73
      %v2830 = vpop.permute.xlu0 %2829
      %v2831 = vrot.slane %v2826, 4
      %v2832 = vrot.slane %v2828, 4
      %v2833 = vrot.slane %v2830, 4
      %v2834 = vsel %vm142, %v2831, %v2832
      %v2835 = vsel %vm1052, %v2826, %v2834
      %v2836 = vsel %vm142, %v2832, %v2833
      %v2837 = vsel %vm1052, %v2828, %v2836
      %v2840 = vld [vmem:[#allocation2 + $0x90] sm:$0x88]
      %v2841 = vsel %vm406, %v2835, %v2840
      %2842 = vst [vmem:[#allocation2 + $0x90] sm:$0x88] %v2841
      %v2843 = vld [vmem:[#allocation2 + $0x98] sm:$0x88]
      %v2844 = vsel %vm406, %v2837, %v2843
      %2845 = vst [vmem:[#allocation2 + $0x98] sm:$0x88] %v2844
      %v2846 = vld [vmem:[%s135 + $0x1] sm:$0x1f]
      %2848 = vst [vmem:[#allocation1] ss:$4 sm:$0xff] %v2846
      %v2849 = vld [vmem:[#allocation1] sm:$0xff]
      %v2850 = vld [vmem:[#allocation1 + $0x8] sm:$0xff]
      %v2851 = vld [vmem:[#allocation1 + $0x10] sm:$0xff]
      %v2852 = vshll.u32 %v2849, 16
      %v2854 = vrot.slane %v2852, 5
      %v2855 = vshll.u32 %v2850, 16
      %v2857 = vrot.slane %v2855, 5
      %v2858 = vshll.u32 %v2851, 16
      %v2860 = vrot.slane %v2858, 5
      %2861 = vrot.lane.b32.xlu0 %v2854, 72
      %v2862 = vpop.permute.xlu0 %2861
      %2863 = vrot.lane.b32.xlu0 %v2857, 72
      %v2864 = vpop.permute.xlu0 %2863
      %2865 = vrot.lane.b32.xlu0 %v2860, 72
      %v2866 = vpop.permute.xlu0 %2865
      %v2867 = vrot.slane %v2862, 4
      %v2868 = vrot.slane %v2864, 4
      %v2869 = vrot.slane %v2866, 4
      %v2870 = vsel %vm142, %v2867, %v2868
      %v2871 = vsel %vm1084, %v2862, %v2870
      %v2872 = vsel %vm142, %v2868, %v2869
      %v2873 = vsel %vm1084, %v2864, %v2872
      %v2876 = vld [vmem:[#allocation2 + $0x90] sm:$0x88]
      %v2877 = vsel %vm448, %v2871, %v2876
      %2878 = vst [vmem:[#allocation2 + $0x90] sm:$0x88] %v2877
      %v2879 = vld [vmem:[#allocation2 + $0x98] sm:$0x88]
      %v2880 = vsel %vm448, %v2873, %v2879
      %2881 = vst [vmem:[#allocation2 + $0x98] sm:$0x88] %v2880
      %v2882 = vld [vmem:[%s135 + $0x1] sm:$0x1f]
      %2884 = vst [vmem:[#allocation1] ss:$4 sm:$0xff] %v2882
      %v2885 = vld [vmem:[#allocation1] sm:$0xff]
      %v2887 = vld [vmem:[#allocation1 + $0x8] sm:$0xff]
      %v2889 = vld [vmem:[#allocation1 + $0x10] sm:$0xff]
      %2891 = vrot.lane.b32.xlu0 %v2885, 71
      %v2892 = vpop.permute.xlu0 %2891
      %2893 = vrot.lane.b32.xlu0 %v2887, 71
      %v2894 = vpop.permute.xlu0 %2893
      %2895 = vrot.lane.b32.xlu0 %v2889, 71
      %v2896 = vpop.permute.xlu0 %2895
      %v2897 = vrot.slane %v2892, 4
      %v2898 = vrot.slane %v2894, 4
      %v2899 = vrot.slane %v2896, 4
      %v2900 = vsel %vm142, %v2897, %v2898
      %v2901 = vsel %vm1121, %v2892, %v2900
      %v2902 = vsel %vm142, %v2898, %v2899
      %v2903 = vsel %vm1121, %v2894, %v2902
      %v2906 = vld [vmem:[#allocation2 + $0xa0] sm:$0x11]
      %v2907 = vsel %vm168, %v2901, %v2906
      %2908 = vst [vmem:[#allocation2 + $0xa0] sm:$0x11] %v2907
      %v2909 = vld [vmem:[#allocation2 + $0xa8] sm:$0x11]
      %v2910 = vsel %vm168, %v2903, %v2909
      %2911 = vst [vmem:[#allocation2 + $0xa8] sm:$0x11] %v2910
      %v2912 = vld [vmem:[%s135 + $0x1] sm:$0x1f]
      %2914 = vst [vmem:[#allocation1] ss:$4 sm:$0xff] %v2912
      %v2915 = vld [vmem:[#allocation1] sm:$0xff]
      %v2916 = vld [vmem:[#allocation1 + $0x8] sm:$0xff]
      %v2917 = vld [vmem:[#allocation1 + $0x10] sm:$0xff]
      %v2918 = vshll.u32 %v2915, 16
      %v2920 = vshll.u32 %v2916, 16
      %v2922 = vshll.u32 %v2917, 16
      %2924 = vrot.lane.b32.xlu0 %v2918, 70
      %v2925 = vpop.permute.xlu0 %2924
      %2926 = vrot.lane.b32.xlu0 %v2920, 70
      %v2927 = vpop.permute.xlu0 %2926
      %2928 = vrot.lane.b32.xlu0 %v2922, 70
      %v2929 = vpop.permute.xlu0 %2928
      %v2930 = vrot.slane %v2925, 4
      %v2931 = vrot.slane %v2927, 4
      %v2932 = vrot.slane %v2929, 4
      %v2933 = vsel %vm142, %v2930, %v2931
      %v2934 = vsel %vm1153, %v2925, %v2933
      %v2935 = vsel %vm142, %v2931, %v2932
      %v2936 = vsel %vm1153, %v2927, %v2935
      %v2939 = vld [vmem:[#allocation2 + $0xa0] sm:$0x11]
      %v2940 = vsel %vm205, %v2934, %v2939
      %2941 = vst [vmem:[#allocation2 + $0xa0] sm:$0x11] %v2940
      %v2942 = vld [vmem:[#allocation2 + $0xa8] sm:$0x11]
      %v2943 = vsel %vm205, %v2936, %v2942
      %2944 = vst [vmem:[#allocation2 + $0xa8] sm:$0x11] %v2943
      %v2945 = vld [vmem:[%s135 + $0x1] sm:$0x1f]
      %s2947 = scalar_lea.vmem [#allocation1], 1
      %2948 = vst [vmem:[%s2947] ss:$4 sm:$0xff] %v2945
      %v2949 = vld [vmem:[#allocation1] sm:$0xff]
      %v2951 = vld [vmem:[#allocation1 + $0x8] sm:$0xff]
      %v2953 = vld [vmem:[#allocation1 + $0x10] sm:$0xff]
      %2955 = vrot.lane.b32.xlu0 %v2949, 69
      %v2956 = vpop.permute.xlu0 %2955
      %2957 = vrot.lane.b32.xlu0 %v2951, 69
      %v2958 = vpop.permute.xlu0 %2957
      %2959 = vrot.lane.b32.xlu0 %v2953, 69
      %v2960 = vpop.permute.xlu0 %2959
      %v2961 = vrot.slane %v2956, 4
      %v2962 = vrot.slane %v2958, 4
      %v2963 = vrot.slane %v2960, 4
      %v2964 = vsel %vm142, %v2961, %v2962
      %v2965 = vsel %vm1190, %v2956, %v2964
      %v2966 = vsel %vm142, %v2962, %v2963
      %v2967 = vsel %vm1190, %v2958, %v2966
      %v2970 = vld [vmem:[#allocation2 + $0xa0] sm:$0x22]
      %v2971 = vsel %vm244, %v2965, %v2970
      %2972 = vst [vmem:[#allocation2 + $0xa0] sm:$0x22] %v2971
      %v2973 = vld [vmem:[#allocation2 + $0xa8] sm:$0x22]
      %v2974 = vsel %vm244, %v2967, %v2973
      %2975 = vst [vmem:[#allocation2 + $0xa8] sm:$0x22] %v2974
      %v2976 = vld [vmem:[%s135 + $0x1] sm:$0x1f]
      %2978 = vst [vmem:[#allocation1] ss:$4 sm:$0xff] %v2976
      %v2979 = vld [vmem:[#allocation1] sm:$0xff]
      %v2980 = vld [vmem:[#allocation1 + $0x8] sm:$0xff]
      %v2981 = vld [vmem:[#allocation1 + $0x10] sm:$0xff]
      %v2982 = vshll.u32 %v2979, 16
      %v2984 = vrot.slane %v2982, 7
      %v2985 = vshll.u32 %v2980, 16
      %v2987 = vrot.slane %v2985, 7
      %v2988 = vshll.u32 %v2981, 16
      %v2990 = vrot.slane %v2988, 7
      %2991 = vrot.lane.b32.xlu0 %v2984, 68
      %v2992 = vpop.permute.xlu0 %2991
      %2993 = vrot.lane.b32.xlu0 %v2987, 68
      %v2994 = vpop.permute.xlu0 %2993
      %2995 = vrot.lane.b32.xlu0 %v2990, 68
      %v2996 = vpop.permute.xlu0 %2995
      %v2997 = vrot.slane %v2992, 4
      %v2998 = vrot.slane %v2994, 4
      %v2999 = vrot.slane %v2996, 4
      %v3000 = vsel %vm142, %v2997, %v2998
      %v3001 = vsel %vm1222, %v2992, %v3000
      %v3002 = vsel %vm142, %v2998, %v2999
      %v3003 = vsel %vm1222, %v2994, %v3002
      %v3006 = vld [vmem:[#allocation2 + $0xa0] sm:$0x22]
      %v3007 = vsel %vm286, %v3001, %v3006
      %3008 = vst [vmem:[#allocation2 + $0xa0] sm:$0x22] %v3007
      %v3009 = vld [vmem:[#allocation2 + $0xa8] sm:$0x22]
      %v3010 = vsel %vm286, %v3003, %v3009
      %3011 = vst [vmem:[#allocation2 + $0xa8] sm:$0x22] %v3010
      %v3012 = vld [vmem:[%s135 + $0x1] sm:$0x1f]
      %s3014 = scalar_lea.vmem [#allocation1], 2
      %3015 = vst [vmem:[%s3014] ss:$4 sm:$0xff] %v3012
      %v3016 = vld [vmem:[#allocation1] sm:$0xff]
      %v3018 = vld [vmem:[#allocation1 + $0x8] sm:$0xff]
      %v3020 = vld [vmem:[#allocation1 + $0x10] sm:$0xff]
      %3022 = vrot.lane.b32.xlu0 %v3016, 67
      %v3023 = vpop.permute.xlu0 %3022
      %3024 = vrot.lane.b32.xlu0 %v3018, 67
      %v3025 = vpop.permute.xlu0 %3024
      %3026 = vrot.lane.b32.xlu0 %v3020, 67
      %v3027 = vpop.permute.xlu0 %3026
      %v3028 = vrot.slane %v3023, 4
      %v3029 = vrot.slane %v3025, 4
      %v3030 = vrot.slane %v3027, 4
      %v3031 = vsel %vm142, %v3028, %v3029
      %v3032 = vsel %vm1259, %v3023, %v3031
      %v3033 = vsel %vm142, %v3029, %v3030
      %v3034 = vsel %vm1259, %v3025, %v3033
      %v3037 = vld [vmem:[#allocation2 + $0xa0] sm:$0x44]
      %v3038 = vsel %vm325, %v3032, %v3037
      %3039 = vst [vmem:[#allocation2 + $0xa0] sm:$0x44] %v3038
      %v3040 = vld [vmem:[#allocation2 + $0xa8] sm:$0x44]
      %v3041 = vsel %vm325, %v3034, %v3040
      %3042 = vst [vmem:[#allocation2 + $0xa8] sm:$0x44] %v3041
      %v3043 = vld [vmem:[%s135 + $0x1] sm:$0x1f]
      %3045 = vst [vmem:[#allocation1] ss:$4 sm:$0xff] %v3043
      %v3046 = vld [vmem:[#allocation1] sm:$0xff]
      %v3047 = vld [vmem:[#allocation1 + $0x8] sm:$0xff]
      %v3048 = vld [vmem:[#allocation1 + $0x10] sm:$0xff]
      %v3049 = vshll.u32 %v3046, 16
      %v3051 = vrot.slane %v3049, 6
      %v3052 = vshll.u32 %v3047, 16
      %v3054 = vrot.slane %v3052, 6
      %v3055 = vshll.u32 %v3048, 16
      %v3057 = vrot.slane %v3055, 6
      %3058 = vrot.lane.b32.xlu0 %v3051, 66
      %v3059 = vpop.permute.xlu0 %3058
      %3060 = vrot.lane.b32.xlu0 %v3054, 66
      %v3061 = vpop.permute.xlu0 %3060
      %3062 = vrot.lane.b32.xlu0 %v3057, 66
      %v3063 = vpop.permute.xlu0 %3062
      %v3064 = vrot.slane %v3059, 4
      %v3065 = vrot.slane %v3061, 4
      %v3066 = vrot.slane %v3063, 4
      %v3067 = vsel %vm142, %v3064, %v3065
      %v3068 = vsel %vm1290, %v3059, %v3067
      %v3069 = vsel %vm142, %v3065, %v3066
      %v3070 = vsel %vm1290, %v3061, %v3069
      %v3073 = vld [vmem:[#allocation2 + $0xa0] sm:$0x44]
      %v3074 = vsel %vm367, %v3068, %v3073
      %3075 = vst [vmem:[#allocation2 + $0xa0] sm:$0x44] %v3074
      %v3076 = vld [vmem:[#allocation2 + $0xa8] sm:$0x44]
      %v3077 = vsel %vm367, %v3070, %v3076
      %3078 = vst [vmem:[#allocation2 + $0xa8] sm:$0x44] %v3077
      %v3079 = vld [vmem:[%s135 + $0x1] sm:$0x1f]
      %s3081 = scalar_lea.vmem [#allocation1], 3
      %3082 = vst [vmem:[%s3081] ss:$4 sm:$0xff] %v3079
      %v3083 = vld [vmem:[#allocation1] sm:$0xff]
      %v3085 = vld [vmem:[#allocation1 + $0x8] sm:$0xff]
      %v3087 = vld [vmem:[#allocation1 + $0x10] sm:$0xff]
      %3089 = vrot.lane.b32.xlu0 %v3083, 65
      %v3090 = vpop.permute.xlu0 %3089
      %3091 = vrot.lane.b32.xlu0 %v3085, 65
      %v3092 = vpop.permute.xlu0 %3091
      %3093 = vrot.lane.b32.xlu0 %v3087, 65
      %v3094 = vpop.permute.xlu0 %3093
      %v3095 = vrot.slane %v3090, 4
      %v3096 = vrot.slane %v3092, 4
      %v3097 = vrot.slane %v3094, 4
      %v3098 = vsel %vm142, %v3095, %v3096
      %vm3099 = vcmask 531456
      %v3100 = vsel %vm3099, %v3090, %v3098
      %v3101 = vsel %vm142, %v3096, %v3097
      %v3102 = vsel %vm3099, %v3092, %v3101
      %v3105 = vld [vmem:[#allocation2 + $0xa0] sm:$0x88]
      %v3106 = vsel %vm406, %v3100, %v3105
      %3107 = vst [vmem:[#allocation2 + $0xa0] sm:$0x88] %v3106
      %v3108 = vld [vmem:[#allocation2 + $0xa8] sm:$0x88]
      %v3109 = vsel %vm406, %v3102, %v3108
      %3110 = vst [vmem:[#allocation2 + $0xa8] sm:$0x88] %v3109
      %v3111 = vld [vmem:[%s135 + $0x1] sm:$0x1f]
      %3113 = vst [vmem:[#allocation1] ss:$4 sm:$0xff] %v3111
      %v3114 = vld [vmem:[#allocation1] sm:$0xff]
      %v3115 = vld [vmem:[#allocation1 + $0x8] sm:$0xff]
      %v3116 = vld [vmem:[#allocation1 + $0x10] sm:$0xff]
      %v3117 = vshll.u32 %v3114, 16
      %v3119 = vrot.slane %v3117, 5
      %v3120 = vshll.u32 %v3115, 16
      %v3122 = vrot.slane %v3120, 5
      %v3123 = vshll.u32 %v3116, 16
      %v3125 = vrot.slane %v3123, 5
      %3126 = vrot.lane.b32.xlu0 %v3119, 64
      %v3127 = vpop.permute.xlu0 %3126
      %3128 = vrot.lane.b32.xlu0 %v3122, 64
      %v3129 = vpop.permute.xlu0 %3128
      %3130 = vrot.lane.b32.xlu0 %v3125, 64
      %v3131 = vpop.permute.xlu0 %3130
      %v3132 = vrot.slane %v3127, 4
      %v3133 = vrot.slane %v3129, 4
      %v3134 = vrot.slane %v3131, 4
      %v3135 = vsel %vm142, %v3132, %v3133
      %vm3136 = vcmask 523264
      %v3137 = vsel %vm3136, %v3127, %v3135
      %v3138 = vsel %vm142, %v3133, %v3134
      %v3139 = vsel %vm3136, %v3129, %v3138
      %v3142 = vld [vmem:[#allocation2 + $0xa0] sm:$0x88]
      %v3143 = vsel %vm448, %v3137, %v3142
      %3144 = vst [vmem:[#allocation2 + $0xa0] sm:$0x88] %v3143
      %v3145 = vld [vmem:[#allocation2 + $0xa8] sm:$0x88]
      %v3146 = vsel %vm448, %v3139, %v3145
      %3147 = vst [vmem:[#allocation2 + $0xa8] sm:$0x88] %v3146
      %v3148 = vld [vmem:[%s135 + $0x1] sm:$0x1f]
      %3150 = vst [vmem:[#allocation1] ss:$4 sm:$0xff] %v3148
      %v3151 = vld [vmem:[#allocation1] sm:$0xff]
      %v3153 = vld [vmem:[#allocation1 + $0x8] sm:$0xff]
      %v3155 = vld [vmem:[#allocation1 + $0x10] sm:$0xff]
      %3157 = vrot.lane.b32.xlu0 %v3151, 48
      %v3158 = vpop.permute.xlu0 %3157
      %3159 = vrot.lane.b32.xlu0 %v3153, 48
      %v3160 = vpop.permute.xlu0 %3159
      %3161 = vrot.lane.b32.xlu0 %v3155, 48
      %v3162 = vpop.permute.xlu0 %3161
      %v3163 = vrot.slane %v3158, 4
      %v3164 = vrot.slane %v3160, 4
      %v3165 = vrot.slane %v3162, 4
      %v3166 = vsel %vm142, %v3163, %v3164
      %v3167 = vsel %vm1393, %v3158, %v3166
      %v3168 = vsel %vm142, %v3164, %v3165
      %v3169 = vsel %vm1393, %v3160, %v3168
      %v3172 = vld [vmem:[#allocation2 + $0xb0] sm:$0x11]
      %v3173 = vsel %vm168, %v3167, %v3172
      %3174 = vst [vmem:[#allocation2 + $0xb0] sm:$0x11] %v3173
      %v3175 = vld [vmem:[#allocation2 + $0xb8] sm:$0x11]
      %v3176 = vsel %vm168, %v3169, %v3175
      %3177 = vst [vmem:[#allocation2 + $0xb8] sm:$0x11] %v3176
      %v3178 = vld [vmem:[%s135 + $0x1] sm:$0x1f]
      %3180 = vst [vmem:[#allocation1] ss:$4 sm:$0xff] %v3178
      %v3181 = vld [vmem:[#allocation1] sm:$0xff]
      %v3182 = vld [vmem:[#allocation1 + $0x8] sm:$0xff]
      %v3183 = vld [vmem:[#allocation1 + $0x10] sm:$0xff]
      %v3184 = vshll.u32 %v3181, 16
      %v3186 = vshll.u32 %v3182, 16
      %v3188 = vshll.u32 %v3183, 16
      %3190 = vrot.lane.b32.xlu0 %v3184, 47
      %v3191 = vpop.permute.xlu0 %3190
      %3192 = vrot.lane.b32.xlu0 %v3186, 47
      %v3193 = vpop.permute.xlu0 %3192
      %3194 = vrot.lane.b32.xlu0 %v3188, 47
      %v3195 = vpop.permute.xlu0 %3194
      %v3196 = vrot.slane %v3191, 4
      %v3197 = vrot.slane %v3193, 4
      %v3198 = vrot.slane %v3195, 4
      %v3199 = vsel %vm142, %v3196, %v3197
      %v3200 = vsel %vm1425, %v3191, %v3199
      %v3201 = vsel %vm142, %v3197, %v3198
      %v3202 = vsel %vm1425, %v3193, %v3201
      %v3205 = vld [vmem:[#allocation2 + $0xb0] sm:$0x11]
      %v3206 = vsel %vm205, %v3200, %v3205
      %3207 = vst [vmem:[#allocation2 + $0xb0] sm:$0x11] %v3206
      %v3208 = vld [vmem:[#allocation2 + $0xb8] sm:$0x11]
      %v3209 = vsel %vm205, %v3202, %v3208
      %3210 = vst [vmem:[#allocation2 + $0xb8] sm:$0x11] %v3209
      %v3211 = vld [vmem:[%s135 + $0x1] sm:$0x1f]
      %s3213 = scalar_lea.vmem [#allocation1], 1
      %3214 = vst [vmem:[%s3213] ss:$4 sm:$0xff] %v3211
      %v3215 = vld [vmem:[#allocation1] sm:$0xff]
      %v3217 = vld [vmem:[#allocation1 + $0x8] sm:$0xff]
      %v3219 = vld [vmem:[#allocation1 + $0x10] sm:$0xff]
      %3221 = vrot.lane.b32.xlu0 %v3215, 46
      %v3222 = vpop.permute.xlu0 %3221
      %3223 = vrot.lane.b32.xlu0 %v3217, 46
      %v3224 = vpop.permute.xlu0 %3223
      %3225 = vrot.lane.b32.xlu0 %v3219, 46
      %v3226 = vpop.permute.xlu0 %3225
      %v3227 = vrot.slane %v3222, 4
      %v3228 = vrot.slane %v3224, 4
      %v3229 = vrot.slane %v3226, 4
      %v3230 = vsel %vm142, %v3227, %v3228
      %v3231 = vsel %vm1462, %v3222, %v3230
      %v3232 = vsel %vm142, %v3228, %v3229
      %v3233 = vsel %vm1462, %v3224, %v3232
      %v3236 = vld [vmem:[#allocation2 + $0xb0] sm:$0x22]
      %v3237 = vsel %vm244, %v3231, %v3236
      %3238 = vst [vmem:[#allocation2 + $0xb0] sm:$0x22] %v3237
      %v3239 = vld [vmem:[#allocation2 + $0xb8] sm:$0x22]
      %v3240 = vsel %vm244, %v3233, %v3239
      %3241 = vst [vmem:[#allocation2 + $0xb8] sm:$0x22] %v3240
      %v3242 = vld [vmem:[%s135 + $0x1] sm:$0x1f]
      %3244 = vst [vmem:[#allocation1] ss:$4 sm:$0xff] %v3242
      %v3245 = vld [vmem:[#allocation1] sm:$0xff]
      %v3246 = vld [vmem:[#allocation1 + $0x8] sm:$0xff]
      %v3247 = vld [vmem:[#allocation1 + $0x10] sm:$0xff]
      %v3248 = vshll.u32 %v3245, 16
      %v3250 = vrot.slane %v3248, 7
      %v3251 = vshll.u32 %v3246, 16
      %v3253 = vrot.slane %v3251, 7
      %v3254 = vshll.u32 %v3247, 16
      %v3256 = vrot.slane %v3254, 7
      %3257 = vrot.lane.b32.xlu0 %v3250, 45
      %v3258 = vpop.permute.xlu0 %3257
      %3259 = vrot.lane.b32.xlu0 %v3253, 45
      %v3260 = vpop.permute.xlu0 %3259
      %3261 = vrot.lane.b32.xlu0 %v3256, 45
      %v3262 = vpop.permute.xlu0 %3261
      %v3263 = vrot.slane %v3258, 4
      %v3264 = vrot.slane %v3260, 4
      %v3265 = vrot.slane %v3262, 4
      %v3266 = vsel %vm142, %v3263, %v3264
      %v3267 = vsel %vm1494, %v3258, %v3266
      %v3268 = vsel %vm142, %v3264, %v3265
      %v3269 = vsel %vm1494, %v3260, %v3268
      %v3272 = vld [vmem:[#allocation2 + $0xb0] sm:$0x22]
      %v3273 = vsel %vm286, %v3267, %v3272
      %3274 = vst [vmem:[#allocation2 + $0xb0] sm:$0x22] %v3273
      %v3275 = vld [vmem:[#allocation2 + $0xb8] sm:$0x22]
      %v3276 = vsel %vm286, %v3269, %v3275
      %3277 = vst [vmem:[#allocation2 + $0xb8] sm:$0x22] %v3276
      %v3278 = vld [vmem:[%s135 + $0x1] sm:$0x1f]
      %s3280 = scalar_lea.vmem [#allocation1], 2
      %3281 = vst [vmem:[%s3280] ss:$4 sm:$0xff] %v3278
      %v3282 = vld [vmem:[#allocation1] sm:$0xff]
      %v3284 = vld [vmem:[#allocation1 + $0x8] sm:$0xff]
      %v3286 = vld [vmem:[#allocation1 + $0x10] sm:$0xff]
      %3288 = vrot.lane.b32.xlu0 %v3282, 44
      %v3289 = vpop.permute.xlu0 %3288
      %3290 = vrot.lane.b32.xlu0 %v3284, 44
      %v3291 = vpop.permute.xlu0 %3290
      %3292 = vrot.lane.b32.xlu0 %v3286, 44
      %v3293 = vpop.permute.xlu0 %3292
      %v3294 = vrot.slane %v3289, 4
      %v3295 = vrot.slane %v3291, 4
      %v3296 = vrot.slane %v3293, 4
      %v3297 = vsel %vm142, %v3294, %v3295
      %v3298 = vsel %vm1531, %v3289, %v3297
      %v3299 = vsel %vm142, %v3295, %v3296
      %v3300 = vsel %vm1531, %v3291, %v3299
      %v3303 = vld [vmem:[#allocation2 + $0xb0] sm:$0x44]
      %v3304 = vsel %vm325, %v3298, %v3303
      %3305 = vst [vmem:[#allocation2 + $0xb0] sm:$0x44] %v3304
      %v3306 = vld [vmem:[#allocation2 + $0xb8] sm:$0x44]
      %v3307 = vsel %vm325, %v3300, %v3306
      %3308 = vst [vmem:[#allocation2 + $0xb8] sm:$0x44] %v3307
      %v3309 = vld [vmem:[%s135 + $0x1] sm:$0x1f]
      %3311 = vst [vmem:[#allocation1] ss:$4 sm:$0xff] %v3309
      %v3312 = vld [vmem:[#allocation1] sm:$0xff]
      %v3313 = vld [vmem:[#allocation1 + $0x8] sm:$0xff]
      %v3314 = vld [vmem:[#allocation1 + $0x10] sm:$0xff]
      %v3315 = vshll.u32 %v3312, 16
      %v3317 = vrot.slane %v3315, 6
      %v3318 = vshll.u32 %v3313, 16
      %v3320 = vrot.slane %v3318, 6
      %v3321 = vshll.u32 %v3314, 16
      %v3323 = vrot.slane %v3321, 6
      %3324 = vrot.lane.b32.xlu0 %v3317, 43
      %v3325 = vpop.permute.xlu0 %3324
      %3326 = vrot.lane.b32.xlu0 %v3320, 43
      %v3327 = vpop.permute.xlu0 %3326
      %3328 = vrot.lane.b32.xlu0 %v3323, 43
      %v3329 = vpop.permute.xlu0 %3328
      %v3330 = vrot.slane %v3325, 4
      %v3331 = vrot.slane %v3327, 4
      %v3332 = vrot.slane %v3329, 4
      %v3333 = vsel %vm142, %v3330, %v3331
      %v3334 = vsel %vm1562, %v3325, %v3333
      %v3335 = vsel %vm142, %v3331, %v3332
      %v3336 = vsel %vm1562, %v3327, %v3335
      %v3339 = vld [vmem:[#allocation2 + $0xb0] sm:$0x44]
      %v3340 = vsel %vm367, %v3334, %v3339
      %3341 = vst [vmem:[#allocation2 + $0xb0] sm:$0x44] %v3340
      %v3342 = vld [vmem:[#allocation2 + $0xb8] sm:$0x44]
      %v3343 = vsel %vm367, %v3336, %v3342
      %3344 = vst [vmem:[#allocation2 + $0xb8] sm:$0x44] %v3343
      %v3345 = vld [vmem:[%s135 + $0x1] sm:$0x1f]
      %s3347 = scalar_lea.vmem [#allocation1], 3
      %3348 = vst [vmem:[%s3347] ss:$4 sm:$0xff] %v3345
      %v3349 = vld [vmem:[#allocation1] sm:$0xff]
      %v3351 = vld [vmem:[#allocation1 + $0x8] sm:$0xff]
      %v3353 = vld [vmem:[#allocation1 + $0x10] sm:$0xff]
      %3355 = vrot.lane.b32.xlu0 %v3349, 42
      %v3356 = vpop.permute.xlu0 %3355
      %3357 = vrot.lane.b32.xlu0 %v3351, 42
      %v3358 = vpop.permute.xlu0 %3357
      %3359 = vrot.lane.b32.xlu0 %v3353, 42
      %v3360 = vpop.permute.xlu0 %3359
      %v3361 = vrot.slane %v3356, 4
      %v3362 = vrot.slane %v3358, 4
      %v3363 = vrot.slane %v3360, 4
      %v3364 = vsel %vm142, %v3361, %v3362
      %v3365 = vsel %vm1596, %v3356, %v3364
      %v3366 = vsel %vm142, %v3362, %v3363
      %v3367 = vsel %vm1596, %v3358, %v3366
      %v3370 = vld [vmem:[#allocation2 + $0xb0] sm:$0x88]
      %v3371 = vsel %vm406, %v3365, %v3370
      %3372 = vst [vmem:[#allocation2 + $0xb0] sm:$0x88] %v3371
      %v3373 = vld [vmem:[#allocation2 + $0xb8] sm:$0x88]
      %v3374 = vsel %vm406, %v3367, %v3373
      %3375 = vst [vmem:[#allocation2 + $0xb8] sm:$0x88] %v3374
      %v3376 = vld [vmem:[%s135 + $0x1] sm:$0x1f]
      %3378 = vst [vmem:[#allocation1] ss:$4 sm:$0xff] %v3376
      %v3379 = vld [vmem:[#allocation1] sm:$0xff]
      %v3380 = vld [vmem:[#allocation1 + $0x8] sm:$0xff]
      %v3381 = vld [vmem:[#allocation1 + $0x10] sm:$0xff]
      %v3382 = vshll.u32 %v3379, 16
      %v3384 = vrot.slane %v3382, 5
      %v3385 = vshll.u32 %v3380, 16
      %v3387 = vrot.slane %v3385, 5
      %v3388 = vshll.u32 %v3381, 16
      %v3390 = vrot.slane %v3388, 5
      %3391 = vrot.lane.b32.xlu0 %v3384, 41
      %v3392 = vpop.permute.xlu0 %3391
      %3393 = vrot.lane.b32.xlu0 %v3387, 41
      %v3394 = vpop.permute.xlu0 %3393
      %3395 = vrot.lane.b32.xlu0 %v3390, 41
      %v3396 = vpop.permute.xlu0 %3395
      %v3397 = vrot.slane %v3392, 4
      %v3398 = vrot.slane %v3394, 4
      %v3399 = vrot.slane %v3396, 4
      %v3400 = vsel %vm142, %v3397, %v3398
      %v3401 = vsel %vm1628, %v3392, %v3400
      %v3402 = vsel %vm142, %v3398, %v3399
      %v3403 = vsel %vm1628, %v3394, %v3402
      %v3406 = vld [vmem:[#allocation2 + $0xb0] sm:$0x88]
      %v3407 = vsel %vm448, %v3401, %v3406
      %3408 = vst [vmem:[#allocation2 + $0xb0] sm:$0x88] %v3407
      %v3409 = vld [vmem:[#allocation2 + $0xb8] sm:$0x88]
      %v3410 = vsel %vm448, %v3403, %v3409
      %3411 = vst [vmem:[#allocation2 + $0xb8] sm:$0x88] %v3410
      %v3412 = vld [vmem:[%s135 + $0x1] sm:$0x1f]
      %3414 = vst [vmem:[#allocation1] ss:$4 sm:$0xff] %v3412
      %v3415 = vld [vmem:[#allocation1] sm:$0xff]
      %v3417 = vld [vmem:[#allocation1 + $0x8] sm:$0xff]
      %v3419 = vld [vmem:[#allocation1 + $0x10] sm:$0xff]
      %3421 = vrot.lane.b32.xlu0 %v3415, 40
      %v3422 = vpop.permute.xlu0 %3421
      %3423 = vrot.lane.b32.xlu0 %v3417, 40
      %v3424 = vpop.permute.xlu0 %3423
      %3425 = vrot.lane.b32.xlu0 %v3419, 40
      %v3426 = vpop.permute.xlu0 %3425
      %v3427 = vrot.slane %v3422, 4
      %v3428 = vrot.slane %v3424, 4
      %v3429 = vrot.slane %v3426, 4
      %v3430 = vsel %vm142, %v3427, %v3428
      %v3431 = vsel %vm1665, %v3422, %v3430
      %v3432 = vsel %vm142, %v3428, %v3429
      %v3433 = vsel %vm1665, %v3424, %v3432
      %v3436 = vld [vmem:[#allocation2 + $0xc0] sm:$0x11]
      %v3437 = vsel %vm168, %v3431, %v3436
      %3438 = vst [vmem:[#allocation2 + $0xc0] sm:$0x11] %v3437
      %v3439 = vld [vmem:[#allocation2 + $0xc8] sm:$0x11]
      %v3440 = vsel %vm168, %v3433, %v3439
      %3441 = vst [vmem:[#allocation2 + $0xc8] sm:$0x11] %v3440
      %v3442 = vld [vmem:[%s135 + $0x1] sm:$0x1f]
      %3444 = vst [vmem:[#allocation1] ss:$4 sm:$0xff] %v3442
      %v3445 = vld [vmem:[#allocation1] sm:$0xff]
      %v3446 = vld [vmem:[#allocation1 + $0x8] sm:$0xff]
      %v3447 = vld [vmem:[#allocation1 + $0x10] sm:$0xff]
      %v3448 = vshll.u32 %v3445, 16
      %v3450 = vshll.u32 %v3446, 16
      %v3452 = vshll.u32 %v3447, 16
      %3454 = vrot.lane.b32.xlu0 %v3448, 39
      %v3455 = vpop.permute.xlu0 %3454
      %3456 = vrot.lane.b32.xlu0 %v3450, 39
      %v3457 = vpop.permute.xlu0 %3456
      %3458 = vrot.lane.b32.xlu0 %v3452, 39
      %v3459 = vpop.permute.xlu0 %3458
      %v3460 = vrot.slane %v3455, 4
      %v3461 = vrot.slane %v3457, 4
      %v3462 = vrot.slane %v3459, 4
      %v3463 = vsel %vm142, %v3460, %v3461
      %vm3464 = vcmask 318464
      %v3465 = vsel %vm3464, %v3455, %v3463
      %v3466 = vsel %vm142, %v3461, %v3462
      %v3467 = vsel %vm3464, %v3457, %v3466
      %v3470 = vld [vmem:[#allocation2 + $0xc0] sm:$0x11]
      %v3471 = vsel %vm205, %v3465, %v3470
      %3472 = vst [vmem:[#allocation2 + $0xc0] sm:$0x11] %v3471
      %v3473 = vld [vmem:[#allocation2 + $0xc8] sm:$0x11]
      %v3474 = vsel %vm205, %v3467, %v3473
      %3475 = vst [vmem:[#allocation2 + $0xc8] sm:$0x11] %v3474
      %v3476 = vld [vmem:[%s135 + $0x1] sm:$0x1f]
      %s3478 = scalar_lea.vmem [#allocation1], 1
      %3479 = vst [vmem:[%s3478] ss:$4 sm:$0xff] %v3476
      %v3480 = vld [vmem:[#allocation1] sm:$0xff]
      %v3482 = vld [vmem:[#allocation1 + $0x8] sm:$0xff]
      %v3484 = vld [vmem:[#allocation1 + $0x10] sm:$0xff]
      %3486 = vrot.lane.b32.xlu0 %v3480, 38
      %v3487 = vpop.permute.xlu0 %3486
      %3488 = vrot.lane.b32.xlu0 %v3482, 38
      %v3489 = vpop.permute.xlu0 %3488
      %3490 = vrot.lane.b32.xlu0 %v3484, 38
      %v3491 = vpop.permute.xlu0 %3490
      %v3492 = vrot.slane %v3487, 4
      %v3493 = vrot.slane %v3489, 4
      %v3494 = vrot.slane %v3491, 4
      %v3495 = vsel %vm142, %v3492, %v3493
      %vm3496 = vcmask 310272
      %v3497 = vsel %vm3496, %v3487, %v3495
      %v3498 = vsel %vm142, %v3493, %v3494
      %v3499 = vsel %vm3496, %v3489, %v3498
      %v3502 = vld [vmem:[#allocation2 + $0xc0] sm:$0x22]
      %v3503 = vsel %vm244, %v3497, %v3502
      %3504 = vst [vmem:[#allocation2 + $0xc0] sm:$0x22] %v3503
      %v3505 = vld [vmem:[#allocation2 + $0xc8] sm:$0x22]
      %v3506 = vsel %vm244, %v3499, %v3505
      %3507 = vst [vmem:[#allocation2 + $0xc8] sm:$0x22] %v3506
      %v3508 = vld [vmem:[%s135 + $0x1] sm:$0x1f]
      %3510 = vst [vmem:[#allocation1] ss:$4 sm:$0xff] %v3508
      %v3511 = vld [vmem:[#allocation1] sm:$0xff]
      %v3512 = vld [vmem:[#allocation1 + $0x8] sm:$0xff]
      %v3513 = vld [vmem:[#allocation1 + $0x10] sm:$0xff]
      %v3514 = vshll.u32 %v3511, 16
      %v3516 = vrot.slane %v3514, 7
      %v3517 = vshll.u32 %v3512, 16
      %v3519 = vrot.slane %v3517, 7
      %v3520 = vshll.u32 %v3513, 16
      %v3522 = vrot.slane %v3520, 7
      %3523 = vrot.lane.b32.xlu0 %v3516, 22
      %v3524 = vpop.permute.xlu0 %3523
      %3525 = vrot.lane.b32.xlu0 %v3519, 22
      %v3526 = vpop.permute.xlu0 %3525
      %3527 = vrot.lane.b32.xlu0 %v3522, 22
      %v3528 = vpop.permute.xlu0 %3527
      %v3529 = vrot.slane %v3524, 4
      %v3530 = vrot.slane %v3526, 4
      %v3531 = vrot.slane %v3528, 4
      %v3532 = vsel %vm142, %v3529, %v3530
      %v3533 = vsel %vm1766, %v3524, %v3532
      %v3534 = vsel %vm142, %v3530, %v3531
      %v3535 = vsel %vm1766, %v3526, %v3534
      %v3538 = vld [vmem:[#allocation2 + $0xc0] sm:$0x22]
      %v3539 = vsel %vm286, %v3533, %v3538
      %3540 = vst [vmem:[#allocation2 + $0xc0] sm:$0x22] %v3539
      %v3541 = vld [vmem:[#allocation2 + $0xc8] sm:$0x22]
      %v3542 = vsel %vm286, %v3535, %v3541
      %3543 = vst [vmem:[#allocation2 + $0xc8] sm:$0x22] %v3542
      %v3544 = vld [vmem:[%s135 + $0x1] sm:$0x1f]
      %s3546 = scalar_lea.vmem [#allocation1], 2
      %3547 = vst [vmem:[%s3546] ss:$4 sm:$0xff] %v3544
      %v3548 = vld [vmem:[#allocation1] sm:$0xff]
      %v3550 = vld [vmem:[#allocation1 + $0x8] sm:$0xff]
      %v3552 = vld [vmem:[#allocation1 + $0x10] sm:$0xff]
      %3554 = vrot.lane.b32.xlu0 %v3548, 21
      %v3555 = vpop.permute.xlu0 %3554
      %3556 = vrot.lane.b32.xlu0 %v3550, 21
      %v3557 = vpop.permute.xlu0 %3556
      %3558 = vrot.lane.b32.xlu0 %v3552, 21
      %v3559 = vpop.permute.xlu0 %3558
      %v3560 = vrot.slane %v3555, 4
      %v3561 = vrot.slane %v3557, 4
      %v3562 = vrot.slane %v3559, 4
      %v3563 = vsel %vm142, %v3560, %v3561
      %v3564 = vsel %vm1803, %v3555, %v3563
      %v3565 = vsel %vm142, %v3561, %v3562
      %v3566 = vsel %vm1803, %v3557, %v3565
      %v3569 = vld [vmem:[#allocation2 + $0xc0] sm:$0x44]
      %v3570 = vsel %vm325, %v3564, %v3569
      %3571 = vst [vmem:[#allocation2 + $0xc0] sm:$0x44] %v3570
      %v3572 = vld [vmem:[#allocation2 + $0xc8] sm:$0x44]
      %v3573 = vsel %vm325, %v3566, %v3572
      %3574 = vst [vmem:[#allocation2 + $0xc8] sm:$0x44] %v3573
      %v3575 = vld [vmem:[%s135 + $0x1] sm:$0x1f]
      %3577 = vst [vmem:[#allocation1] ss:$4 sm:$0xff] %v3575
      %v3578 = vld [vmem:[#allocation1] sm:$0xff]
      %v3579 = vld [vmem:[#allocation1 + $0x8] sm:$0xff]
      %v3580 = vld [vmem:[#allocation1 + $0x10] sm:$0xff]
      %v3581 = vshll.u32 %v3578, 16
      %v3583 = vrot.slane %v3581, 6
      %v3584 = vshll.u32 %v3579, 16
      %v3586 = vrot.slane %v3584, 6
      %v3587 = vshll.u32 %v3580, 16
      %v3589 = vrot.slane %v3587, 6
      %3590 = vrot.lane.b32.xlu0 %v3583, 20
      %v3591 = vpop.permute.xlu0 %3590
      %3592 = vrot.lane.b32.xlu0 %v3586, 20
      %v3593 = vpop.permute.xlu0 %3592
      %3594 = vrot.lane.b32.xlu0 %v3589, 20
      %v3595 = vpop.permute.xlu0 %3594
      %v3596 = vrot.slane %v3591, 4
      %v3597 = vrot.slane %v3593, 4
      %v3598 = vrot.slane %v3595, 4
      %v3599 = vsel %vm142, %v3596, %v3597
      %v3600 = vsel %vm1834, %v3591, %v3599
      %v3601 = vsel %vm142, %v3597, %v3598
      %v3602 = vsel %vm1834, %v3593, %v3601
      %v3605 = vld [vmem:[#allocation2 + $0xc0] sm:$0x44]
      %v3606 = vsel %vm367, %v3600, %v3605
      %3607 = vst [vmem:[#allocation2 + $0xc0] sm:$0x44] %v3606
      %v3608 = vld [vmem:[#allocation2 + $0xc8] sm:$0x44]
      %v3609 = vsel %vm367, %v3602, %v3608
      %3610 = vst [vmem:[#allocation2 + $0xc8] sm:$0x44] %v3609
      %v3611 = vld [vmem:[%s135 + $0x1] sm:$0x1f]
      %s3613 = scalar_lea.vmem [#allocation1], 3
      %3614 = vst [vmem:[%s3613] ss:$4 sm:$0xff] %v3611
      %v3615 = vld [vmem:[#allocation1] sm:$0xff]
      %v3617 = vld [vmem:[#allocation1 + $0x8] sm:$0xff]
      %v3619 = vld [vmem:[#allocation1 + $0x10] sm:$0xff]
      %3621 = vrot.lane.b32.xlu0 %v3615, 19
      %v3622 = vpop.permute.xlu0 %3621
      %3623 = vrot.lane.b32.xlu0 %v3617, 19
      %v3624 = vpop.permute.xlu0 %3623
      %3625 = vrot.lane.b32.xlu0 %v3619, 19
      %v3626 = vpop.permute.xlu0 %3625
      %v3627 = vrot.slane %v3622, 4
      %v3628 = vrot.slane %v3624, 4
      %v3629 = vrot.slane %v3626, 4
      %v3630 = vsel %vm142, %v3627, %v3628
      %v3631 = vsel %vm1868, %v3622, %v3630
      %v3632 = vsel %vm142, %v3628, %v3629
      %v3633 = vsel %vm1868, %v3624, %v3632
      %v3636 = vld [vmem:[#allocation2 + $0xc0] sm:$0x88]
      %v3637 = vsel %vm406, %v3631, %v3636
      %3638 = vst [vmem:[#allocation2 + $0xc0] sm:$0x88] %v3637
      %v3639 = vld [vmem:[#allocation2 + $0xc8] sm:$0x88]
      %v3640 = vsel %vm406, %v3633, %v3639
      %3641 = vst [vmem:[#allocation2 + $0xc8] sm:$0x88] %v3640
      %v3642 = vld [vmem:[%s135 + $0x1] sm:$0x1f]
      %3644 = vst [vmem:[#allocation1] ss:$4 sm:$0xff] %v3642
      %v3645 = vld [vmem:[#allocation1] sm:$0xff]
      %v3646 = vld [vmem:[#allocation1 + $0x8] sm:$0xff]
      %v3647 = vld [vmem:[#allocation1 + $0x10] sm:$0xff]
      %v3648 = vshll.u32 %v3645, 16
      %v3650 = vrot.slane %v3648, 5
      %v3651 = vshll.u32 %v3646, 16
      %v3653 = vrot.slane %v3651, 5
      %v3654 = vshll.u32 %v3647, 16
      %v3656 = vrot.slane %v3654, 5
      %3657 = vrot.lane.b32.xlu0 %v3650, 18
      %v3658 = vpop.permute.xlu0 %3657
      %3659 = vrot.lane.b32.xlu0 %v3653, 18
      %v3660 = vpop.permute.xlu0 %3659
      %3661 = vrot.lane.b32.xlu0 %v3656, 18
      %v3662 = vpop.permute.xlu0 %3661
      %v3663 = vrot.slane %v3658, 4
      %v3664 = vrot.slane %v3660, 4
      %v3665 = vrot.slane %v3662, 4
      %v3666 = vsel %vm142, %v3663, %v3664
      %v3667 = vsel %vm1900, %v3658, %v3666
      %v3668 = vsel %vm142, %v3664, %v3665
      %v3669 = vsel %vm1900, %v3660, %v3668
      %v3672 = vld [vmem:[#allocation2 + $0xc0] sm:$0x88]
      %v3673 = vsel %vm448, %v3667, %v3672
      %3674 = vst [vmem:[#allocation2 + $0xc0] sm:$0x88] %v3673
      %v3675 = vld [vmem:[#allocation2 + $0xc8] sm:$0x88]
      %v3676 = vsel %vm448, %v3669, %v3675
      %3677 = vst [vmem:[#allocation2 + $0xc8] sm:$0x88] %v3676
      %v3678 = vld [vmem:[%s135 + $0x1] sm:$0x1f]
      %3680 = vst [vmem:[#allocation1] ss:$4 sm:$0xff] %v3678
      %v3681 = vld [vmem:[#allocation1] sm:$0xff]
      %v3683 = vld [vmem:[#allocation1 + $0x8] sm:$0xff]
      %v3685 = vld [vmem:[#allocation1 + $0x10] sm:$0xff]
      %3687 = vrot.lane.b32.xlu0 %v3681, 17
      %v3688 = vpop.permute.xlu0 %3687
      %3689 = vrot.lane.b32.xlu0 %v3683, 17
      %v3690 = vpop.permute.xlu0 %3689
      %3691 = vrot.lane.b32.xlu0 %v3685, 17
      %v3692 = vpop.permute.xlu0 %3691
      %v3693 = vrot.slane %v3688, 4
      %v3694 = vrot.slane %v3690, 4
      %v3695 = vrot.slane %v3692, 4
      %v3696 = vsel %vm142, %v3693, %v3694
      %v3697 = vsel %vm1937, %v3688, %v3696
      %v3698 = vsel %vm142, %v3694, %v3695
      %v3699 = vsel %vm1937, %v3690, %v3698
      %v3702 = vld [vmem:[#allocation2 + $0xd0] sm:$0x11]
      %v3703 = vsel %vm168, %v3697, %v3702
      %3704 = vst [vmem:[#allocation2 + $0xd0] sm:$0x11] %v3703
      %v3705 = vld [vmem:[#allocation2 + $0xd8] sm:$0x11]
      %v3706 = vsel %vm168, %v3699, %v3705
      %3707 = vst [vmem:[#allocation2 + $0xd8] sm:$0x11] %v3706
      %v3708 = vld [vmem:[%s135 + $0x1] sm:$0x1f]
      %3710 = vst [vmem:[#allocation1] ss:$4 sm:$0xff] %v3708
      %v3711 = vld [vmem:[#allocation1] sm:$0xff]
      %v3712 = vld [vmem:[#allocation1 + $0x8] sm:$0xff]
      %v3713 = vld [vmem:[#allocation1 + $0x10] sm:$0xff]
      %v3714 = vshll.u32 %v3711, 16
      %v3716 = vshll.u32 %v3712, 16
      %v3718 = vshll.u32 %v3713, 16
      %3720 = vrot.lane.b32.xlu0 %v3714, 16
      %v3721 = vpop.permute.xlu0 %3720
      %3722 = vrot.lane.b32.xlu0 %v3716, 16
      %v3723 = vpop.permute.xlu0 %3722
      %3724 = vrot.lane.b32.xlu0 %v3718, 16
      %v3725 = vpop.permute.xlu0 %3724
      %v3726 = vrot.slane %v3721, 4
      %v3727 = vrot.slane %v3723, 4
      %v3728 = vrot.slane %v3725, 4
      %v3729 = vsel %vm142, %v3726, %v3727
      %v3730 = vsel %vm1969, %v3721, %v3729
      %v3731 = vsel %vm142, %v3727, %v3728
      %v3732 = vsel %vm1969, %v3723, %v3731
      %v3735 = vld [vmem:[#allocation2 + $0xd0] sm:$0x11]
      %v3736 = vsel %vm205, %v3730, %v3735
      %3737 = vst [vmem:[#allocation2 + $0xd0] sm:$0x11] %v3736
      %v3738 = vld [vmem:[#allocation2 + $0xd8] sm:$0x11]
      %v3739 = vsel %vm205, %v3732, %v3738
      %3740 = vst [vmem:[#allocation2 + $0xd8] sm:$0x11] %v3739
      %v3741 = vld [vmem:[%s135 + $0x1] sm:$0x1f]
      %s3743 = scalar_lea.vmem [#allocation1], 1
      %3744 = vst [vmem:[%s3743] ss:$4 sm:$0xff] %v3741
      %v3745 = vld [vmem:[#allocation1] sm:$0xff]
      %v3747 = vld [vmem:[#allocation1 + $0x8] sm:$0xff]
      %v3749 = vld [vmem:[#allocation1 + $0x10] sm:$0xff]
      %3751 = vrot.lane.b32.xlu0 %v3745, 15
      %v3752 = vpop.permute.xlu0 %3751
      %3753 = vrot.lane.b32.xlu0 %v3747, 15
      %v3754 = vpop.permute.xlu0 %3753
      %3755 = vrot.lane.b32.xlu0 %v3749, 15
      %v3756 = vpop.permute.xlu0 %3755
      %v3757 = vrot.slane %v3752, 4
      %v3758 = vrot.slane %v3754, 4
      %v3759 = vrot.slane %v3756, 4
      %v3760 = vsel %vm142, %v3757, %v3758
      %v3761 = vsel %vm2006, %v3752, %v3760
      %v3762 = vsel %vm142, %v3758, %v3759
      %v3763 = vsel %vm2006, %v3754, %v3762
      %v3766 = vld [vmem:[#allocation2 + $0xd0] sm:$0x22]
      %v3767 = vsel %vm244, %v3761, %v3766
      %3768 = vst [vmem:[#allocation2 + $0xd0] sm:$0x22] %v3767
      %v3769 = vld [vmem:[#allocation2 + $0xd8] sm:$0x22]
      %v3770 = vsel %vm244, %v3763, %v3769
      %3771 = vst [vmem:[#allocation2 + $0xd8] sm:$0x22] %v3770
      %v3772 = vld [vmem:[%s135 + $0x1] sm:$0x1f]
      %3774 = vst [vmem:[#allocation1] ss:$4 sm:$0xff] %v3772
      %v3775 = vld [vmem:[#allocation1] sm:$0xff]
      %v3776 = vld [vmem:[#allocation1 + $0x8] sm:$0xff]
      %v3777 = vld [vmem:[#allocation1 + $0x10] sm:$0xff]
      %v3778 = vshll.u32 %v3775, 16
      %v3780 = vrot.slane %v3778, 7
      %v3781 = vshll.u32 %v3776, 16
      %v3783 = vrot.slane %v3781, 7
      %v3784 = vshll.u32 %v3777, 16
      %v3786 = vrot.slane %v3784, 7
      %3787 = vrot.lane.b32.xlu0 %v3780, 14
      %v3788 = vpop.permute.xlu0 %3787
      %3789 = vrot.lane.b32.xlu0 %v3783, 14
      %v3790 = vpop.permute.xlu0 %3789
      %3791 = vrot.lane.b32.xlu0 %v3786, 14
      %v3792 = vpop.permute.xlu0 %3791
      %v3793 = vrot.slane %v3788, 4
      %v3794 = vrot.slane %v3790, 4
      %v3795 = vrot.slane %v3792, 4
      %v3796 = vsel %vm142, %v3793, %v3794
      %v3797 = vsel %vm2038, %v3788, %v3796
      %v3798 = vsel %vm142, %v3794, %v3795
      %v3799 = vsel %vm2038, %v3790, %v3798
      %v3802 = vld [vmem:[#allocation2 + $0xd0] sm:$0x22]
      %v3803 = vsel %vm286, %v3797, %v3802
      %3804 = vst [vmem:[#allocation2 + $0xd0] sm:$0x22] %v3803
      %v3805 = vld [vmem:[#allocation2 + $0xd8] sm:$0x22]
      %v3806 = vsel %vm286, %v3799, %v3805
      %3807 = vst [vmem:[#allocation2 + $0xd8] sm:$0x22] %v3806
      %v3808 = vld [vmem:[%s135 + $0x1] sm:$0x1f]
      %s3810 = scalar_lea.vmem [#allocation1], 2
      %3811 = vst [vmem:[%s3810] ss:$4 sm:$0xff] %v3808
      %v3812 = vld [vmem:[#allocation1] sm:$0xff]
      %v3814 = vld [vmem:[#allocation1 + $0x8] sm:$0xff]
      %v3816 = vld [vmem:[#allocation1 + $0x10] sm:$0xff]
      %3818 = vrot.lane.b32.xlu0 %v3812, 13
      %v3819 = vpop.permute.xlu0 %3818
      %3820 = vrot.lane.b32.xlu0 %v3814, 13
      %v3821 = vpop.permute.xlu0 %3820
      %3822 = vrot.lane.b32.xlu0 %v3816, 13
      %v3823 = vpop.permute.xlu0 %3822
      %v3824 = vrot.slane %v3819, 4
      %v3825 = vrot.slane %v3821, 4
      %v3826 = vrot.slane %v3823, 4
      %v3827 = vsel %vm142, %v3824, %v3825
      %vm3828 = vcmask 105472
      %v3829 = vsel %vm3828, %v3819, %v3827
      %v3830 = vsel %vm142, %v3825, %v3826
      %v3831 = vsel %vm3828, %v3821, %v3830
      %v3834 = vld [vmem:[#allocation2 + $0xd0] sm:$0x44]
      %v3835 = vsel %vm325, %v3829, %v3834
      %3836 = vst [vmem:[#allocation2 + $0xd0] sm:$0x44] %v3835
      %v3837 = vld [vmem:[#allocation2 + $0xd8] sm:$0x44]
      %v3838 = vsel %vm325, %v3831, %v3837
      %3839 = vst [vmem:[#allocation2 + $0xd8] sm:$0x44] %v3838
      %v3840 = vld [vmem:[%s135 + $0x1] sm:$0x1f]
      %3842 = vst [vmem:[#allocation1] ss:$4 sm:$0xff] %v3840
      %v3843 = vld [vmem:[#allocation1] sm:$0xff]
      %v3844 = vld [vmem:[#allocation1 + $0x8] sm:$0xff]
      %v3845 = vld [vmem:[#allocation1 + $0x10] sm:$0xff]
      %v3846 = vshll.u32 %v3843, 16
      %v3848 = vrot.slane %v3846, 6
      %v3849 = vshll.u32 %v3844, 16
      %v3851 = vrot.slane %v3849, 6
      %v3852 = vshll.u32 %v3845, 16
      %v3854 = vrot.slane %v3852, 6
      %3855 = vrot.lane.b32.xlu0 %v3848, 12
      %v3856 = vpop.permute.xlu0 %3855
      %3857 = vrot.lane.b32.xlu0 %v3851, 12
      %v3858 = vpop.permute.xlu0 %3857
      %3859 = vrot.lane.b32.xlu0 %v3854, 12
      %v3860 = vpop.permute.xlu0 %3859
      %v3861 = vrot.slane %v3856, 4
      %v3862 = vrot.slane %v3858, 4
      %v3863 = vrot.slane %v3860, 4
      %v3864 = vsel %vm142, %v3861, %v3862
      %vm3865 = vcmask 97280
      %v3866 = vsel %vm3865, %v3856, %v3864
      %v3867 = vsel %vm142, %v3862, %v3863
      %v3868 = vsel %vm3865, %v3858, %v3867
      %v3871 = vld [vmem:[#allocation2 + $0xd0] sm:$0x44]
      %v3872 = vsel %vm367, %v3866, %v3871
      %3873 = vst [vmem:[#allocation2 + $0xd0] sm:$0x44] %v3872
      %v3874 = vld [vmem:[#allocation2 + $0xd8] sm:$0x44]
      %v3875 = vsel %vm367, %v3868, %v3874
      %3876 = vst [vmem:[#allocation2 + $0xd8] sm:$0x44] %v3875
      %v3877 = vld [vmem:[%s135 + $0x2] sm:$0x1f]
      %s3879 = scalar_lea.vmem [#allocation1], 3
      %3880 = vst [vmem:[%s3879] ss:$4 sm:$0xff] %v3877
      %v3881 = vld [vmem:[#allocation1] sm:$0xff]
      %v3883 = vld [vmem:[#allocation1 + $0x8] sm:$0xff]
      %v3885 = vld [vmem:[#allocation1 + $0x10] sm:$0xff]
      %3887 = vrot.lane.b32.xlu0 %v3881, 124
      %v3888 = vpop.permute.xlu0 %3887
      %3889 = vrot.lane.b32.xlu0 %v3883, 124
      %v3890 = vpop.permute.xlu0 %3889
      %3891 = vrot.lane.b32.xlu0 %v3885, 124
      %v3892 = vpop.permute.xlu0 %3891
      %v3893 = vrot.slane %v3888, 4
      %v3894 = vrot.slane %v3890, 4
      %v3895 = vrot.slane %v3892, 4
      %v3896 = vsel %vm142, %v3893, %v3894
      %v3897 = vsel %vm313, %v3888, %v3896
      %v3898 = vsel %vm142, %v3894, %v3895
      %v3899 = vsel %vm313, %v3890, %v3898
      %v3902 = vld [vmem:[#allocation2 + $0xd0] sm:$0x88]
      %v3903 = vsel %vm406, %v3897, %v3902
      %3904 = vst [vmem:[#allocation2 + $0xd0] sm:$0x88] %v3903
      %v3905 = vld [vmem:[#allocation2 + $0xd8] sm:$0x88]
      %v3906 = vsel %vm406, %v3899, %v3905
      %3907 = vst [vmem:[#allocation2 + $0xd8] sm:$0x88] %v3906
      %v3908 = vld [vmem:[%s135 + $0x2] sm:$0x1f]
      %3910 = vst [vmem:[#allocation1] ss:$4 sm:$0xff] %v3908
      %v3911 = vld [vmem:[#allocation1] sm:$0xff]
      %v3912 = vld [vmem:[#allocation1 + $0x8] sm:$0xff]
      %v3913 = vld [vmem:[#allocation1 + $0x10] sm:$0xff]
      %v3914 = vshll.u32 %v3911, 16
      %v3916 = vrot.slane %v3914, 5
      %v3917 = vshll.u32 %v3912, 16
      %v3919 = vrot.slane %v3917, 5
      %v3920 = vshll.u32 %v3913, 16
      %v3922 = vrot.slane %v3920, 5
      %3923 = vrot.lane.b32.xlu0 %v3916, 123
      %v3924 = vpop.permute.xlu0 %3923
      %3925 = vrot.lane.b32.xlu0 %v3919, 123
      %v3926 = vpop.permute.xlu0 %3925
      %3927 = vrot.lane.b32.xlu0 %v3922, 123
      %v3928 = vpop.permute.xlu0 %3927
      %v3929 = vrot.slane %v3924, 4
      %v3930 = vrot.slane %v3926, 4
      %v3931 = vrot.slane %v3928, 4
      %v3932 = vsel %vm142, %v3929, %v3930
      %v3933 = vsel %vm357, %v3924, %v3932
      %v3934 = vsel %vm142, %v3930, %v3931
      %v3935 = vsel %vm357, %v3926, %v3934
      %v3938 = vld [vmem:[#allocation2 + $0xd0] sm:$0x88]
      %v3939 = vsel %vm448, %v3933, %v3938
      %3940 = vst [vmem:[#allocation2 + $0xd0] sm:$0x88] %v3939
      %v3941 = vld [vmem:[#allocation2 + $0xd8] sm:$0x88]
      %v3942 = vsel %vm448, %v3935, %v3941
      %3943 = vst [vmem:[#allocation2 + $0xd8] sm:$0x88] %v3942
      %v3944 = vld [vmem:[%s135 + $0x2] sm:$0x1f]
      %3946 = vst [vmem:[#allocation1] ss:$4 sm:$0xff] %v3944
      %v3947 = vld [vmem:[#allocation1] sm:$0xff]
      %v3949 = vld [vmem:[#allocation1 + $0x8] sm:$0xff]
      %v3951 = vld [vmem:[#allocation1 + $0x10] sm:$0xff]
      %3953 = vrot.lane.b32.xlu0 %v3947, 122
      %v3954 = vpop.permute.xlu0 %3953
      %3955 = vrot.lane.b32.xlu0 %v3949, 122
      %v3956 = vpop.permute.xlu0 %3955
      %3957 = vrot.lane.b32.xlu0 %v3951, 122
      %v3958 = vpop.permute.xlu0 %3957
      %v3959 = vrot.slane %v3954, 4
      %v3960 = vrot.slane %v3956, 4
      %v3961 = vrot.slane %v3958, 4
      %v3962 = vsel %vm142, %v3959, %v3960
      %v3963 = vsel %vm394, %v3954, %v3962
      %v3964 = vsel %vm142, %v3960, %v3961
      %v3965 = vsel %vm394, %v3956, %v3964
      %v3968 = vld [vmem:[#allocation2 + $0xe0] sm:$0x11]
      %v3969 = vsel %vm168, %v3963, %v3968
      %3970 = vst [vmem:[#allocation2 + $0xe0] sm:$0x11] %v3969
      %v3971 = vld [vmem:[#allocation2 + $0xe8] sm:$0x11]
      %v3972 = vsel %vm168, %v3965, %v3971
      %3973 = vst [vmem:[#allocation2 + $0xe8] sm:$0x11] %v3972
      %v3974 = vld [vmem:[%s135 + $0x2] sm:$0x1f]
      %3976 = vst [vmem:[#allocation1] ss:$4 sm:$0xff] %v3974
      %v3977 = vld [vmem:[#allocation1] sm:$0xff]
      %v3978 = vld [vmem:[#allocation1 + $0x8] sm:$0xff]
      %v3979 = vld [vmem:[#allocation1 + $0x10] sm:$0xff]
      %v3980 = vshll.u32 %v3977, 16
      %v3982 = vshll.u32 %v3978, 16
      %v3984 = vshll.u32 %v3979, 16
      %3986 = vrot.lane.b32.xlu0 %v3980, 121
      %v3987 = vpop.permute.xlu0 %3986
      %3988 = vrot.lane.b32.xlu0 %v3982, 121
      %v3989 = vpop.permute.xlu0 %3988
      %3990 = vrot.lane.b32.xlu0 %v3984, 121
      %v3991 = vpop.permute.xlu0 %3990
      %v3992 = vrot.slane %v3987, 4
      %v3993 = vrot.slane %v3989, 4
      %v3994 = vrot.slane %v3991, 4
      %v3995 = vsel %vm142, %v3992, %v3993
      %v3996 = vsel %vm438, %v3987, %v3995
      %v3997 = vsel %vm142, %v3993, %v3994
      %v3998 = vsel %vm438, %v3989, %v3997
      %v4001 = vld [vmem:[#allocation2 + $0xe0] sm:$0x11]
      %v4002 = vsel %vm205, %v3996, %v4001
      %4003 = vst [vmem:[#allocation2 + $0xe0] sm:$0x11] %v4002
      %v4004 = vld [vmem:[#allocation2 + $0xe8] sm:$0x11]
      %v4005 = vsel %vm205, %v3998, %v4004
      %4006 = vst [vmem:[#allocation2 + $0xe8] sm:$0x11] %v4005
      %v4007 = vld [vmem:[%s135 + $0x2] sm:$0x1f]
      %s4009 = scalar_lea.vmem [#allocation1], 1
      %4010 = vst [vmem:[%s4009] ss:$4 sm:$0xff] %v4007
      %v4011 = vld [vmem:[#allocation1] sm:$0xff]
      %v4013 = vld [vmem:[#allocation1 + $0x8] sm:$0xff]
      %v4015 = vld [vmem:[#allocation1 + $0x10] sm:$0xff]
      %4017 = vrot.lane.b32.xlu0 %v4011, 120
      %v4018 = vpop.permute.xlu0 %4017
      %4019 = vrot.lane.b32.xlu0 %v4013, 120
      %v4020 = vpop.permute.xlu0 %4019
      %4021 = vrot.lane.b32.xlu0 %v4015, 120
      %v4022 = vpop.permute.xlu0 %4021
      %v4023 = vrot.slane %v4018, 4
      %v4024 = vrot.slane %v4020, 4
      %v4025 = vrot.slane %v4022, 4
      %v4026 = vsel %vm142, %v4023, %v4024
      %v4027 = vsel %vm474, %v4018, %v4026
      %v4028 = vsel %vm142, %v4024, %v4025
      %v4029 = vsel %vm474, %v4020, %v4028
      %v4032 = vld [vmem:[#allocation2 + $0xe0] sm:$0x22]
      %v4033 = vsel %vm244, %v4027, %v4032
      %4034 = vst [vmem:[#allocation2 + $0xe0] sm:$0x22] %v4033
      %v4035 = vld [vmem:[#allocation2 + $0xe8] sm:$0x22]
      %v4036 = vsel %vm244, %v4029, %v4035
      %4037 = vst [vmem:[#allocation2 + $0xe8] sm:$0x22] %v4036
      %v4038 = vld [vmem:[%s135 + $0x2] sm:$0x1f]
      %4040 = vst [vmem:[#allocation1] ss:$4 sm:$0xff] %v4038
      %v4041 = vld [vmem:[#allocation1] sm:$0xff]
      %v4042 = vld [vmem:[#allocation1 + $0x8] sm:$0xff]
      %v4043 = vld [vmem:[#allocation1 + $0x10] sm:$0xff]
      %v4044 = vshll.u32 %v4041, 16
      %v4046 = vrot.slane %v4044, 7
      %v4047 = vshll.u32 %v4042, 16
      %v4049 = vrot.slane %v4047, 7
      %v4050 = vshll.u32 %v4043, 16
      %v4052 = vrot.slane %v4050, 7
      %4053 = vrot.lane.b32.xlu0 %v4046, 119
      %v4054 = vpop.permute.xlu0 %4053
      %4055 = vrot.lane.b32.xlu0 %v4049, 119
      %v4056 = vpop.permute.xlu0 %4055
      %4057 = vrot.lane.b32.xlu0 %v4052, 119
      %v4058 = vpop.permute.xlu0 %4057
      %v4059 = vrot.slane %v4054, 4
      %v4060 = vrot.slane %v4056, 4
      %v4061 = vrot.slane %v4058, 4
      %v4062 = vsel %vm142, %v4059, %v4060
      %v4063 = vsel %vm508, %v4054, %v4062
      %v4064 = vsel %vm142, %v4060, %v4061
      %v4065 = vsel %vm508, %v4056, %v4064
      %v4068 = vld [vmem:[#allocation2 + $0xe0] sm:$0x22]
      %v4069 = vsel %vm286, %v4063, %v4068
      %4070 = vst [vmem:[#allocation2 + $0xe0] sm:$0x22] %v4069
      %v4071 = vld [vmem:[#allocation2 + $0xe8] sm:$0x22]
      %v4072 = vsel %vm286, %v4065, %v4071
      %4073 = vst [vmem:[#allocation2 + $0xe8] sm:$0x22] %v4072
      %v4074 = vld [vmem:[%s135 + $0x2] sm:$0x1f]
      %s4076 = scalar_lea.vmem [#allocation1], 2
      %4077 = vst [vmem:[%s4076] ss:$4 sm:$0xff] %v4074
      %v4078 = vld [vmem:[#allocation1] sm:$0xff]
      %v4080 = vld [vmem:[#allocation1 + $0x8] sm:$0xff]
      %v4082 = vld [vmem:[#allocation1 + $0x10] sm:$0xff]
      %4084 = vrot.lane.b32.xlu0 %v4078, 118
      %v4085 = vpop.permute.xlu0 %4084
      %4086 = vrot.lane.b32.xlu0 %v4080, 118
      %v4087 = vpop.permute.xlu0 %4086
      %4088 = vrot.lane.b32.xlu0 %v4082, 118
      %v4089 = vpop.permute.xlu0 %4088
      %v4090 = vrot.slane %v4085, 4
      %v4091 = vrot.slane %v4087, 4
      %v4092 = vrot.slane %v4089, 4
      %v4093 = vsel %vm142, %v4090, %v4091
      %v4094 = vsel %vm540, %v4085, %v4093
      %v4095 = vsel %vm142, %v4091, %v4092
      %v4096 = vsel %vm540, %v4087, %v4095
      %v4099 = vld [vmem:[#allocation2 + $0xe0] sm:$0x44]
      %v4100 = vsel %vm325, %v4094, %v4099
      %4101 = vst [vmem:[#allocation2 + $0xe0] sm:$0x44] %v4100
      %v4102 = vld [vmem:[#allocation2 + $0xe8] sm:$0x44]
      %v4103 = vsel %vm325, %v4096, %v4102
      %4104 = vst [vmem:[#allocation2 + $0xe8] sm:$0x44] %v4103
      %v4105 = vld [vmem:[%s135 + $0x2] sm:$0x1f]
      %4107 = vst [vmem:[#allocation1] ss:$4 sm:$0xff] %v4105
      %v4108 = vld [vmem:[#allocation1] sm:$0xff]
      %v4109 = vld [vmem:[#allocation1 + $0x8] sm:$0xff]
      %v4110 = vld [vmem:[#allocation1 + $0x10] sm:$0xff]
      %v4111 = vshll.u32 %v4108, 16
      %v4113 = vrot.slane %v4111, 6
      %v4114 = vshll.u32 %v4109, 16
      %v4116 = vrot.slane %v4114, 6
      %v4117 = vshll.u32 %v4110, 16
      %v4119 = vrot.slane %v4117, 6
      %4120 = vrot.lane.b32.xlu0 %v4113, 117
      %v4121 = vpop.permute.xlu0 %4120
      %4122 = vrot.lane.b32.xlu0 %v4116, 117
      %v4123 = vpop.permute.xlu0 %4122
      %4124 = vrot.lane.b32.xlu0 %v4119, 117
      %v4125 = vpop.permute.xlu0 %4124
      %v4126 = vrot.slane %v4121, 4
      %v4127 = vrot.slane %v4123, 4
      %v4128 = vrot.slane %v4125, 4
      %v4129 = vsel %vm142, %v4126, %v4127
      %v4130 = vsel %vm2369, %v4121, %v4129
      %v4131 = vsel %vm142, %v4127, %v4128
      %v4132 = vsel %vm2369, %v4123, %v4131
      %v4135 = vld [vmem:[#allocation2 + $0xe0] sm:$0x44]
      %v4136 = vsel %vm367, %v4130, %v4135
      %4137 = vst [vmem:[#allocation2 + $0xe0] sm:$0x44] %v4136
      %v4138 = vld [vmem:[#allocation2 + $0xe8] sm:$0x44]
      %v4139 = vsel %vm367, %v4132, %v4138
      %4140 = vst [vmem:[#allocation2 + $0xe8] sm:$0x44] %v4139
      %v4141 = vld [vmem:[%s135 + $0x2] sm:$0x1f]
      %s4143 = scalar_lea.vmem [#allocation1], 3
      %4144 = vst [vmem:[%s4143] ss:$4 sm:$0xff] %v4141
      %v4145 = vld [vmem:[#allocation1] sm:$0xff]
      %v4147 = vld [vmem:[#allocation1 + $0x8] sm:$0xff]
      %v4149 = vld [vmem:[#allocation1 + $0x10] sm:$0xff]
      %4151 = vrot.lane.b32.xlu0 %v4145, 116
      %v4152 = vpop.permute.xlu0 %4151
      %4153 = vrot.lane.b32.xlu0 %v4147, 116
      %v4154 = vpop.permute.xlu0 %4153
      %4155 = vrot.lane.b32.xlu0 %v4149, 116
      %v4156 = vpop.permute.xlu0 %4155
      %v4157 = vrot.slane %v4152, 4
      %v4158 = vrot.slane %v4154, 4
      %v4159 = vrot.slane %v4156, 4
      %v4160 = vsel %vm142, %v4157, %v4158
      %v4161 = vsel %vm2403, %v4152, %v4160
      %v4162 = vsel %vm142, %v4158, %v4159
      %v4163 = vsel %vm2403, %v4154, %v4162
      %v4166 = vld [vmem:[#allocation2 + $0xe0] sm:$0x88]
      %v4167 = vsel %vm406, %v4161, %v4166
      %4168 = vst [vmem:[#allocation2 + $0xe0] sm:$0x88] %v4167
      %v4169 = vld [vmem:[#allocation2 + $0xe8] sm:$0x88]
      %v4170 = vsel %vm406, %v4163, %v4169
      %4171 = vst [vmem:[#allocation2 + $0xe8] sm:$0x88] %v4170
      %v4172 = vld [vmem:[%s135 + $0x2] sm:$0x1f]
      %4174 = vst [vmem:[#allocation1] ss:$4 sm:$0xff] %v4172
      %v4175 = vld [vmem:[#allocation1] sm:$0xff]
      %v4176 = vld [vmem:[#allocation1 + $0x8] sm:$0xff]
      %v4177 = vld [vmem:[#allocation1 + $0x10] sm:$0xff]
      %v4178 = vshll.u32 %v4175, 16
      %v4180 = vrot.slane %v4178, 5
      %v4181 = vshll.u32 %v4176, 16
      %v4183 = vrot.slane %v4181, 5
      %v4184 = vshll.u32 %v4177, 16
      %v4186 = vrot.slane %v4184, 5
      %4187 = vrot.lane.b32.xlu0 %v4180, 115
      %v4188 = vpop.permute.xlu0 %4187
      %4189 = vrot.lane.b32.xlu0 %v4183, 115
      %v4190 = vpop.permute.xlu0 %4189
      %4191 = vrot.lane.b32.xlu0 %v4186, 115
      %v4192 = vpop.permute.xlu0 %4191
      %v4193 = vrot.slane %v4188, 4
      %v4194 = vrot.slane %v4190, 4
      %v4195 = vrot.slane %v4192, 4
      %v4196 = vsel %vm142, %v4193, %v4194
      %vm4197 = vcmask 941056
      %v4198 = vsel %vm4197, %v4188, %v4196
      %v4199 = vsel %vm142, %v4194, %v4195
      %v4200 = vsel %vm4197, %v4190, %v4199
      %v4203 = vld [vmem:[#allocation2 + $0xe0] sm:$0x88]
      %v4204 = vsel %vm448, %v4198, %v4203
      %4205 = vst [vmem:[#allocation2 + $0xe0] sm:$0x88] %v4204
      %v4206 = vld [vmem:[#allocation2 + $0xe8] sm:$0x88]
      %v4207 = vsel %vm448, %v4200, %v4206
      %4208 = vst [vmem:[#allocation2 + $0xe8] sm:$0x88] %v4207
      %v4209 = vld [vmem:[%s135 + $0x2] sm:$0x1f]
      %4211 = vst [vmem:[#allocation1] ss:$4 sm:$0xff] %v4209
      %v4212 = vld [vmem:[#allocation1] sm:$0xff]
      %v4214 = vld [vmem:[#allocation1 + $0x8] sm:$0xff]
      %v4216 = vld [vmem:[#allocation1 + $0x10] sm:$0xff]
      %4218 = vrot.lane.b32.xlu0 %v4212, 114
      %v4219 = vpop.permute.xlu0 %4218
      %4220 = vrot.lane.b32.xlu0 %v4214, 114
      %v4221 = vpop.permute.xlu0 %4220
      %4222 = vrot.lane.b32.xlu0 %v4216, 114
      %v4223 = vpop.permute.xlu0 %4222
      %v4224 = vrot.slane %v4219, 4
      %v4225 = vrot.slane %v4221, 4
      %v4226 = vrot.slane %v4223, 4
      %v4227 = vsel %vm142, %v4224, %v4225
      %vm4228 = vcmask 932864
      %v4229 = vsel %vm4228, %v4219, %v4227
      %v4230 = vsel %vm142, %v4225, %v4226
      %v4231 = vsel %vm4228, %v4221, %v4230
      %v4234 = vld [vmem:[#allocation2 + $0xf0] sm:$0x11]
      %v4235 = vsel %vm168, %v4229, %v4234
      %4236 = vst [vmem:[#allocation2 + $0xf0] sm:$0x11] %v4235
      %v4237 = vld [vmem:[#allocation2 + $0xf8] sm:$0x11]
      %v4238 = vsel %vm168, %v4231, %v4237
      %4239 = vst [vmem:[#allocation2 + $0xf8] sm:$0x11] %v4238
      %v4240 = vld [vmem:[%s1] sm:$0xf]
      %v4241 = vld [vmem:[%s1 + $0x4] sm:$0xf]
      %v4242 = vld [vmem:[%s1 + $0x8] sm:$0xf]
      %v4243 = vld [vmem:[%s1 + $0xc] sm:$0xf]
      %v4244 = vld [vmem:[%s1 + $0x10] sm:$0xf]
      %v4245 = vld [vmem:[%s1 + $0x14] sm:$0xf]
      %v4246 = vld [vmem:[#allocation2] sm:$0xff]
      %v4247 = vld [vmem:[#allocation2 + $0x8] sm:$0xff]
      %v4248 = vld [vmem:[#allocation2 + $0x10] sm:$0xff]
      %v4249 = vld [vmem:[#allocation2 + $0x18] sm:$0xff]
      %v4250 = vld [vmem:[#allocation2 + $0x20] sm:$0xff]
      %v4251 = vld [vmem:[#allocation2 + $0x28] sm:$0xff]
      %v4252 = vld [vmem:[#allocation2 + $0x30] sm:$0xff]
      %v4253 = vld [vmem:[#allocation2 + $0x38] sm:$0xff]
      %v4254 = vld [vmem:[#allocation2 + $0x40] sm:$0xff]
      %v4255 = vld [vmem:[#allocation2 + $0x48] sm:$0xff]
      %v4256 = vld [vmem:[#allocation2 + $0x50] sm:$0xff]
      %v4257 = vld [vmem:[#allocation2 + $0x58] sm:$0xff]
      %v4258 = vld [vmem:[#allocation2 + $0x60] sm:$0xff]
      %v4259 = vld [vmem:[#allocation2 + $0x68] sm:$0xff]
      %v4260 = vld [vmem:[#allocation2 + $0x70] sm:$0xff]
      %v4261 = vld [vmem:[#allocation2 + $0x78] sm:$0xff]
      %v4262 = vld [vmem:[#allocation2 + $0x80] sm:$0xff]
      %v4263 = vld [vmem:[#allocation2 + $0x88] sm:$0xff]
      %v4264 = vld [vmem:[#allocation2 + $0x90] sm:$0xff]
      %v4265 = vld [vmem:[#allocation2 + $0x98] sm:$0xff]
      %v4266 = vld [vmem:[#allocation2 + $0xa0] sm:$0xff]
      %v4267 = vld [vmem:[#allocation2 + $0xa8] sm:$0xff]
      %v4268 = vld [vmem:[#allocation2 + $0xb0] sm:$0xff]
      %v4269 = vld [vmem:[#allocation2 + $0xb8] sm:$0xff]
      %v4270 = vld [vmem:[#allocation2 + $0xc0] sm:$0xff]
      %v4271 = vld [vmem:[#allocation2 + $0xc8] sm:$0xff]
      %v4272 = vld [vmem:[#allocation2 + $0xd0] sm:$0xff]
      %v4273 = vld [vmem:[#allocation2 + $0xd8] sm:$0xff]
      %v4274 = vld [vmem:[#allocation2 + $0xe0] sm:$0xff]
      %v4275 = vld [vmem:[#allocation2 + $0xe8] sm:$0xff]
      %v4276 = vld [vmem:[#allocation2 + $0xf0] sm:$0xff]
      %v4277 = vld [vmem:[#allocation2 + $0xf8] sm:$0xff]
      %v4284 = vunpack.c.l.b16 %v4240
      %v4285 = vunpack.c.l.b16 %v4241
      %v4286 = vunpack.c.l.b16 %v4242
      %v4287 = vunpack.c.l.b16 %v4243
      %v4288 = vunpack.c.l.b16 %v4244
      %v4289 = vunpack.c.l.b16 %v4245
      %v4290 = vpack.c.b16 %v4285, %v4284
      %v4291 = vpack.c.b16 %v4287, %v4286
      %v4292 = vpack.c.b16 %v4289, %v4288
      %v4328 = vunpack.c.l.b16 %v4246
      %v4329 = vunpack.c.h.b16 %v4246
      %v4330 = vunpack.c.l.b16 %v4247
      %v4331 = vunpack.c.h.b16 %v4247
      %v4332 = vunpack.c.l.b16 %v4248
      %v4333 = vunpack.c.h.b16 %v4248
      %v4334 = vunpack.c.l.b16 %v4249
      %v4335 = vunpack.c.h.b16 %v4249
      %v4336 = vunpack.c.l.b16 %v4250
      %v4337 = vunpack.c.h.b16 %v4250
      %v4338 = vunpack.c.l.b16 %v4251
      %v4339 = vunpack.c.h.b16 %v4251
      %v4340 = vunpack.c.l.b16 %v4252
      %v4341 = vunpack.c.h.b16 %v4252
      %v4342 = vunpack.c.l.b16 %v4253
      %v4343 = vunpack.c.h.b16 %v4253
      %v4344 = vunpack.c.l.b16 %v4254
      %v4345 = vunpack.c.h.b16 %v4254
      %v4346 = vunpack.c.l.b16 %v4255
      %v4347 = vunpack.c.h.b16 %v4255
      %v4348 = vunpack.c.l.b16 %v4256
      %v4349 = vunpack.c.h.b16 %v4256
      %v4350 = vunpack.c.l.b16 %v4257
      %v4351 = vunpack.c.h.b16 %v4257
      %v4352 = vunpack.c.l.b16 %v4258
      %v4353 = vunpack.c.h.b16 %v4258
      %v4354 = vunpack.c.l.b16 %v4259
      %v4355 = vunpack.c.h.b16 %v4259
      %v4356 = vunpack.c.l.b16 %v4260
      %v4357 = vunpack.c.h.b16 %v4260
      %v4358 = vunpack.c.l.b16 %v4261
      %v4359 = vunpack.c.h.b16 %v4261
      %v4360 = vunpack.c.l.b16 %v4262
      %v4361 = vunpack.c.h.b16 %v4262
      %v4362 = vunpack.c.l.b16 %v4263
      %v4363 = vunpack.c.h.b16 %v4263
      %v4364 = vunpack.c.l.b16 %v4264
      %v4365 = vunpack.c.h.b16 %v4264
      %v4366 = vunpack.c.l.b16 %v4265
      %v4367 = vunpack.c.h.b16 %v4265
      %v4368 = vunpack.c.l.b16 %v4266
      %v4369 = vunpack.c.h.b16 %v4266
      %v4370 = vunpack.c.l.b16 %v4267
      %v4371 = vunpack.c.h.b16 %v4267
      %v4372 = vunpack.c.l.b16 %v4268
      %v4373 = vunpack.c.h.b16 %v4268
      %v4374 = vunpack.c.l.b16 %v4269
      %v4375 = vunpack.c.h.b16 %v4269
      %v4376 = vunpack.c.l.b16 %v4270
      %v4377 = vunpack.c.h.b16 %v4270
      %v4378 = vunpack.c.l.b16 %v4271
      %v4379 = vunpack.c.h.b16 %v4271
      %v4380 = vunpack.c.l.b16 %v4272
      %v4381 = vunpack.c.h.b16 %v4272
      %v4382 = vunpack.c.l.b16 %v4273
      %v4383 = vunpack.c.h.b16 %v4273
      %v4384 = vunpack.c.l.b16 %v4274
      %v4385 = vunpack.c.h.b16 %v4274
      %v4386 = vunpack.c.l.b16 %v4275
      %v4387 = vunpack.c.h.b16 %v4275
      %v4388 = vunpack.c.l.b16 %v4276
      %v4389 = vunpack.c.h.b16 %v4276
      %v4390 = vunpack.c.l.b16 %v4277
      %v4391 = vunpack.c.h.b16 %v4277
      %v4392 = vpack.c.b16 %v4332, %v4328
      %v4393 = vpack.c.b16 %v4333, %v4329
      %v4394 = vpack.c.b16 %v4334, %v4330
      %v4395 = vpack.c.b16 %v4335, %v4331
      %v4396 = vpack.c.b16 %v4340, %v4336
      %v4397 = vpack.c.b16 %v4341, %v4337
      %v4398 = vpack.c.b16 %v4342, %v4338
      %v4399 = vpack.c.b16 %v4343, %v4339
      %v4400 = vpack.c.b16 %v4348, %v4344
      %v4401 = vpack.c.b16 %v4349, %v4345
      %v4402 = vpack.c.b16 %v4350, %v4346
      %v4403 = vpack.c.b16 %v4351, %v4347
      %v4404 = vpack.c.b16 %v4356, %v4352
      %v4405 = vpack.c.b16 %v4357, %v4353
      %v4406 = vpack.c.b16 %v4358, %v4354
      %v4407 = vpack.c.b16 %v4359, %v4355
      %v4408 = vpack.c.b16 %v4364, %v4360
      %v4409 = vpack.c.b16 %v4365, %v4361
      %v4410 = vpack.c.b16 %v4366, %v4362
      %v4411 = vpack.c.b16 %v4367, %v4363
      %v4412 = vpack.c.b16 %v4372, %v4368
      %v4413 = vpack.c.b16 %v4373, %v4369
      %v4414 = vpack.c.b16 %v4374, %v4370
      %v4415 = vpack.c.b16 %v4375, %v4371
      %v4416 = vpack.c.b16 %v4380, %v4376
      %v4417 = vpack.c.b16 %v4381, %v4377
      %v4418 = vpack.c.b16 %v4382, %v4378
      %v4419 = vpack.c.b16 %v4383, %v4379
      %v4420 = vpack.c.b16 %v4388, %v4384
      %v4421 = vpack.c.b16 %v4389, %v4385
      %v4422 = vpack.c.b16 %v4390, %v4386
      %v4423 = vpack.c.b16 %v4391, %v4387
      %4456 = vmatpush.bf16.msra.mxu0 %v4420
      %4457 = vmatpush.bf16.msra.mxu0 %v4416
      %4458 = vmatpush.bf16.msra.mxu0 %v4412
      %4459 = vmatpush.bf16.msra.mxu0 %v4408
      %4460 = vmatpush.bf16.msra.mxu0 %v4404
      %4461 = vmatpush.bf16.msra.mxu0 %v4400
      %4462 = vmatpush.bf16.msra.mxu0 %v4396
      %4463 = vmatpush.bf16.msra.mxu0 %v4392
      %4464 = vmatmul.bf16.gmra.mxu0 %v4290
      %v4465 = vpop.f32.mrf.mxu0
      %v4466 = vadd.f32 0.0, %v4465
      %v4467 = vpop.f32.mrf.mxu0
      %v4468 = vadd.f32 0.0, %v4467
      %4469 = vmatmul.bf16.gmra.mxu0 %v4291
      %v4470 = vpop.f32.mrf.mxu0
      %v4471 = vadd.f32 0.0, %v4470
      %v4472 = vpop.f32.mrf.mxu0
      %v4473 = vadd.f32 0.0, %v4472
      %4474 = vmatmul.bf16.gmra.mxu0 %v4292
      %v4475 = vpop.f32.mrf.mxu0
      %v4476 = vadd.f32 0.0, %v4475
      %v4477 = vpop.f32.mrf.mxu0
      %v4478 = vadd.f32 0.0, %v4477
      %4479 = vdwg.mxu0
      %4480 = vmatpush.bf16.msra.mxu0 %v4421
      %4481 = vmatpush.bf16.msra.mxu0 %v4417
      %4482 = vmatpush.bf16.msra.mxu0 %v4413
      %4483 = vmatpush.bf16.msra.mxu0 %v4409
      %4484 = vmatpush.bf16.msra.mxu0 %v4405
      %4485 = vmatpush.bf16.msra.mxu0 %v4401
      %4486 = vmatpush.bf16.msra.mxu0 %v4397
      %4487 = vmatpush.bf16.msra.mxu0 %v4393
      %4488 = vmatmul.bf16.gmra.mxu0 %v4290
      %v4489 = vpop.f32.mrf.mxu0
      %v4490 = vadd.f32 0.0, %v4489
      %v4491 = vpop.f32.mrf.mxu0
      %v4492 = vadd.f32 0.0, %v4491
      %4493 = vmatmul.bf16.gmra.mxu0 %v4291
      %v4494 = vpop.f32.mrf.mxu0
      %v4495 = vadd.f32 0.0, %v4494
      %v4496 = vpop.f32.mrf.mxu0
      %v4497 = vadd.f32 0.0, %v4496
      %4498 = vmatmul.bf16.gmra.mxu0 %v4292
      %v4499 = vpop.f32.mrf.mxu0
      %v4500 = vadd.f32 0.0, %v4499
      %v4501 = vpop.f32.mrf.mxu0
      %v4502 = vadd.f32 0.0, %v4501
      %4503 = vdwg.mxu0
      %4504 = vmatpush.bf16.msra.mxu0 %v4422
      %4505 = vmatpush.bf16.msra.mxu0 %v4418
      %4506 = vmatpush.bf16.msra.mxu0 %v4414
      %4507 = vmatpush.bf16.msra.mxu0 %v4410
      %4508 = vmatpush.bf16.msra.mxu0 %v4406
      %4509 = vmatpush.bf16.msra.mxu0 %v4402
      %4510 = vmatpush.bf16.msra.mxu0 %v4398
      %4511 = vmatpush.bf16.msra.mxu0 %v4394
      %4512 = vmatmul.bf16.gmra.mxu0 %v4290
      %v4513 = vpop.f32.mrf.mxu0
      %v4514 = vadd.f32 0.0, %v4513
      %v4515 = vpop.f32.mrf.mxu0
      %v4516 = vadd.f32 0.0, %v4515
      %4517 = vmatmul.bf16.gmra.mxu0 %v4291
      %v4518 = vpop.f32.mrf.mxu0
      %v4519 = vadd.f32 0.0, %v4518
      %v4520 = vpop.f32.mrf.mxu0
      %v4521 = vadd.f32 0.0, %v4520
      %4522 = vmatmul.bf16.gmra.mxu0 %v4292
      %v4523 = vpop.f32.mrf.mxu0
      %v4524 = vadd.f32 0.0, %v4523
      %v4525 = vpop.f32.mrf.mxu0
      %v4526 = vadd.f32 0.0, %v4525
      %4527 = vdwg.mxu0
      %4528 = vmatpush.bf16.msra.mxu0 %v4423
      %4529 = vmatpush.bf16.msra.mxu0 %v4419
      %4530 = vmatpush.bf16.msra.mxu0 %v4415
      %4531 = vmatpush.bf16.msra.mxu0 %v4411
      %4532 = vmatpush.bf16.msra.mxu0 %v4407
      %4533 = vmatpush.bf16.msra.mxu0 %v4403
      %4534 = vmatpush.bf16.msra.mxu0 %v4399
      %4535 = vmatpush.bf16.msra.mxu0 %v4395
      %4536 = vmatmul.bf16.gmra.mxu0 %v4290
      %v4537 = vpop.f32.mrf.mxu0
      %v4538 = vadd.f32 0.0, %v4537
      %v4539 = vpop.f32.mrf.mxu0
      %v4540 = vadd.f32 0.0, %v4539
      %4541 = vmatmul.bf16.gmra.mxu0 %v4291
      %v4542 = vpop.f32.mrf.mxu0
      %v4543 = vadd.f32 0.0, %v4542
      %v4544 = vpop.f32.mrf.mxu0
      %v4545 = vadd.f32 0.0, %v4544
      %4546 = vmatmul.bf16.gmra.mxu0 %v4292
      %v4547 = vpop.f32.mrf.mxu0
      %v4548 = vadd.f32 0.0, %v4547
      %v4549 = vpop.f32.mrf.mxu0
      %v4550 = vadd.f32 0.0, %v4549
      %4551 = vdwg.mxu0
      %4552 = vst [vmem:[%s140] sm:$0xff] %v4466
      %4553 = vst [vmem:[%s140 + $0x8] sm:$0xff] %v4490
      %4554 = vst [vmem:[%s140 + $0x10] sm:$0xff] %v4514
      %4555 = vst [vmem:[%s140 + $0x18] sm:$0xff] %v4538
      %4556 = vst [vmem:[%s140 + $0x20] sm:$0xff] %v4468
      %4557 = vst [vmem:[%s140 + $0x28] sm:$0xff] %v4492
      %4558 = vst [vmem:[%s140 + $0x30] sm:$0xff] %v4516
      %4559 = vst [vmem:[%s140 + $0x38] sm:$0xff] %v4540
      %4560 = vst [vmem:[%s140 + $0x40] sm:$0xff] %v4471
      %4561 = vst [vmem:[%s140 + $0x48] sm:$0xff] %v4495
      %4562 = vst [vmem:[%s140 + $0x50] sm:$0xff] %v4519
      %4563 = vst [vmem:[%s140 + $0x58] sm:$0xff] %v4543
      %4564 = vst [vmem:[%s140 + $0x60] sm:$0xff] %v4473
      %4565 = vst [vmem:[%s140 + $0x68] sm:$0xff] %v4497
      %4566 = vst [vmem:[%s140 + $0x70] sm:$0xff] %v4521
      %4567 = vst [vmem:[%s140 + $0x78] sm:$0xff] %v4545
      %4568 = vst [vmem:[%s140 + $0x80] sm:$0xff] %v4476
      %4569 = vst [vmem:[%s140 + $0x88] sm:$0xff] %v4500
      %4570 = vst [vmem:[%s140 + $0x90] sm:$0xff] %v4524
      %4571 = vst [vmem:[%s140 + $0x98] sm:$0xff] %v4548
      %4572 = vst [vmem:[%s140 + $0xa0] sm:$0xff] %v4478
      %4573 = vst [vmem:[%s140 + $0xa8] sm:$0xff] %v4502
      %4574 = vst [vmem:[%s140 + $0xb0] sm:$0xff] %v4526
      %4575 = vst [vmem:[%s140 + $0xb8] sm:$0xff] %v4550
      %p4576 = scmp.lt.s32.totalorder %s13, 1
      %s4577 = scalar_select %p4576, %s13, 1
      %s4578 = smul.addr %s4577, 24
      %s4579 = smul.addr %s4578, 8
      %s4580 = scalar_lea.vmem %s2, %s4579
      // Predicated region
      $region29: #{lm_forward.1} parent=27 // pred_check
        %p4581 = pneg %p78
      $region30: #{lm_forward.1} parent=27 // pred_check_branch
        %4583 = sbr.rel (%p4581) target = $region32
      $region31: #{lm_forward.1} parent=27 // pred_region
        _
      $region32: #{lm_forward.1} parent=27 // pred_fallthru
        _
    $region28: #{lm_forward.1} parent=5 // pred_fallthru
      _
    %p4584 = scmp.le.s32.totalorder 2, %s8
    // Predicated region
    $region33: #{lm_forward.1} parent=5 // pred_check
      %p4585 = pneg %p4584
    $region34: #{lm_forward.1} parent=5 // pred_check_branch
      %4587 = sbr.rel (%p4585) target = $region36
    $region35: #{lm_forward.1} parent=5 // pred_region
      %s4588 = ssub.s32 %s8, 2
      // Predicated region
      $region37: #{lm_forward.1} parent=35 // pred_check
        %p4589 = pneg %p84
      $region38: #{lm_forward.1} parent=35 // pred_check_branch
        %4591 = sbr.rel (%p4589) target = $region40
      $region39: #{lm_forward.1} parent=35 // pred_region
        %p4592 = scmp.lt.s32.totalorder %s14, 1
        %s4593 = scalar_select %p4592, %s14, 1
        %s4594 = smul.addr %s4593, 24
        %s4595 = smul.addr %s4594, 8
        %s4596 = scalar_lea.vmem %s2, %s4595
      $region40: #{lm_forward.1} parent=35 // pred_fallthru
        _
    $region36: #{lm_forward.1} parent=5 // pred_fallthru
      _
  $region6: #{lm_forward.1} parent=0 // loop_footer
    %s12 = sadd.s32 1, %s8
  $region7: #{lm_forward.1} parent=0 // loop_footer_branch
    %7 = sbr.rel target = $region3
  $region8: #{lm_forward.1} parent=0 // loop_exit
    _

</llo_original>
